<compile_context>
chip_gen: v7x
topology: tpu7x:2x2x1
jax: 0.10.0
libtpu: 0.0.40
codegen_flags: <defaults>
</compile_context>

<pallas_src>
import math

import numpy as np

import jax
import jax.numpy as jnp
from jax.experimental import pallas as pl
from jax.experimental.pallas import tpu as pltpu


# ---------------------------------------------------------------------------
# Deterministic "parameters" (same math as torch gaussian/create_window)
# ---------------------------------------------------------------------------
def _gaussian_1d(window_size: int) -> np.ndarray:
    sigma = window_size / 6.0
    g = np.array(
        [math.exp(-((x - window_size // 2) ** 2) / float(2 * sigma ** 2))
         for x in range(window_size)],
        dtype=np.float32,
    )
    return g / g.sum()


def _round_up(x: int, m: int) -> int:
    return ((x + m - 1) // m) * m


def _vmem_sizes():
    """Generation-aware (physical VMEM) limit / tiling budget."""
    try:
        phys = int(pltpu.get_tpu_info().vmem_capacity_bytes)
    except Exception:                       # pragma: no cover - safe default
        phys = 64 * 1024 * 1024             # v7x-sized default fits everywhere
    limit = (phys * 7) // 8                 # 112 MiB on 128, 56 MiB on 64
    budget = max(24 * 1024 * 1024, limit - 16 * 1024 * 1024)
    return int(limit), int(budget)


def _choose_tile_h(H, W, K, C, ws, budget_bytes, itemsize, is_lum):
    """Pick a row-stripe height whose VMEM footprint fits the budget."""
    wl = _round_up(W, 128)
    th = min(256, max(8, _round_up(H, 8)))
    while th > 8:
        thp = th + ws - 1
        stripes = 2 * (K + 1) * C * thp * wl * itemsize   # double-buffered DMA stripes
        gh = 2 * th * thp * 4                             # pipelined per-tile Gh block
        b = 128 if W % 128 == 0 else W
        gw = 3 * b * b * 4                                # D/P/N row-conv matrices
        nmaps = 14 + (2 if is_lum else 0)                 # live f32 maps (incl. is_lum)
        live = (nmaps * th + 6 * thp) * wl * 4
        if stripes + gh + gw + live <= budget_bytes:
            break
        th -= 8
    return max(8, th)


# ---------------------------------------------------------------------------
# Banded conv matrices
# ---------------------------------------------------------------------------
def _col_conv_mats(g1d, ws, tile_h, nt, H_k):
    """Per-tile Gh (nt, tile_h, th_pad) for the column (sublane) conv.

    The DMA for tile i reads rows [row0, row0 + th_pad) of the (unpadded)
    image with row0 = clip(i*tile_h - pad, 0, H_k - th_pad); Gh[i] maps buffer
    rows back to output rows, folding in both the clamp shift and the
    top/bottom zero padding (taps falling outside [0, th_pad) are dropped,
    which is exactly the zero-pad semantics)."""
    pad = ws // 2
    th_pad = tile_h + ws - 1
    gh = np.zeros((nt, tile_h, th_pad), np.float32)
    r = np.arange(tile_h)
    for i in range(nt):
        row0 = min(max(i * tile_h - pad, 0), H_k - th_pad)
        for d in range(ws):
            j = i * tile_h + r - pad + d - row0      # buffer column of this tap
            ok = (j >= 0) & (j < th_pad)
            gh[i, r[ok], j[ok]] = g1d[d]
    return gh


def _row_conv_mats(g1d, ws, B):
    """Block-banded row (lane) conv matrices, stacked as (3, B, B) = [P, D, N].

    out_block[b] = in[b] @ D + in[b-1] @ P + in[b+1] @ N   (missing neighbours
    at the image borders are simply skipped -> zero padding along W)."""
    pad = ws // 2
    a = np.arange(B)[:, None]
    c = np.arange(B)[None, :]

    def band(offset):
        d = c - a + offset + pad
        valid = (d >= 0) & (d < ws)
        return np.where(valid, g1d[np.clip(d, 0, ws - 1)], 0.0).astype(np.float32)

    return np.stack([band(B), band(0), band(-B)], axis=0)


def _border_weights(n, g1d, ws):
    """S[p] = sum of Gaussian taps whose zero-padded 'same' conv output index
    stays inside [0, n); 1.0 in the interior, < 1 near the borders.  Used to
    compute mean(muY) directly from the raw pixels (no conv pre-pass)."""
    pad = ws // 2
    idx = np.arange(n)
    lo = np.maximum(0, idx + pad - n + 1)
    hi = np.minimum(ws, idx + pad + 1)
    csum = np.concatenate([[0.0], np.cumsum(g1d.astype(np.float64))])
    return (csum[hi] - csum[lo]).astype(np.float32)


# ---------------------------------------------------------------------------
# Main kernel: per-tile partial sum of l_map * cs_map
# ---------------------------------------------------------------------------
def _make_mef_ssim_kernel(K, C, H, H_k, W, tile_h, ws, B, nb,
                          C1, C2, denom_l, is_lum):
    pad = ws // 2
    th_pad = tile_h + ws - 1
    inv_c = 1.0 / float(C)

    def kernel(*args):
        if is_lum:
            x_hbm, ys_hbm, gh_ref, gw_ref, lg_ref, out_ref, xbuf, ybuf, sem = args
        else:
            x_hbm, ys_hbm, gh_ref, gw_ref, out_ref, xbuf, ybuf, sem = args
            lg_ref = None

        i = pl.program_id(0)
        nt = pl.num_programs(0)
        slot = i % 2

        def descs(tile, sl):
            # Clamped halo'd row window; the per-tile Gh matrix folds in the
            # clamp shift and the zero padding at the image borders.
            r0 = jnp.minimum(jnp.maximum(tile * tile_h - pad, 0), H_k - th_pad)
            return (
                pltpu.make_async_copy(x_hbm.at[:, pl.ds(r0, th_pad), :],
                                      xbuf.at[sl], sem.at[0, sl]),
                pltpu.make_async_copy(ys_hbm.at[:, pl.ds(r0, th_pad), :],
                                      ybuf.at[sl], sem.at[1, sl]),
            )

        @pl.when(i == 0)
        def _():
            for d in descs(i, slot):
                d.start()

        # wait on descriptors rebuilt with the SAME slice used at start()
        for d in descs(i, slot):
            d.wait()

        @pl.when(i + 1 < nt)
        def _():
            for d in descs(i + 1, 1 - slot):
                d.start()

        gh = gh_ref[0]                                   # (tile_h, th_pad)
        gwP = gw_ref[0]
        gwD = gw_ref[1]
        gwN = gw_ref[2]

        def conv_multi(maps):
            """Separable Gaussian conv of several (th_pad, W) maps at once.
            Column conv per map (small Gh matmuls), then one batched
            block-banded row-conv matmul with the maps stacked on sublanes."""
            ts = [jnp.dot(gh, m, preferred_element_type=jnp.float32)
                  for m in maps]
            stack = ts[0] if len(ts) == 1 else jnp.concatenate(ts, axis=0)
            outs = []
            for b in range(nb):
                acc = jnp.dot(stack[:, b * B:(b + 1) * B], gwD,
                              preferred_element_type=jnp.float32)
                if b > 0:
                    acc = acc + jnp.dot(stack[:, (b - 1) * B:b * B], gwP,
                                        preferred_element_type=jnp.float32)
                if b + 1 < nb:
                    acc = acc + jnp.dot(stack[:, (b + 1) * B:(b + 2) * B], gwN,
                                        preferred_element_type=jnp.float32)
                outs.append(acc)
            out = outs[0] if nb == 1 else jnp.concatenate(outs, axis=1)
            return [out[m * tile_h:(m + 1) * tile_h] for m in range(len(maps))]

        # ---- reference-image statistics (once per tile) ---------------------
        sX = None
        sXX = None
        for c in range(C):
            xc = xbuf[slot, c].astype(jnp.float32)
            sX = xc if sX is None else sX + xc
            sXX = xc * xc if sXX is None else sXX + xc * xc
        muX, eXX = conv_multi([sX * inv_c, sXX * inv_c])
        sigX = eXX - muX * muX

        # ---- fused per-exposure loop + running argmax selection --------------
        best = None
        cs_map = None
        w_sum = None
        wmu_sum = None
        for k in range(K):
            sY = None
            sYY = None
            sXY = None
            for c in range(C):
                yc = ybuf[slot, k * C + c].astype(jnp.float32)
                xc = xbuf[slot, c].astype(jnp.float32)
                sY = yc if sY is None else sY + yc
                sYY = yc * yc if sYY is None else sYY + yc * yc
                sXY = xc * yc if sXY is None else sXY + xc * yc
            muY, eYY, eXY = conv_multi([sY * inv_c, sYY * inv_c, sXY * inv_c])
            sigY = eYY - muY * muY
            sigXY = eXY - muX * muY
            cs = (2.0 * sigXY + C2) / (sigX + sigY + C2)
            if k == 0:
                best, cs_map = sigY, cs
            else:
                better = sigY > best          # strict ">" keeps first max (torch.max)
                cs_map = jnp.where(better, cs, cs_map)
                best = jnp.where(better, sigY, best)
            if is_lum:
                LY = lg_ref[k] * jnp.exp(-((muY - 0.5) ** 2) / denom_l)
                w_sum = LY if w_sum is None else w_sum + LY
                wmu_sum = LY * muY if wmu_sum is None else wmu_sum + LY * muY

        rows = jax.lax.broadcasted_iota(jnp.int32, (tile_h, W), 0) + i * tile_h
        mask = (rows < H).astype(jnp.float32)

        if is_lum:
            muYw = wmu_sum / w_sum
            l_map = (2.0 * muX * muYw + C1) / (muX * muX + muYw * muYw + C1)
            out_ref[i] = jnp.sum(mask * (l_map * cs_map))
        else:
            out_ref[i] = jnp.sum(mask * cs_map)

    return kernel


# ---------------------------------------------------------------------------
# Module wrapper
# ---------------------------------------------------------------------------
class MEFSSIM:
    def __init__(self, window_size=11, channel=3, sigma_g=0.2, sigma_l=0.2,
                 c1=0.01, c2=0.03, is_lum=False, tile_h=None):
        self.window_size = window_size
        self.channel = channel
        self.g1d = _gaussian_1d(window_size)          # deterministic "weights"
        self.denom_g = 2 * sigma_g ** 2
        self.denom_l = 2 * sigma_l ** 2
        self.C1 = c1 ** 2
        self.C2 = c2 ** 2
        self.is_lum = is_lum
        self.tile_h = tile_h

    def __call__(self, X, Ys):
        # X: (1, C, H, W), Ys: (K, C, H, W)   (NCHW, like PyTorch)
        K, C, H, W = Ys.shape
        ws = self.window_size
        pad = ws // 2

        # Keep inputs in their native dtype in HBM (f32/bf16); upcast in VMEM.
        if Ys.dtype not in (np.dtype(np.float32), np.dtype(jnp.bfloat16)):
            Ys = Ys.astype(jnp.float32)
        if X.dtype != Ys.dtype:
            X = X.astype(Ys.dtype)
        itemsize = Ys.dtype.itemsize

        vmem_limit, budget = _vmem_sizes()
        tile_h = self.tile_h or _choose_tile_h(H, W, K, C, ws, budget,
                                               itemsize, self.is_lum)
        tile_h = max(8, min(_round_up(tile_h, 8), _round_up(H, 8)))
        th_pad = tile_h + ws - 1
        nt = pl.cdiv(H, tile_h)

        # Merge leading dims only (layout-preserving, no data transform).
        Xi = X.reshape(C, H, W)
        Ysi = Ys.reshape(K * C, H, W)

        # Tiny-image fallback: the halo'd stripe must fit inside the image.
        H_k = H
        if th_pad > H:
            H_k = th_pad
            Xi = jnp.pad(Xi, ((0, 0), (0, H_k - H), (0, 0)))
            Ysi = jnp.pad(Ysi, ((0, 0), (0, H_k - H), (0, 0)))

        # Row conv: 128-lane block-banded when possible, dense band otherwise.
        # TODO(synk): tile non-multiple-of-128 widths instead of dense fallback.
        B = 128 if (W % 128 == 0) else W
        nb = W // B

        gh = jnp.asarray(_col_conv_mats(self.g1d, ws, tile_h, nt, H_k))
        gw = jnp.asarray(_row_conv_mats(self.g1d, ws, B))

        in_specs = [pl.BlockSpec(memory_space=pl.ANY),        # X   (HBM, manual DMA)
                    pl.BlockSpec(memory_space=pl.ANY),        # Ys  (HBM, manual DMA)
                    pl.BlockSpec((1, tile_h, th_pad), lambda i: (i, 0, 0)),
                    pl.BlockSpec((3, B, B), lambda i: (0, 0, 0))]
        inputs = [Xi, Ysi, gh, gw]

        if self.is_lum:
            # lY_k = mean(muY_k) computed exactly from the raw pixels with 1-D
            # border weights -> no conv pre-pass / second stripe pipeline.
            sh = jnp.asarray(_border_weights(H, self.g1d, ws))
            sw = jnp.asarray(_border_weights(W, self.g1d, ws))
            lY = jnp.einsum('kchw,h,w->k', Ys, sh, sw) / float(C * H * W)
            lG = jnp.exp(-((lY - 0.5) ** 2) / self.denom_g).astype(jnp.float32)
            in_specs.append(pl.BlockSpec(memory_space=pltpu.MemorySpace.SMEM))
            inputs.append(lG)

        kernel = _make_mef_ssim_kernel(K, C, H, H_k, W, tile_h, ws, B, nb,
                                       self.C1, self.C2, self.denom_l,
                                       self.is_lum)

        partial = pl.pallas_call(
            kernel,
            grid=(nt,),
            in_specs=in_specs,
            out_specs=pl.BlockSpec(memory_space=pltpu.MemorySpace.SMEM),
            out_shape=jax.ShapeDtypeStruct((nt,), jnp.float32),
            scratch_shapes=[
                pltpu.VMEM((2, C, th_pad, W), Ys.dtype),        # X double buffer
                pltpu.VMEM((2, K * C, th_pad, W), Ys.dtype),    # Ys double buffer
                pltpu.SemaphoreType.DMA((2, 2)),
            ],
            compiler_params=pltpu.CompilerParams(
                # TODO(synk): 2-TensorCore "parallel" split for v7x megacore.
                dimension_semantics=("arbitrary",),
                vmem_limit_bytes=int(vmem_limit)),
        )(*inputs)

        return jnp.sum(partial) / float(H * W)


# ---------------------------------------------------------------------------
# Pure-JAX reference (lax.conv based, independent of the kernel path)
# ---------------------------------------------------------------------------
def _ref_mef_ssim(X, Ys, g1d, ws, C1, C2, denom_g, denom_l, is_lum):
    K, C, H, W = Ys.shape
    pad = ws // 2
    g2d = np.outer(g1d, g1d).astype(np.float32)
    window = jnp.asarray(np.broadcast_to(g2d, (1, C, ws, ws)) / C,
                         dtype=jnp.float32)

    def conv(a):
        return jax.lax.conv_general_dilated(
            a.astype(jnp.float32), window, (1, 1),
            [(pad, pad), (pad, pad)],
            dimension_numbers=("NCHW", "OIHW", "NCHW"),
            precision=jax.lax.Precision.HIGHEST)[:, 0]

    muY = conv(Ys)                                     # (K, H, W)
    sigY = conv(Ys * Ys) - muY * muY
    muX = conv(X)[0]
    sigX = conv(X * X)[0] - muX * muX
    sigXY = conv(jnp.broadcast_to(X, Ys.shape) * Ys) - muX[None] * muY
    cs_seq = (2 * sigXY + C2) / (sigX[None] + sigY + C2)
    idx = jnp.argmax(sigY, axis=0)
    cs_map = jnp.take_along_axis(cs_seq, idx[None], axis=0)[0]
    if is_lum:
        lY = jnp.mean(muY.reshape(K, -1), axis=1)
        lL = jnp.exp(-((muY - 0.5) ** 2) / denom_l)
        lG = jnp.exp(-((lY - 0.5) ** 2) / denom_g)[:, None, None]
        LY = lG * lL
        muYw = jnp.sum(LY * muY, axis=0) / jnp.sum(LY, axis=0)
        l_map = (2 * muX * muYw + C1) / (muX * muX + muYw * muYw + C1)
        return jnp.mean(l_map * cs_map)
    return jnp.mean(cs_map)


# ---------------------------------------------------------------------------
if __name__ == "__main__":
    key = jax.random.PRNGKey(0)

    configs = [
        # (K, C, H,  W,   tile_h, is_lum)
        (3, 3, 80, 128, 32,   False),   # multi-stripe grid + clamped ragged last stripe
        (3, 3, 80, 128, 32,   True),    # luminance-weighted path (no pre-pass)
        (2, 3, 40, 256, None, True),    # 2 lane blocks in the block-banded row conv
        (2, 1, 30, 96,  None, False),   # W not a multiple of 128 (dense-band fallback)
    ]

    for (K, C, H, W, tile_h, is_lum) in configs:
        key, k1, k2 = jax.random.split(key, 3)
        X = jax.random.uniform(k1, (1, C, H, W), dtype=jnp.float32)
        Ys = jax.random.uniform(k2, (K, C, H, W), dtype=jnp.float32)

        mod = MEFSSIM(window_size=11, channel=C, is_lum=is_lum, tile_h=tile_h)
        q = jax.block_until_ready(mod(X, Ys))
        q_ref = _ref_mef_ssim(X, Ys, mod.g1d, mod.window_size,
                              mod.C1, mod.C2, mod.denom_g, mod.denom_l, is_lum)
        np.testing.assert_allclose(float(q), float(q_ref), rtol=1e-3, atol=1e-3)

    print("KERNEL_OK")
</pallas_src>

<mosaic_0001>
module attributes {stable_mosaic.version = 11 : i64} {
  func.func @kernel(%arg0: i32, %arg1: memref<3x80x128xf32, #tpu.memory_space<any>>, %arg2: memref<9x80x128xf32, #tpu.memory_space<any>>, %arg3: memref<1x32x42xf32, #tpu.memory_space<vmem>>, %arg4: memref<3x128x128xf32, #tpu.memory_space<vmem>>, %arg5: memref<3xf32, #tpu.memory_space<smem>>, %arg6: memref<2x3x42x128xf32, #tpu.memory_space<vmem>>, %arg7: memref<2x9x42x128xf32, #tpu.memory_space<vmem>>, %arg8: memref<2x2x!tpu.dma_semaphore, #tpu.memory_space<semaphore_mem>>) attributes {dimension_semantics = [#tpu.dimension_semantics<arbitrary>], iteration_bounds = array<i64: 3>, scalar_prefetch = 0 : i64, scratch_operands = 3 : i64, tpu.core_type = #tpu.core_type<tc>, window_params = [{}, {}, {transform_indices = @transform_2, window_bounds = array<i64: 1, 32, 42>}, {pipeline_mode = #tpu.pipeline_mode<synchronous>, transform_indices = @transform_3, window_bounds = array<i64: 3, 128, 128>}, {transform_indices = @transform_4, window_bounds = array<i64: 3>}]} {
    %c2_i32 = arith.constant 2 : i32
    %c0_i32 = arith.constant 0 : i32
    %0 = arith.cmpi eq, %c2_i32, %c0_i32 : i32
    %c1_i32 = arith.constant 1 : i32
    %1 = arith.select %0, %c1_i32, %c2_i32 : i32
    %2 = arith.remsi %arg0, %1 : i32
    %c0_i32_0 = arith.constant 0 : i32
    %3 = arith.cmpi ne, %2, %c0_i32_0 : i32
    %c0_i32_1 = arith.constant 0 : i32
    %4 = arith.cmpi slt, %2, %c0_i32_1 : i32
    %c0_i32_2 = arith.constant 0 : i32
    %5 = arith.cmpi slt, %1, %c0_i32_2 : i32
    %6 = arith.xori %4, %5 : i1
    %7 = arith.andi %6, %3 : i1
    %8 = arith.addi %2, %1 : i32
    %9 = arith.select %7, %8, %2 : i32
    %c0_i32_3 = arith.constant 0 : i32
    %10 = arith.cmpi eq, %arg0, %c0_i32_3 : i32
    %11 = arith.extui %10 : i1 to i32
    %c0_i32_4 = arith.constant 0 : i32
    %12 = arith.cmpi ne, %11, %c0_i32_4 : i32
    scf.if %12 {
      %c32_i32_116 = arith.constant 32 : i32
      %251 = arith.muli %arg0, %c32_i32_116 : i32
      %c5_i32_117 = arith.constant 5 : i32
      %252 = arith.subi %251, %c5_i32_117 : i32
      %c0_i32_118 = arith.constant 0 : i32
      %253 = arith.maxsi %252, %c0_i32_118 : i32
      %c38_i32_119 = arith.constant 38 : i32
      %254 = arith.minsi %253, %c38_i32_119 : i32
      %c0_i32_120 = arith.constant 0 : i32
      %c0_i32_121 = arith.constant 0 : i32
      %c0_i32_122 = arith.constant 0 : i32
      %255 = tpu.memref_slice %arg1[%c0_i32_121, %254, %c0_i32_122] : memref<3x80x128xf32, #tpu.memory_space<any>> -> memref<3x42x128xf32, #tpu.memory_space<any>>
      %c0_i32_123 = arith.constant 0 : i32
      %c0_i32_124 = arith.constant 0 : i32
      %c0_i32_125 = arith.constant 0 : i32
      %256 = tpu.memref_slice %arg6[%9, %c0_i32_123, %c0_i32_124, %c0_i32_125] : memref<2x3x42x128xf32, #tpu.memory_space<vmem>> -> memref<1x3x42x128xf32, #tpu.memory_space<vmem>>
      %257 = tpu.memref_squeeze %256 : memref<1x3x42x128xf32, #tpu.memory_space<vmem>> -> memref<3x42x128xf32, #tpu.memory_space<vmem>>
      %258 = tpu.memref_slice %arg8[%c0_i32_120, %9] : memref<2x2x!tpu.dma_semaphore, #tpu.memory_space<semaphore_mem>> -> memref<1x1x!tpu.dma_semaphore, #tpu.memory_space<semaphore_mem>>
      %259 = tpu.memref_squeeze %258 : memref<1x1x!tpu.dma_semaphore, #tpu.memory_space<semaphore_mem>> -> memref<!tpu.dma_semaphore, #tpu.memory_space<semaphore_mem>>
      tpu.enqueue_dma source(%255 : memref<3x42x128xf32, #tpu.memory_space<any>>) target(%257 : memref<3x42x128xf32, #tpu.memory_space<vmem>>) target_semaphore(%259 : memref<!tpu.dma_semaphore, #tpu.memory_space<semaphore_mem>>)
      %c1_i32_126 = arith.constant 1 : i32
      %c0_i32_127 = arith.constant 0 : i32
      %c0_i32_128 = arith.constant 0 : i32
      %260 = tpu.memref_slice %arg2[%c0_i32_127, %254, %c0_i32_128] : memref<9x80x128xf32, #tpu.memory_space<any>> -> memref<9x42x128xf32, #tpu.memory_space<any>>
      %c0_i32_129 = arith.constant 0 : i32
      %c0_i32_130 = arith.constant 0 : i32
      %c0_i32_131 = arith.constant 0 : i32
      %261 = tpu.memref_slice %arg7[%9, %c0_i32_129, %c0_i32_130, %c0_i32_131] : memref<2x9x42x128xf32, #tpu.memory_space<vmem>> -> memref<1x9x42x128xf32, #tpu.memory_space<vmem>>
      %262 = tpu.memref_squeeze %261 : memref<1x9x42x128xf32, #tpu.memory_space<vmem>> -> memref<9x42x128xf32, #tpu.memory_space<vmem>>
      %263 = tpu.memref_slice %arg8[%c1_i32_126, %9] : memref<2x2x!tpu.dma_semaphore, #tpu.memory_space<semaphore_mem>> -> memref<1x1x!tpu.dma_semaphore, #tpu.memory_space<semaphore_mem>>
      %264 = tpu.memref_squeeze %263 : memref<1x1x!tpu.dma_semaphore, #tpu.memory_space<semaphore_mem>> -> memref<!tpu.dma_semaphore, #tpu.memory_space<semaphore_mem>>
      tpu.enqueue_dma source(%260 : memref<9x42x128xf32, #tpu.memory_space<any>>) target(%262 : memref<9x42x128xf32, #tpu.memory_space<vmem>>) target_semaphore(%264 : memref<!tpu.dma_semaphore, #tpu.memory_space<semaphore_mem>>)
    } else {
    }
    %c32_i32 = arith.constant 32 : i32
    %13 = arith.muli %arg0, %c32_i32 : i32
    %c5_i32 = arith.constant 5 : i32
    %14 = arith.subi %13, %c5_i32 : i32
    %c0_i32_5 = arith.constant 0 : i32
    %15 = arith.maxsi %14, %c0_i32_5 : i32
    %c38_i32 = arith.constant 38 : i32
    %16 = arith.minsi %15, %c38_i32 : i32
    %c0_i32_6 = arith.constant 0 : i32
    %c0_i32_7 = arith.constant 0 : i32
    %c0_i32_8 = arith.constant 0 : i32
    %17 = tpu.memref_slice %arg1[%c0_i32_7, %16, %c0_i32_8] : memref<3x80x128xf32, #tpu.memory_space<any>> -> memref<3x42x128xf32, #tpu.memory_space<any>>
    %c0_i32_9 = arith.constant 0 : i32
    %c0_i32_10 = arith.constant 0 : i32
    %c0_i32_11 = arith.constant 0 : i32
    %18 = tpu.memref_slice %arg6[%9, %c0_i32_9, %c0_i32_10, %c0_i32_11] : memref<2x3x42x128xf32, #tpu.memory_space<vmem>> -> memref<1x3x42x128xf32, #tpu.memory_space<vmem>>
    %19 = tpu.memref_squeeze %18 : memref<1x3x42x128xf32, #tpu.memory_space<vmem>> -> memref<3x42x128xf32, #tpu.memory_space<vmem>>
    %20 = tpu.memref_slice %arg8[%c0_i32_6, %9] : memref<2x2x!tpu.dma_semaphore, #tpu.memory_space<semaphore_mem>> -> memref<1x1x!tpu.dma_semaphore, #tpu.memory_space<semaphore_mem>>
    %21 = tpu.memref_squeeze %20 : memref<1x1x!tpu.dma_semaphore, #tpu.memory_space<semaphore_mem>> -> memref<!tpu.dma_semaphore, #tpu.memory_space<semaphore_mem>>
    tpu.wait_dma2 semaphore(%21 : memref<!tpu.dma_semaphore, #tpu.memory_space<semaphore_mem>>) src(%17 : memref<3x42x128xf32, #tpu.memory_space<any>>) dst(%19 : memref<3x42x128xf32, #tpu.memory_space<vmem>>)
    %c1_i32_12 = arith.constant 1 : i32
    %c0_i32_13 = arith.constant 0 : i32
    %c0_i32_14 = arith.constant 0 : i32
    %22 = tpu.memref_slice %arg2[%c0_i32_13, %16, %c0_i32_14] : memref<9x80x128xf32, #tpu.memory_space<any>> -> memref<9x42x128xf32, #tpu.memory_space<any>>
    %c0_i32_15 = arith.constant 0 : i32
    %c0_i32_16 = arith.constant 0 : i32
    %c0_i32_17 = arith.constant 0 : i32
    %23 = tpu.memref_slice %arg7[%9, %c0_i32_15, %c0_i32_16, %c0_i32_17] : memref<2x9x42x128xf32, #tpu.memory_space<vmem>> -> memref<1x9x42x128xf32, #tpu.memory_space<vmem>>
    %24 = tpu.memref_squeeze %23 : memref<1x9x42x128xf32, #tpu.memory_space<vmem>> -> memref<9x42x128xf32, #tpu.memory_space<vmem>>
    %25 = tpu.memref_slice %arg8[%c1_i32_12, %9] : memref<2x2x!tpu.dma_semaphore, #tpu.memory_space<semaphore_mem>> -> memref<1x1x!tpu.dma_semaphore, #tpu.memory_space<semaphore_mem>>
    %26 = tpu.memref_squeeze %25 : memref<1x1x!tpu.dma_semaphore, #tpu.memory_space<semaphore_mem>> -> memref<!tpu.dma_semaphore, #tpu.memory_space<semaphore_mem>>
    tpu.wait_dma2 semaphore(%26 : memref<!tpu.dma_semaphore, #tpu.memory_space<semaphore_mem>>) src(%22 : memref<9x42x128xf32, #tpu.memory_space<any>>) dst(%24 : memref<9x42x128xf32, #tpu.memory_space<vmem>>)
    %c1_i32_18 = arith.constant 1 : i32
    %27 = arith.addi %arg0, %c1_i32_18 : i32
    %c3_i32 = arith.constant 3 : i32
    %28 = arith.cmpi slt, %27, %c3_i32 : i32
    %29 = arith.extui %28 : i1 to i32
    %c0_i32_19 = arith.constant 0 : i32
    %30 = arith.cmpi ne, %29, %c0_i32_19 : i32
    scf.if %30 {
      %c1_i32_116 = arith.constant 1 : i32
      %251 = arith.addi %arg0, %c1_i32_116 : i32
      %c1_i32_117 = arith.constant 1 : i32
      %252 = arith.subi %c1_i32_117, %9 : i32
      %c32_i32_118 = arith.constant 32 : i32
      %253 = arith.muli %251, %c32_i32_118 : i32
      %c5_i32_119 = arith.constant 5 : i32
      %254 = arith.subi %253, %c5_i32_119 : i32
      %c0_i32_120 = arith.constant 0 : i32
      %255 = arith.maxsi %254, %c0_i32_120 : i32
      %c38_i32_121 = arith.constant 38 : i32
      %256 = arith.minsi %255, %c38_i32_121 : i32
      %c0_i32_122 = arith.constant 0 : i32
      %c0_i32_123 = arith.constant 0 : i32
      %c0_i32_124 = arith.constant 0 : i32
      %257 = tpu.memref_slice %arg1[%c0_i32_123, %256, %c0_i32_124] : memref<3x80x128xf32, #tpu.memory_space<any>> -> memref<3x42x128xf32, #tpu.memory_space<any>>
      %c0_i32_125 = arith.constant 0 : i32
      %c0_i32_126 = arith.constant 0 : i32
      %c0_i32_127 = arith.constant 0 : i32
      %258 = tpu.memref_slice %arg6[%252, %c0_i32_125, %c0_i32_126, %c0_i32_127] : memref<2x3x42x128xf32, #tpu.memory_space<vmem>> -> memref<1x3x42x128xf32, #tpu.memory_space<vmem>>
      %259 = tpu.memref_squeeze %258 : memref<1x3x42x128xf32, #tpu.memory_space<vmem>> -> memref<3x42x128xf32, #tpu.memory_space<vmem>>
      %260 = tpu.memref_slice %arg8[%c0_i32_122, %252] : memref<2x2x!tpu.dma_semaphore, #tpu.memory_space<semaphore_mem>> -> memref<1x1x!tpu.dma_semaphore, #tpu.memory_space<semaphore_mem>>
      %261 = tpu.memref_squeeze %260 : memref<1x1x!tpu.dma_semaphore, #tpu.memory_space<semaphore_mem>> -> memref<!tpu.dma_semaphore, #tpu.memory_space<semaphore_mem>>
      tpu.enqueue_dma source(%257 : memref<3x42x128xf32, #tpu.memory_space<any>>) target(%259 : memref<3x42x128xf32, #tpu.memory_space<vmem>>) target_semaphore(%261 : memref<!tpu.dma_semaphore, #tpu.memory_space<semaphore_mem>>)
      %c1_i32_128 = arith.constant 1 : i32
      %c0_i32_129 = arith.constant 0 : i32
      %c0_i32_130 = arith.constant 0 : i32
      %262 = tpu.memref_slice %arg2[%c0_i32_129, %256, %c0_i32_130] : memref<9x80x128xf32, #tpu.memory_space<any>> -> memref<9x42x128xf32, #tpu.memory_space<any>>
      %c0_i32_131 = arith.constant 0 : i32
      %c0_i32_132 = arith.constant 0 : i32
      %c0_i32_133 = arith.constant 0 : i32
      %263 = tpu.memref_slice %arg7[%252, %c0_i32_131, %c0_i32_132, %c0_i32_133] : memref<2x9x42x128xf32, #tpu.memory_space<vmem>> -> memref<1x9x42x128xf32, #tpu.memory_space<vmem>>
      %264 = tpu.memref_squeeze %263 : memref<1x9x42x128xf32, #tpu.memory_space<vmem>> -> memref<9x42x128xf32, #tpu.memory_space<vmem>>
      %265 = tpu.memref_slice %arg8[%c1_i32_128, %252] : memref<2x2x!tpu.dma_semaphore, #tpu.memory_space<semaphore_mem>> -> memref<1x1x!tpu.dma_semaphore, #tpu.memory_space<semaphore_mem>>
      %266 = tpu.memref_squeeze %265 : memref<1x1x!tpu.dma_semaphore, #tpu.memory_space<semaphore_mem>> -> memref<!tpu.dma_semaphore, #tpu.memory_space<semaphore_mem>>
      tpu.enqueue_dma source(%262 : memref<9x42x128xf32, #tpu.memory_space<any>>) target(%264 : memref<9x42x128xf32, #tpu.memory_space<vmem>>) target_semaphore(%266 : memref<!tpu.dma_semaphore, #tpu.memory_space<semaphore_mem>>)
    } else {
    }
    %c0 = arith.constant 0 : index
    %c0_20 = arith.constant 0 : index
    %c0_21 = arith.constant 0 : index
    %31 = vector.load %arg3[%c0, %c0_20, %c0_21] : memref<1x32x42xf32, #tpu.memory_space<vmem>>, vector<1x32x42xf32>
    %32 = vector.shape_cast %31 : vector<1x32x42xf32> to vector<32x42xf32>
    %c1 = arith.constant 1 : index
    %c0_22 = arith.constant 0 : index
    %c0_23 = arith.constant 0 : index
    %33 = vector.load %arg4[%c1, %c0_22, %c0_23] : memref<3x128x128xf32, #tpu.memory_space<vmem>>, vector<1x128x128xf32>
    %34 = vector.shape_cast %33 : vector<1x128x128xf32> to vector<128x128xf32>
    %35 = arith.index_cast %9 : i32 to index
    %c0_24 = arith.constant 0 : index
    %c0_25 = arith.constant 0 : index
    %c0_26 = arith.constant 0 : index
    %36 = vector.load %arg6[%35, %c0_24, %c0_25, %c0_26] : memref<2x3x42x128xf32, #tpu.memory_space<vmem>>, vector<1x1x42x128xf32>
    %37 = vector.shape_cast %36 : vector<1x1x42x128xf32> to vector<42x128xf32>
    %38 = arith.mulf %37, %37 : vector<42x128xf32>
    %39 = arith.index_cast %9 : i32 to index
    %c1_27 = arith.constant 1 : index
    %c0_28 = arith.constant 0 : index
    %c0_29 = arith.constant 0 : index
    %40 = vector.load %arg6[%39, %c1_27, %c0_28, %c0_29] : memref<2x3x42x128xf32, #tpu.memory_space<vmem>>, vector<1x1x42x128xf32>
    %41 = vector.shape_cast %40 : vector<1x1x42x128xf32> to vector<42x128xf32>
    %42 = arith.addf %37, %41 : vector<42x128xf32>
    %43 = arith.mulf %41, %41 : vector<42x128xf32>
    %44 = arith.addf %38, %43 : vector<42x128xf32>
    %45 = arith.index_cast %9 : i32 to index
    %c2 = arith.constant 2 : index
    %c0_30 = arith.constant 0 : index
    %c0_31 = arith.constant 0 : index
    %46 = vector.load %arg6[%45, %c2, %c0_30, %c0_31] : memref<2x3x42x128xf32, #tpu.memory_space<vmem>>, vector<1x1x42x128xf32>
    %47 = vector.shape_cast %46 : vector<1x1x42x128xf32> to vector<42x128xf32>
    %48 = arith.addf %42, %47 : vector<42x128xf32>
    %49 = arith.mulf %47, %47 : vector<42x128xf32>
    %50 = arith.addf %44, %49 : vector<42x128xf32>
    %cst = arith.constant 0.333333343 : f32
    %51 = vector.broadcast %cst : f32 to vector<42x128xf32>
    %52 = arith.mulf %48, %51 : vector<42x128xf32>
    %cst_32 = arith.constant 0.333333343 : f32
    %53 = vector.broadcast %cst_32 : f32 to vector<42x128xf32>
    %54 = arith.mulf %50, %53 : vector<42x128xf32>
    %cst_33 = arith.constant dense<0.000000e+00> : vector<32x128xf32>
    %55 = tpu.matmul %32, %52, %cst_33 {dimension_numbers = #tpu.dot_dimension_numbers<[1], [0], [0], [1], [0, 0, 1, 1], [], []>} : vector<32x42xf32>, vector<42x128xf32>, vector<32x128xf32> -> vector<32x128xf32>
    %cst_34 = arith.constant dense<0.000000e+00> : vector<32x128xf32>
    %56 = tpu.matmul %32, %54, %cst_34 {dimension_numbers = #tpu.dot_dimension_numbers<[1], [0], [0], [1], [0, 0, 1, 1], [], []>} : vector<32x42xf32>, vector<42x128xf32>, vector<32x128xf32> -> vector<32x128xf32>
    %57 = tpu.concatenate %55, %56 in 0 : vector<32x128xf32>, vector<32x128xf32> -> vector<64x128xf32>
    %cst_35 = arith.constant dense<0.000000e+00> : vector<64x128xf32>
    %58 = tpu.matmul %57, %34, %cst_35 {dimension_numbers = #tpu.dot_dimension_numbers<[1], [0], [0], [1], [0, 0, 1, 1], [], []>} : vector<64x128xf32>, vector<128x128xf32>, vector<64x128xf32> -> vector<64x128xf32>
    %59 = vector.extract_strided_slice %58 {offsets = [0, 0], sizes = [32, 128], strides = [1, 1]} : vector<64x128xf32> to vector<32x128xf32>
    %60 = vector.extract_strided_slice %58 {offsets = [32, 0], sizes = [32, 128], strides = [1, 1]} : vector<64x128xf32> to vector<32x128xf32>
    %61 = arith.mulf %59, %59 : vector<32x128xf32>
    %62 = arith.subf %60, %61 : vector<32x128xf32>
    %63 = arith.index_cast %9 : i32 to index
    %c0_36 = arith.constant 0 : index
    %c0_37 = arith.constant 0 : index
    %c0_38 = arith.constant 0 : index
    %64 = vector.load %arg7[%63, %c0_36, %c0_37, %c0_38] : memref<2x9x42x128xf32, #tpu.memory_space<vmem>>, vector<1x1x42x128xf32>
    %65 = vector.shape_cast %64 : vector<1x1x42x128xf32> to vector<42x128xf32>
    %66 = arith.index_cast %9 : i32 to index
    %c0_39 = arith.constant 0 : index
    %c0_40 = arith.constant 0 : index
    %c0_41 = arith.constant 0 : index
    %67 = vector.load %arg6[%66, %c0_39, %c0_40, %c0_41] : memref<2x3x42x128xf32, #tpu.memory_space<vmem>>, vector<1x1x42x128xf32>
    %68 = vector.shape_cast %67 : vector<1x1x42x128xf32> to vector<42x128xf32>
    %69 = arith.mulf %65, %65 : vector<42x128xf32>
    %70 = arith.mulf %68, %65 : vector<42x128xf32>
    %71 = arith.index_cast %9 : i32 to index
    %c1_42 = arith.constant 1 : index
    %c0_43 = arith.constant 0 : index
    %c0_44 = arith.constant 0 : index
    %72 = vector.load %arg7[%71, %c1_42, %c0_43, %c0_44] : memref<2x9x42x128xf32, #tpu.memory_space<vmem>>, vector<1x1x42x128xf32>
    %73 = vector.shape_cast %72 : vector<1x1x42x128xf32> to vector<42x128xf32>
    %74 = arith.index_cast %9 : i32 to index
    %c1_45 = arith.constant 1 : index
    %c0_46 = arith.constant 0 : index
    %c0_47 = arith.constant 0 : index
    %75 = vector.load %arg6[%74, %c1_45, %c0_46, %c0_47] : memref<2x3x42x128xf32, #tpu.memory_space<vmem>>, vector<1x1x42x128xf32>
    %76 = vector.shape_cast %75 : vector<1x1x42x128xf32> to vector<42x128xf32>
    %77 = arith.addf %65, %73 : vector<42x128xf32>
    %78 = arith.mulf %73, %73 : vector<42x128xf32>
    %79 = arith.addf %69, %78 : vector<42x128xf32>
    %80 = arith.mulf %76, %73 : vector<42x128xf32>
    %81 = arith.addf %70, %80 : vector<42x128xf32>
    %82 = arith.index_cast %9 : i32 to index
    %c2_48 = arith.constant 2 : index
    %c0_49 = arith.constant 0 : index
    %c0_50 = arith.constant 0 : index
    %83 = vector.load %arg7[%82, %c2_48, %c0_49, %c0_50] : memref<2x9x42x128xf32, #tpu.memory_space<vmem>>, vector<1x1x42x128xf32>
    %84 = vector.shape_cast %83 : vector<1x1x42x128xf32> to vector<42x128xf32>
    %85 = arith.index_cast %9 : i32 to index
    %c2_51 = arith.constant 2 : index
    %c0_52 = arith.constant 0 : index
    %c0_53 = arith.constant 0 : index
    %86 = vector.load %arg6[%85, %c2_51, %c0_52, %c0_53] : memref<2x3x42x128xf32, #tpu.memory_space<vmem>>, vector<1x1x42x128xf32>
    %87 = vector.shape_cast %86 : vector<1x1x42x128xf32> to vector<42x128xf32>
    %88 = arith.addf %77, %84 : vector<42x128xf32>
    %89 = arith.mulf %84, %84 : vector<42x128xf32>
    %90 = arith.addf %79, %89 : vector<42x128xf32>
    %91 = arith.mulf %87, %84 : vector<42x128xf32>
    %92 = arith.addf %81, %91 : vector<42x128xf32>
    %cst_54 = arith.constant 0.333333343 : f32
    %93 = vector.broadcast %cst_54 : f32 to vector<42x128xf32>
    %94 = arith.mulf %88, %93 : vector<42x128xf32>
    %cst_55 = arith.constant 0.333333343 : f32
    %95 = vector.broadcast %cst_55 : f32 to vector<42x128xf32>
    %96 = arith.mulf %90, %95 : vector<42x128xf32>
    %cst_56 = arith.constant 0.333333343 : f32
    %97 = vector.broadcast %cst_56 : f32 to vector<42x128xf32>
    %98 = arith.mulf %92, %97 : vector<42x128xf32>
    %cst_57 = arith.constant dense<0.000000e+00> : vector<32x128xf32>
    %99 = tpu.matmul %32, %94, %cst_57 {dimension_numbers = #tpu.dot_dimension_numbers<[1], [0], [0], [1], [0, 0, 1, 1], [], []>} : vector<32x42xf32>, vector<42x128xf32>, vector<32x128xf32> -> vector<32x128xf32>
    %cst_58 = arith.constant dense<0.000000e+00> : vector<32x128xf32>
    %100 = tpu.matmul %32, %96, %cst_58 {dimension_numbers = #tpu.dot_dimension_numbers<[1], [0], [0], [1], [0, 0, 1, 1], [], []>} : vector<32x42xf32>, vector<42x128xf32>, vector<32x128xf32> -> vector<32x128xf32>
    %cst_59 = arith.constant dense<0.000000e+00> : vector<32x128xf32>
    %101 = tpu.matmul %32, %98, %cst_59 {dimension_numbers = #tpu.dot_dimension_numbers<[1], [0], [0], [1], [0, 0, 1, 1], [], []>} : vector<32x42xf32>, vector<42x128xf32>, vector<32x128xf32> -> vector<32x128xf32>
    %102 = tpu.concatenate %99, %100, %101 in 0 : vector<32x128xf32>, vector<32x128xf32>, vector<32x128xf32> -> vector<96x128xf32>
    %cst_60 = arith.constant dense<0.000000e+00> : vector<96x128xf32>
    %103 = tpu.matmul %102, %34, %cst_60 {dimension_numbers = #tpu.dot_dimension_numbers<[1], [0], [0], [1], [0, 0, 1, 1], [], []>} : vector<96x128xf32>, vector<128x128xf32>, vector<96x128xf32> -> vector<96x128xf32>
    %104 = vector.extract_strided_slice %103 {offsets = [0, 0], sizes = [32, 128], strides = [1, 1]} : vector<96x128xf32> to vector<32x128xf32>
    %105 = vector.extract_strided_slice %103 {offsets = [32, 0], sizes = [32, 128], strides = [1, 1]} : vector<96x128xf32> to vector<32x128xf32>
    %106 = vector.extract_strided_slice %103 {offsets = [64, 0], sizes = [32, 128], strides = [1, 1]} : vector<96x128xf32> to vector<32x128xf32>
    %107 = arith.mulf %104, %104 : vector<32x128xf32>
    %108 = arith.subf %105, %107 : vector<32x128xf32>
    %109 = arith.mulf %59, %104 : vector<32x128xf32>
    %110 = arith.subf %106, %109 : vector<32x128xf32>
    %cst_61 = arith.constant 2.000000e+00 : f32
    %111 = vector.broadcast %cst_61 : f32 to vector<32x128xf32>
    %112 = arith.mulf %111, %110 : vector<32x128xf32>
    %cst_62 = arith.constant 8.99999984E-4 : f32
    %113 = vector.broadcast %cst_62 : f32 to vector<32x128xf32>
    %114 = arith.addf %112, %113 : vector<32x128xf32>
    %115 = arith.addf %62, %108 : vector<32x128xf32>
    %cst_63 = arith.constant 8.99999984E-4 : f32
    %116 = vector.broadcast %cst_63 : f32 to vector<32x128xf32>
    %117 = arith.addf %115, %116 : vector<32x128xf32>
    %118 = arith.divf %114, %117 : vector<32x128xf32>
    %119 = arith.index_cast %9 : i32 to index
    %c3 = arith.constant 3 : index
    %c0_64 = arith.constant 0 : index
    %c0_65 = arith.constant 0 : index
    %120 = vector.load %arg7[%119, %c3, %c0_64, %c0_65] : memref<2x9x42x128xf32, #tpu.memory_space<vmem>>, vector<1x1x42x128xf32>
    %121 = vector.shape_cast %120 : vector<1x1x42x128xf32> to vector<42x128xf32>
    %122 = arith.index_cast %9 : i32 to index
    %c0_66 = arith.constant 0 : index
    %c0_67 = arith.constant 0 : index
    %c0_68 = arith.constant 0 : index
    %123 = vector.load %arg6[%122, %c0_66, %c0_67, %c0_68] : memref<2x3x42x128xf32, #tpu.memory_space<vmem>>, vector<1x1x42x128xf32>
    %124 = vector.shape_cast %123 : vector<1x1x42x128xf32> to vector<42x128xf32>
    %125 = arith.mulf %121, %121 : vector<42x128xf32>
    %126 = arith.mulf %124, %121 : vector<42x128xf32>
    %127 = arith.index_cast %9 : i32 to index
    %c4 = arith.constant 4 : index
    %c0_69 = arith.constant 0 : index
    %c0_70 = arith.constant 0 : index
    %128 = vector.load %arg7[%127, %c4, %c0_69, %c0_70] : memref<2x9x42x128xf32, #tpu.memory_space<vmem>>, vector<1x1x42x128xf32>
    %129 = vector.shape_cast %128 : vector<1x1x42x128xf32> to vector<42x128xf32>
    %130 = arith.index_cast %9 : i32 to index
    %c1_71 = arith.constant 1 : index
    %c0_72 = arith.constant 0 : index
    %c0_73 = arith.constant 0 : index
    %131 = vector.load %arg6[%130, %c1_71, %c0_72, %c0_73] : memref<2x3x42x128xf32, #tpu.memory_space<vmem>>, vector<1x1x42x128xf32>
    %132 = vector.shape_cast %131 : vector<1x1x42x128xf32> to vector<42x128xf32>
    %133 = arith.addf %121, %129 : vector<42x128xf32>
    %134 = arith.mulf %129, %129 : vector<42x128xf32>
    %135 = arith.addf %125, %134 : vector<42x128xf32>
    %136 = arith.mulf %132, %129 : vector<42x128xf32>
    %137 = arith.addf %126, %136 : vector<42x128xf32>
    %138 = arith.index_cast %9 : i32 to index
    %c5 = arith.constant 5 : index
    %c0_74 = arith.constant 0 : index
    %c0_75 = arith.constant 0 : index
    %139 = vector.load %arg7[%138, %c5, %c0_74, %c0_75] : memref<2x9x42x128xf32, #tpu.memory_space<vmem>>, vector<1x1x42x128xf32>
    %140 = vector.shape_cast %139 : vector<1x1x42x128xf32> to vector<42x128xf32>
    %141 = arith.index_cast %9 : i32 to index
    %c2_76 = arith.constant 2 : index
    %c0_77 = arith.constant 0 : index
    %c0_78 = arith.constant 0 : index
    %142 = vector.load %arg6[%141, %c2_76, %c0_77, %c0_78] : memref<2x3x42x128xf32, #tpu.memory_space<vmem>>, vector<1x1x42x128xf32>
    %143 = vector.shape_cast %142 : vector<1x1x42x128xf32> to vector<42x128xf32>
    %144 = arith.addf %133, %140 : vector<42x128xf32>
    %145 = arith.mulf %140, %140 : vector<42x128xf32>
    %146 = arith.addf %135, %145 : vector<42x128xf32>
    %147 = arith.mulf %143, %140 : vector<42x128xf32>
    %148 = arith.addf %137, %147 : vector<42x128xf32>
    %cst_79 = arith.constant 0.333333343 : f32
    %149 = vector.broadcast %cst_79 : f32 to vector<42x128xf32>
    %150 = arith.mulf %144, %149 : vector<42x128xf32>
    %cst_80 = arith.constant 0.333333343 : f32
    %151 = vector.broadcast %cst_80 : f32 to vector<42x128xf32>
    %152 = arith.mulf %146, %151 : vector<42x128xf32>
    %cst_81 = arith.constant 0.333333343 : f32
    %153 = vector.broadcast %cst_81 : f32 to vector<42x128xf32>
    %154 = arith.mulf %148, %153 : vector<42x128xf32>
    %cst_82 = arith.constant dense<0.000000e+00> : vector<32x128xf32>
    %155 = tpu.matmul %32, %150, %cst_82 {dimension_numbers = #tpu.dot_dimension_numbers<[1], [0], [0], [1], [0, 0, 1, 1], [], []>} : vector<32x42xf32>, vector<42x128xf32>, vector<32x128xf32> -> vector<32x128xf32>
    %cst_83 = arith.constant dense<0.000000e+00> : vector<32x128xf32>
    %156 = tpu.matmul %32, %152, %cst_83 {dimension_numbers = #tpu.dot_dimension_numbers<[1], [0], [0], [1], [0, 0, 1, 1], [], []>} : vector<32x42xf32>, vector<42x128xf32>, vector<32x128xf32> -> vector<32x128xf32>
    %cst_84 = arith.constant dense<0.000000e+00> : vector<32x128xf32>
    %157 = tpu.matmul %32, %154, %cst_84 {dimension_numbers = #tpu.dot_dimension_numbers<[1], [0], [0], [1], [0, 0, 1, 1], [], []>} : vector<32x42xf32>, vector<42x128xf32>, vector<32x128xf32> -> vector<32x128xf32>
    %158 = tpu.concatenate %155, %156, %157 in 0 : vector<32x128xf32>, vector<32x128xf32>, vector<32x128xf32> -> vector<96x128xf32>
    %cst_85 = arith.constant dense<0.000000e+00> : vector<96x128xf32>
    %159 = tpu.matmul %158, %34, %cst_85 {dimension_numbers = #tpu.dot_dimension_numbers<[1], [0], [0], [1], [0, 0, 1, 1], [], []>} : vector<96x128xf32>, vector<128x128xf32>, vector<96x128xf32> -> vector<96x128xf32>
    %160 = vector.extract_strided_slice %159 {offsets = [0, 0], sizes = [32, 128], strides = [1, 1]} : vector<96x128xf32> to vector<32x128xf32>
    %161 = vector.extract_strided_slice %159 {offsets = [32, 0], sizes = [32, 128], strides = [1, 1]} : vector<96x128xf32> to vector<32x128xf32>
    %162 = vector.extract_strided_slice %159 {offsets = [64, 0], sizes = [32, 128], strides = [1, 1]} : vector<96x128xf32> to vector<32x128xf32>
    %163 = arith.mulf %160, %160 : vector<32x128xf32>
    %164 = arith.subf %161, %163 : vector<32x128xf32>
    %165 = arith.mulf %59, %160 : vector<32x128xf32>
    %166 = arith.subf %162, %165 : vector<32x128xf32>
    %cst_86 = arith.constant 2.000000e+00 : f32
    %167 = vector.broadcast %cst_86 : f32 to vector<32x128xf32>
    %168 = arith.mulf %167, %166 : vector<32x128xf32>
    %cst_87 = arith.constant 8.99999984E-4 : f32
    %169 = vector.broadcast %cst_87 : f32 to vector<32x128xf32>
    %170 = arith.addf %168, %169 : vector<32x128xf32>
    %171 = arith.addf %62, %164 : vector<32x128xf32>
    %cst_88 = arith.constant 8.99999984E-4 : f32
    %172 = vector.broadcast %cst_88 : f32 to vector<32x128xf32>
    %173 = arith.addf %171, %172 : vector<32x128xf32>
    %174 = arith.divf %170, %173 : vector<32x128xf32>
    %175 = arith.cmpf ogt, %164, %108 : vector<32x128xf32>
    %176 = arith.select %175, %174, %118 : vector<32x128xi1>, vector<32x128xf32>
    %177 = arith.select %175, %164, %108 : vector<32x128xi1>, vector<32x128xf32>
    %178 = arith.index_cast %9 : i32 to index
    %c6 = arith.constant 6 : index
    %c0_89 = arith.constant 0 : index
    %c0_90 = arith.constant 0 : index
    %179 = vector.load %arg7[%178, %c6, %c0_89, %c0_90] : memref<2x9x42x128xf32, #tpu.memory_space<vmem>>, vector<1x1x42x128xf32>
    %180 = vector.shape_cast %179 : vector<1x1x42x128xf32> to vector<42x128xf32>
    %181 = arith.index_cast %9 : i32 to index
    %c0_91 = arith.constant 0 : index
    %c0_92 = arith.constant 0 : index
    %c0_93 = arith.constant 0 : index
    %182 = vector.load %arg6[%181, %c0_91, %c0_92, %c0_93] : memref<2x3x42x128xf32, #tpu.memory_space<vmem>>, vector<1x1x42x128xf32>
    %183 = vector.shape_cast %182 : vector<1x1x42x128xf32> to vector<42x128xf32>
    %184 = arith.mulf %180, %180 : vector<42x128xf32>
    %185 = arith.mulf %183, %180 : vector<42x128xf32>
    %186 = arith.index_cast %9 : i32 to index
    %c7 = arith.constant 7 : index
    %c0_94 = arith.constant 0 : index
    %c0_95 = arith.constant 0 : index
    %187 = vector.load %arg7[%186, %c7, %c0_94, %c0_95] : memref<2x9x42x128xf32, #tpu.memory_space<vmem>>, vector<1x1x42x128xf32>
    %188 = vector.shape_cast %187 : vector<1x1x42x128xf32> to vector<42x128xf32>
    %189 = arith.index_cast %9 : i32 to index
    %c1_96 = arith.constant 1 : index
    %c0_97 = arith.constant 0 : index
    %c0_98 = arith.constant 0 : index
    %190 = vector.load %arg6[%189, %c1_96, %c0_97, %c0_98] : memref<2x3x42x128xf32, #tpu.memory_space<vmem>>, vector<1x1x42x128xf32>
    %191 = vector.shape_cast %190 : vector<1x1x42x128xf32> to vector<42x128xf32>
    %192 = arith.addf %180, %188 : vector<42x128xf32>
    %193 = arith.mulf %188, %188 : vector<42x128xf32>
    %194 = arith.addf %184, %193 : vector<42x128xf32>
    %195 = arith.mulf %191, %188 : vector<42x128xf32>
    %196 = arith.addf %185, %195 : vector<42x128xf32>
    %197 = arith.index_cast %9 : i32 to index
    %c8 = arith.constant 8 : index
    %c0_99 = arith.constant 0 : index
    %c0_100 = arith.constant 0 : index
    %198 = vector.load %arg7[%197, %c8, %c0_99, %c0_100] : memref<2x9x42x128xf32, #tpu.memory_space<vmem>>, vector<1x1x42x128xf32>
    %199 = vector.shape_cast %198 : vector<1x1x42x128xf32> to vector<42x128xf32>
    %200 = arith.index_cast %9 : i32 to index
    %c2_101 = arith.constant 2 : index
    %c0_102 = arith.constant 0 : index
    %c0_103 = arith.constant 0 : index
    %201 = vector.load %arg6[%200, %c2_101, %c0_102, %c0_103] : memref<2x3x42x128xf32, #tpu.memory_space<vmem>>, vector<1x1x42x128xf32>
    %202 = vector.shape_cast %201 : vector<1x1x42x128xf32> to vector<42x128xf32>
    %203 = arith.addf %192, %199 : vector<42x128xf32>
    %204 = arith.mulf %199, %199 : vector<42x128xf32>
    %205 = arith.addf %194, %204 : vector<42x128xf32>
    %206 = arith.mulf %202, %199 : vector<42x128xf32>
    %207 = arith.addf %196, %206 : vector<42x128xf32>
    %cst_104 = arith.constant 0.333333343 : f32
    %208 = vector.broadcast %cst_104 : f32 to vector<42x128xf32>
    %209 = arith.mulf %203, %208 : vector<42x128xf32>
    %cst_105 = arith.constant 0.333333343 : f32
    %210 = vector.broadcast %cst_105 : f32 to vector<42x128xf32>
    %211 = arith.mulf %205, %210 : vector<42x128xf32>
    %cst_106 = arith.constant 0.333333343 : f32
    %212 = vector.broadcast %cst_106 : f32 to vector<42x128xf32>
    %213 = arith.mulf %207, %212 : vector<42x128xf32>
    %cst_107 = arith.constant dense<0.000000e+00> : vector<32x128xf32>
    %214 = tpu.matmul %32, %209, %cst_107 {dimension_numbers = #tpu.dot_dimension_numbers<[1], [0], [0], [1], [0, 0, 1, 1], [], []>} : vector<32x42xf32>, vector<42x128xf32>, vector<32x128xf32> -> vector<32x128xf32>
    %cst_108 = arith.constant dense<0.000000e+00> : vector<32x128xf32>
    %215 = tpu.matmul %32, %211, %cst_108 {dimension_numbers = #tpu.dot_dimension_numbers<[1], [0], [0], [1], [0, 0, 1, 1], [], []>} : vector<32x42xf32>, vector<42x128xf32>, vector<32x128xf32> -> vector<32x128xf32>
    %cst_109 = arith.constant dense<0.000000e+00> : vector<32x128xf32>
    %216 = tpu.matmul %32, %213, %cst_109 {dimension_numbers = #tpu.dot_dimension_numbers<[1], [0], [0], [1], [0, 0, 1, 1], [], []>} : vector<32x42xf32>, vector<42x128xf32>, vector<32x128xf32> -> vector<32x128xf32>
    %217 = tpu.concatenate %214, %215, %216 in 0 : vector<32x128xf32>, vector<32x128xf32>, vector<32x128xf32> -> vector<96x128xf32>
    %cst_110 = arith.constant dense<0.000000e+00> : vector<96x128xf32>
    %218 = tpu.matmul %217, %34, %cst_110 {dimension_numbers = #tpu.dot_dimension_numbers<[1], [0], [0], [1], [0, 0, 1, 1], [], []>} : vector<96x128xf32>, vector<128x128xf32>, vector<96x128xf32> -> vector<96x128xf32>
    %219 = vector.extract_strided_slice %218 {offsets = [0, 0], sizes = [32, 128], strides = [1, 1]} : vector<96x128xf32> to vector<32x128xf32>
    %220 = vector.extract_strided_slice %218 {offsets = [32, 0], sizes = [32, 128], strides = [1, 1]} : vector<96x128xf32> to vector<32x128xf32>
    %221 = vector.extract_strided_slice %218 {offsets = [64, 0], sizes = [32, 128], strides = [1, 1]} : vector<96x128xf32> to vector<32x128xf32>
    %222 = arith.mulf %219, %219 : vector<32x128xf32>
    %223 = arith.subf %220, %222 : vector<32x128xf32>
    %224 = arith.mulf %59, %219 : vector<32x128xf32>
    %225 = arith.subf %221, %224 : vector<32x128xf32>
    %cst_111 = arith.constant 2.000000e+00 : f32
    %226 = vector.broadcast %cst_111 : f32 to vector<32x128xf32>
    %227 = arith.mulf %226, %225 : vector<32x128xf32>
    %cst_112 = arith.constant 8.99999984E-4 : f32
    %228 = vector.broadcast %cst_112 : f32 to vector<32x128xf32>
    %229 = arith.addf %227, %228 : vector<32x128xf32>
    %230 = arith.addf %62, %223 : vector<32x128xf32>
    %cst_113 = arith.constant 8.99999984E-4 : f32
    %231 = vector.broadcast %cst_113 : f32 to vector<32x128xf32>
    %232 = arith.addf %230, %231 : vector<32x128xf32>
    %233 = arith.divf %229, %232 : vector<32x128xf32>
    %234 = arith.cmpf ogt, %223, %177 : vector<32x128xf32>
    %235 = arith.select %234, %233, %176 : vector<32x128xi1>, vector<32x128xf32>
    %236 = tpu.iota {dimensions = array<i32: 0>} : vector<32x128xi32>
    %c32_i32_114 = arith.constant 32 : i32
    %237 = arith.muli %arg0, %c32_i32_114 : i32
    %238 = vector.broadcast %237 : i32 to vector<32x128xi32>
    %239 = arith.addi %236, %238 : vector<32x128xi32>
    %c80_i32 = arith.constant 80 : i32
    %240 = vector.broadcast %c80_i32 : i32 to vector<32x128xi32>
    %241 = arith.cmpi slt, %239, %240 : vector<32x128xi32>
    %242 = arith.extui %241 : vector<32x128xi1> to vector<32x128xi32>
    %243 = arith.sitofp %242 : vector<32x128xi32> to vector<32x128xf32>
    %244 = arith.mulf %243, %235 : vector<32x128xf32>
    %245 = vector.shape_cast %244 : vector<32x128xf32> to vector<1x32x128xf32>
    %cst_115 = arith.constant dense<0.000000e+00> : vector<1xf32>
    %246 = vector.multi_reduction <add>, %245, %cst_115 [1, 2] : vector<1x32x128xf32> to vector<1xf32>
    %247 = vector.shape_cast %246 : vector<1xf32> to vector<1x1x1xf32>
    %248 = vector.extract %247[0, 0, 0] : f32 from vector<1x1x1xf32>
    %249 = arith.index_cast %arg0 : i32 to index
    %250 = memref.load %arg5[%249] : memref<3xf32, #tpu.memory_space<smem>>
    memref.store %248, %arg5[%249] : memref<3xf32, #tpu.memory_space<smem>>
    return
  }
  func.func @transform_2(%arg0: i32) -> (i32, i32, i32) {
    %c0_i32 = arith.constant 0 : i32
    %c0_i32_0 = arith.constant 0 : i32
    %c0_i32_1 = arith.constant 0 : i32
    return %arg0, %c0_i32, %c0_i32_0 : i32, i32, i32
  }
  func.func @transform_3(%arg0: i32) -> (i32, i32, i32) {
    %c0_i32 = arith.constant 0 : i32
    %c0_i32_0 = arith.constant 0 : i32
    %c0_i32_1 = arith.constant 0 : i32
    %c0_i32_2 = arith.constant 0 : i32
    return %c0_i32, %c0_i32_0, %c0_i32_1 : i32, i32, i32
  }
  func.func @transform_4(%arg0: i32) -> i32 {
    %c0_i32 = arith.constant 0 : i32
    %c0_i32_0 = arith.constant 0 : i32
    return %c0_i32 : i32
  }
}

</mosaic_0001>

<llo_original>
// kernel: tpu_custom_call.1
$region0: #{tpu_custom_call.1}
  #allocation0 [shape = 'u32[]', space=smem, size = 0x4, offset = 0x4, fixed_abs, tag = 'smem constant byte address 0x4 - core index']
  #allocation1 [shape = 'u32[144,128]{1,0:T(1,128)}', space=vmem, size = 0x12000, scoped, tag = 'internal scratch']
  #allocation2 [shape = 'f32[2,3,42,128]{3,2,1,0:T(8,128)}', space=vmem, size = 0x24000, scoped, tag = 'scratch operand']
  #allocation3 [shape = 'f32[2,9,42,128]{3,2,1,0:T(8,128)}', space=vmem, size = 0x6c000, scoped, tag = 'scratch operand']
  #allocation4 [shape = 's32[4]{0}', space=sflag, size = 0x10, scoped, tag = 'scratch operand']
  #allocation11 [shape = 's32[]', space=sflag, size = 0x4, offset = 0, fixed_abs, tag = 'sflag constant byte address 0x0 - dummy sync flag']
  #allocation12 [shape = 's32[]', space=sflag, size = 0x4, offset = 0, fixed_abs, tag = 'sflag constant byte address 0x0 - dummy sync flag']
  #allocation13 [shape = 's32[]', space=sflag, size = 0x4, offset = 0, fixed_abs, tag = 'sflag constant byte address 0x0 - dummy sync flag']
  #allocation14 [shape = 's32[]', space=sflag, size = 0x4, offset = 0, fixed_abs, tag = 'sflag constant byte address 0x0 - dummy sync flag']
  %s0 = inlined_call_operand.hbm [shape: f32[3,80,128], index: 0, kind: input, shape index: {}]
  %s1 = inlined_call_operand.hbm [shape: f32[9,80,128], index: 1, kind: input, shape index: {}]
  %s2 = inlined_call_operand.hbm [shape: f32[3,32,42], index: 2, kind: input, shape index: {}]
  %s3 = inlined_call_operand.hbm [shape: f32[3,128,128], index: 3, kind: input, shape index: {}]
  %s4 = inlined_call_operand.hbm [shape: f32[3], index: 4, kind: output, shape index: {}]
  %s5 = sld [smem:[#allocation0]]
  $region57: #{tpu_custom_call.1} parent=0
    _
  %s7 = ssub.s32 1, %s5
  %s8 = scalar_select 0, %s7, %s5
  $region1: #{tpu_custom_call.1} parent=0
    #allocation5 [shape = 'u8[32768]{0}', space=vmem, size = 0x8000, scoped, tag = 'input window, operand 2']
    #allocation6 [shape = 's32[2]{0}', space=sflag, size = 0x8, scoped, tag = 'scoped memory for tpu_custom_call.1']
    #allocation7 [shape = 's32[2]{0}', space=sflag, size = 0x8, scoped, tag = 'scoped memory for tpu_custom_call.1']
    #allocation8 [shape = 'u8[196608]{0}', space=vmem, size = 0x30000, scoped, tag = 'input window, operand 3, single buffered']
    #allocation9 [shape = 's32[1]{0}', space=sflag, size = 0x4, scoped, tag = 'scoped memory for tpu_custom_call.1']
    #allocation10 [shape = 'u8[512]{0}', space=smem, size = 0x200, scoped, tag = 'output window, operand 0, single buffered']
    %9 = vsyncpa [#allocation6], 0
    %s10 = scalar_lea.sflag [#allocation6], 1
    %11 = vsyncpa %s10, 0
    %12 = vsyncpa [#allocation9], 0
    %13 = vsyncpa [#allocation7], 0
    loop: start=0, step=1, limit=5
    $region2: #{tpu_custom_call.1} parent=1 // loop_pre_header
      _
    $region3: #{tpu_custom_call.1} parent=1 // loop_header
      %s15 = sphi 0, %s19
      %p16 = scmp.ge.s32.totalorder %s15, 5
      %s25 = sphi 0, %s27
      %s28 = sphi 0, %s25
      %s29 = sphi 0, %s28
      %s45 = sphi 0, %s29
      %s49 = sphi 0, %s49
      %s51 = sphi 0, %s49
      %s52 = sphi 0, %s51
      %s66 = sphi 0, %s52
      %s70 = sphi 0, %s70
      %s72 = sphi 0, %s70
      %s73 = sphi 0, %s72
      %s87 = sphi 0, %s73
    $region4: #{tpu_custom_call.1} parent=1 // loop_header_branch
      %18 = sbr.rel (%p16) target = $region8
    $region5: #{tpu_custom_call.1} parent=1 // loop_body
      %s20 = ssub.s32 %s15, 1
      %s21 = ssub.s32 %s15, 2
      %s22 = sadd.s32 %s15, 1
      %s23 = ssub.s32 %s15, %s22
      %p24 = scmp.eq.s32.totalorder %s23, 0
      %s26 = sadd.s32 %s25, 1
      %s27 = scalar_select %p24, %s25, %s26
      %p30 = pneg %p24
      %p31 = scmp.eq.s32.totalorder %s15, 2
      %p32 = por %p30, %p31
      %p33 = scmp.ne.s32.totalorder %s25, %s28
      %p34 = scmp.eq.s32.totalorder %s15, 0
      %p35 = por %p33, %p34
      %p36 = scmp.ne.s32.totalorder %s25, %s28
      %p37 = scmp.eq.s32.totalorder %s20, 2
      %p38 = por %p36, %p37
      %p39 = scmp.ne.s32.totalorder %s28, %s29
      %p40 = scmp.eq.s32.totalorder %s20, 0
      %p41 = por %p39, %p40
      %p42 = scmp.ne.s32.totalorder %s28, %s29
      %p43 = scmp.eq.s32.totalorder %s21, 2
      %p44 = por %p42, %p43
      %p46 = scmp.ne.s32.totalorder %s29, %s45
      %p47 = scmp.eq.s32.totalorder %s21, 0
      %p48 = por %p46, %p47
      %s50 = sadd.s32 %s49, 1
      %p53 = scmp.eq.s32.totalorder %s15, 2
      %p54 = scmp.ne.s32.totalorder %s49, %s51
      %p55 = scmp.eq.s32.totalorder %s15, 0
      %p56 = por %p54, %p55
      %p57 = scmp.ne.s32.totalorder %s49, %s51
      %p58 = scmp.eq.s32.totalorder %s20, 2
      %p59 = por %p57, %p58
      %p60 = scmp.ne.s32.totalorder %s51, %s52
      %p61 = scmp.eq.s32.totalorder %s20, 0
      %p62 = por %p60, %p61
      %p63 = scmp.ne.s32.totalorder %s51, %s52
      %p64 = scmp.eq.s32.totalorder %s21, 2
      %p65 = por %p63, %p64
      %p67 = scmp.ne.s32.totalorder %s52, %s66
      %p68 = scmp.eq.s32.totalorder %s21, 0
      %p69 = por %p67, %p68
      %s71 = sadd.s32 %s70, 1
      %p74 = scmp.eq.s32.totalorder %s15, 2
      %p75 = scmp.ne.s32.totalorder %s70, %s72
      %p76 = scmp.eq.s32.totalorder %s15, 0
      %p77 = por %p75, %p76
      %p78 = scmp.ne.s32.totalorder %s70, %s72
      %p79 = scmp.eq.s32.totalorder %s20, 2
      %p80 = por %p78, %p79
      %p81 = scmp.ne.s32.totalorder %s72, %s73
      %p82 = scmp.eq.s32.totalorder %s20, 0
      %p83 = por %p81, %p82
      %p84 = scmp.ne.s32.totalorder %s72, %s73
      %p85 = scmp.eq.s32.totalorder %s21, 2
      %p86 = por %p84, %p85
      %p88 = scmp.ne.s32.totalorder %s73, %s87
      %p89 = scmp.eq.s32.totalorder %s21, 0
      %p90 = por %p88, %p89
      %p91 = scmp.le.s32.totalorder 1, %s15
      %p92 = scmp.lt.s32.totalorder %s15, 4
      %p93 = pnand %p91, %p92
      %p94 = pneg %p93
      // Predicated region
      $region9: #{tpu_custom_call.1} parent=5 // pred_check
        _
      $region10: #{tpu_custom_call.1} parent=5 // pred_check_branch
        %96 = sbr.rel (%p93) target = $region12
      $region11: #{tpu_custom_call.1} parent=5 // pred_region
        %s97 = ssub.s32 %s15, 1
        // Predicated region
        $region13: #{tpu_custom_call.1} parent=11 // pred_check
          %p98 = pneg %p62
        $region14: #{tpu_custom_call.1} parent=11 // pred_check_branch
          %100 = sbr.rel (%p98) target = $region16
        $region15: #{tpu_custom_call.1} parent=11 // pred_region
          %s102 = ssub.s32 6144, 6144
          %103 = vsyncadd [#allocation9], %s102
          %s104 = sshll.u32 [#allocation8], 4
          %s105 = int_to_ptr.vmem [resolvable:$true] %s104
          %110 = dma.hbm_to_vmem [thread:$0]  %s3, 6144, %s105, [#allocation9], 128, 128, 8
        $region16: #{tpu_custom_call.1} parent=11 // pred_fallthru
          _
      $region12: #{tpu_custom_call.1} parent=5 // pred_fallthru
        _
      %p111 = scmp.lt.s32.totalorder %s15, 3
      // Predicated region
      $region17: #{tpu_custom_call.1} parent=5 // pred_check
        %p112 = pneg %p111
      $region18: #{tpu_custom_call.1} parent=5 // pred_check_branch
        %114 = sbr.rel (%p112) target = $region20
      $region19: #{tpu_custom_call.1} parent=5 // pred_region
        // Predicated region
        $region21: #{tpu_custom_call.1} parent=19 // pred_check
          %p115 = pneg %p35
        $region22: #{tpu_custom_call.1} parent=19 // pred_check_branch
          %117 = sbr.rel (%p115) target = $region24
        $region23: #{tpu_custom_call.1} parent=19 // pred_region
          %s118 = sand.u32 %s25, 1
          %s119 = scalar_lea.sflag [#allocation6], %s118
          %s120 = sand.u32 %s25, 1
          %s121 = smul.addr %s120, 32
          %s122 = scalar_lea.vmem [#allocation5], %s121
          %s124 = ssub.s32 512, 512
          %125 = vsyncadd %s119, %s124
          %s126 = smul.addr %s15, 4
          %s127 = smul.addr %s126, 128
          %s128 = scalar_lea.hbm %s2, %s127
          %s129 = sshll.u32 %s122, 4
          %s130 = int_to_ptr.vmem [resolvable:$true] %s129
          %135 = dma.hbm_to_vmem [thread:$0]  %s128, 512, %s130, %s119, 128, 128, 8
        $region24: #{tpu_custom_call.1} parent=19 // pred_fallthru
          _
      $region20: #{tpu_custom_call.1} parent=5 // pred_fallthru
        _
      %p136 = scmp.le.s32.totalorder 1, %s15
      %p137 = scmp.lt.s32.totalorder %s15, 4
      %p138 = pnand %p136, %p137
      %p139 = pneg %p138
      // Predicated region
      $region25: #{tpu_custom_call.1} parent=5 // pred_check
        _
      $region26: #{tpu_custom_call.1} parent=5 // pred_check_branch
        %141 = sbr.rel (%p138) target = $region28
      $region27: #{tpu_custom_call.1} parent=5 // pred_region
        %s142 = ssub.s32 %s15, 1
        %s143 = sand.u32 %s28, 1
        %s144 = scalar_lea.sflag [#allocation6], %s143
        %s145 = sand.u32 %s28, 1
        %s146 = smul.addr %s145, 32
        %s147 = scalar_lea.vmem [#allocation5], %s146
        // Predicated region
        $region29: #{tpu_custom_call.1} parent=27 // pred_check
          %p148 = pneg %p41
        $region30: #{tpu_custom_call.1} parent=27 // pred_check_branch
          %150 = sbr.rel (%p148) target = $region32
        $region31: #{tpu_custom_call.1} parent=27 // pred_region
          %151 = dma.done %s144, 512
        $region32: #{tpu_custom_call.1} parent=27 // pred_fallthru
          _
        // Predicated region
        $region33: #{tpu_custom_call.1} parent=27 // pred_check
          %p152 = pneg %p62
        $region34: #{tpu_custom_call.1} parent=27 // pred_check_branch
          %154 = sbr.rel (%p152) target = $region36
        $region35: #{tpu_custom_call.1} parent=27 // pred_region
          %155 = dma.done [#allocation9], 6144
        $region36: #{tpu_custom_call.1} parent=27 // pred_fallthru
          _
        %s156 = sand.u32 %s28, 1
        %s157 = scalar_lea.sflag [#allocation6], %s156
        %s158 = sand.u32 %s28, 1
        %s159 = smul.addr %s158, 32
        %s160 = scalar_lea.vmem [#allocation5], %s159
        %p161 = pneg %p41
        %p162 = pneg %p38
        %p163 = pneg %p62
        %p164 = pneg %p59
        %p165 = pneg %p83
        %p166 = pneg %p80
        %p167 = scmp.lt.s32.totalorder %s20, 0
        %s168 = ssub.s32 0, %s20
        %s169 = scalar_select %p167, %s168, %s20
        %s170 = sand.u32 %s169, 1
        %s171 = ssub.s32 0, %s170
        %s172 = scalar_select %p167, %s171, %s170
        %p173 = scmp.ne.s32.totalorder %s172, 0
        %p174 = scmp.lt.s32.totalorder %s172, 0
        %p175 = pnand %p174, %p173
        %p176 = pneg %p175
        %s177 = sadd.s32 %s172, 2
        %s178 = scalar_select %p176, %s177, %s172
        %p179 = scmp.eq.s32.totalorder %s20, 0
        // Predicated region
        $region37: #{tpu_custom_call.1} parent=27 // pred_check
          %p180 = pneg %p179
        $region38: #{tpu_custom_call.1} parent=27 // pred_check_branch
          %182 = sbr.rel (%p180) target = $region40
        $region39: #{tpu_custom_call.1} parent=27 // pred_region
          %s183 = smul.u32 %s20, 32
          %s184 = ssub.s32 %s183, 5
          %p185 = scmp.gt.s32.totalorder %s184, 0
          %s186 = scalar_select %p185, %s184, 0
          %p187 = scmp.lt.s32.totalorder %s186, 38
          %s188 = scalar_select %p187, %s186, 38
          %s189 = smul.addr %s188, 16
          %s190 = scalar_lea.hbm %s0, %s189
          %s191 = smul.u32 %s178, 144
          %s192 = scalar_lea.vmem [#allocation2], %s191
          %s193 = scalar_lea.sflag [#allocation4], %s178
          %s195 = sshll.u32 %s192, 4
          %s196 = int_to_ptr.vmem [resolvable:$true] %s195
          %198 = dma.hbm_to_vmem [thread:$0]  %s190, 2016, %s196, %s193, 1280, 768, 42
          %s199 = smul.addr %s188, 16
          %s200 = scalar_lea.hbm %s1, %s199
          %s201 = smul.u32 %s178, 432
          %s202 = scalar_lea.vmem [#allocation3], %s201
          %s203 = sadd.s32 %s178, 2
          %s204 = scalar_lea.sflag [#allocation4], %s203
          %s206 = sshll.u32 %s202, 4
          %s207 = int_to_ptr.vmem [resolvable:$true] %s206
          %209 = dma.hbm_to_vmem [thread:$0]  %s200, 6048, %s207, %s204, 1280, 768, 42
        $region40: #{tpu_custom_call.1} parent=27 // pred_fallthru
          _
        %s210 = smul.u32 %s20, 32
        %s211 = scalar_lea.sflag [#allocation4], %s178
        %s212 = smul.u32 3, 42
        %s213 = smul.u32 %s212, 1
        %s214 = sshll.u32 %s213, 4
        %215 = dma.done %s211, %s214
        %s216 = sadd.s32 %s178, 2
        %s217 = scalar_lea.sflag [#allocation4], %s216
        %s218 = smul.u32 9, 42
        %s219 = smul.u32 %s218, 1
        %s220 = sshll.u32 %s219, 4
        %221 = dma.done %s217, %s220
        %s222 = sadd.s32 %s20, 1
        %p223 = scmp.lt.s32.totalorder %s222, 3
        // Predicated region
        $region41: #{tpu_custom_call.1} parent=27 // pred_check
          %p224 = pneg %p223
        $region42: #{tpu_custom_call.1} parent=27 // pred_check_branch
          %226 = sbr.rel (%p224) target = $region44
        $region43: #{tpu_custom_call.1} parent=27 // pred_region
          %s227 = ssub.s32 1, %s178
          %s228 = smul.u32 %s222, 32
          %s229 = ssub.s32 %s228, 5
          %p230 = scmp.gt.s32.totalorder %s229, 0
          %s231 = scalar_select %p230, %s229, 0
          %p232 = scmp.lt.s32.totalorder %s231, 38
          %s233 = scalar_select %p232, %s231, 38
          %s234 = smul.addr %s233, 16
          %s235 = scalar_lea.hbm %s0, %s234
          %s236 = smul.u32 %s227, 144
          %s237 = scalar_lea.vmem [#allocation2], %s236
          %s238 = scalar_lea.sflag [#allocation4], %s227
          %s240 = sshll.u32 %s237, 4
          %s241 = int_to_ptr.vmem [resolvable:$true] %s240
          %243 = dma.hbm_to_vmem [thread:$0]  %s235, 2016, %s241, %s238, 1280, 768, 42
          %s244 = smul.addr %s233, 16
          %s245 = scalar_lea.hbm %s1, %s244
          %s246 = smul.u32 %s227, 432
          %s247 = scalar_lea.vmem [#allocation3], %s246
          %s248 = sadd.s32 %s227, 2
          %s249 = scalar_lea.sflag [#allocation4], %s248
          %s251 = sshll.u32 %s247, 4
          %s252 = int_to_ptr.vmem [resolvable:$true] %s251
          %254 = dma.hbm_to_vmem [thread:$0]  %s245, 6048, %s252, %s249, 1280, 768, 42
        $region44: #{tpu_custom_call.1} parent=27 // pred_fallthru
          _
        %v255 = vld [vmem:[%s147] sm:$0xff]
        %v256 = vld [vmem:[%s147 + $0x8] sm:$0xff]
        %v257 = vld [vmem:[%s147 + $0x10] sm:$0xff]
        %v258 = vld [vmem:[%s147 + $0x18] sm:$0xff]
        %s259 = scalar_lea.vmem [#allocation8], 128
        %v260 = vld [vmem:[%s259] sm:$0xff]
        %v261 = vld [vmem:[%s259 + $0x8] sm:$0xff]
        %v262 = vld [vmem:[%s259 + $0x10] sm:$0xff]
        %v263 = vld [vmem:[%s259 + $0x18] sm:$0xff]
        %v264 = vld [vmem:[%s259 + $0x20] sm:$0xff]
        %v265 = vld [vmem:[%s259 + $0x28] sm:$0xff]
        %v266 = vld [vmem:[%s259 + $0x30] sm:$0xff]
        %v267 = vld [vmem:[%s259 + $0x38] sm:$0xff]
        %v268 = vld [vmem:[%s259 + $0x40] sm:$0xff]
        %v269 = vld [vmem:[%s259 + $0x48] sm:$0xff]
        %v270 = vld [vmem:[%s259 + $0x50] sm:$0xff]
        %v271 = vld [vmem:[%s259 + $0x58] sm:$0xff]
        %v272 = vld [vmem:[%s259 + $0x60] sm:$0xff]
        %v273 = vld [vmem:[%s259 + $0x68] sm:$0xff]
        %v274 = vld [vmem:[%s259 + $0x70] sm:$0xff]
        %v275 = vld [vmem:[%s259 + $0x78] sm:$0xff]
        %s276 = smul.u32 %s178, 144
        %s277 = scalar_lea.vmem [#allocation2], %s276
        %v278 = vld [vmem:[%s277] sm:$0xff]
        %v279 = vld [vmem:[%s277 + $0x8] sm:$0xff]
        %v280 = vld [vmem:[%s277 + $0x10] sm:$0xff]
        %v281 = vld [vmem:[%s277 + $0x18] sm:$0xff]
        %v282 = vld [vmem:[%s277 + $0x20] sm:$0xff]
        %v283 = vld [vmem:[%s277 + $0x28] sm:$0x3]
        %v284 = vmul.f32 %v278, %v278
        %v285 = vmul.f32 %v279, %v279
        %v286 = vmul.f32 %v280, %v280
        %v287 = vmul.f32 %v281, %v281
        %v288 = vmul.f32 %v282, %v282
        %v289 = vmul.f32 %v283, %v283
        %s290 = sadd.s32 48, %s276
        %s291 = scalar_lea.vmem [#allocation2], %s290
        %v292 = vld [vmem:[%s291] sm:$0xff]
        %v293 = vld [vmem:[%s291 + $0x8] sm:$0xff]
        %v294 = vld [vmem:[%s291 + $0x10] sm:$0xff]
        %v295 = vld [vmem:[%s291 + $0x18] sm:$0xff]
        %v296 = vld [vmem:[%s291 + $0x20] sm:$0xff]
        %v297 = vld [vmem:[%s291 + $0x28] sm:$0x3]
        %v298 = vadd.f32 %v278, %v292
        %v299 = vadd.f32 %v279, %v293
        %v300 = vadd.f32 %v280, %v294
        %v301 = vadd.f32 %v281, %v295
        %v302 = vadd.f32 %v282, %v296
        %v303 = vadd.f32 %v283, %v297
        %v304 = vmul.f32 %v292, %v292
        %v305 = vmul.f32 %v293, %v293
        %v306 = vmul.f32 %v294, %v294
        %v307 = vmul.f32 %v295, %v295
        %v308 = vmul.f32 %v296, %v296
        %v309 = vmul.f32 %v297, %v297
        %v310 = vadd.f32 %v284, %v304
        %v311 = vadd.f32 %v285, %v305
        %v312 = vadd.f32 %v286, %v306
        %v313 = vadd.f32 %v287, %v307
        %v314 = vadd.f32 %v288, %v308
        %v315 = vadd.f32 %v289, %v309
        %s316 = sadd.s32 96, %s276
        %s317 = scalar_lea.vmem [#allocation2], %s316
        %v318 = vld [vmem:[%s317] sm:$0xff]
        %v319 = vld [vmem:[%s317 + $0x8] sm:$0xff]
        %v320 = vld [vmem:[%s317 + $0x10] sm:$0xff]
        %v321 = vld [vmem:[%s317 + $0x18] sm:$0xff]
        %v322 = vld [vmem:[%s317 + $0x20] sm:$0xff]
        %v323 = vld [vmem:[%s317 + $0x28] sm:$0x3]
        %v324 = vadd.f32 %v298, %v318
        %v325 = vadd.f32 %v299, %v319
        %v326 = vadd.f32 %v300, %v320
        %v327 = vadd.f32 %v301, %v321
        %v328 = vadd.f32 %v302, %v322
        %v329 = vadd.f32 %v303, %v323
        %v330 = vmul.f32 %v318, %v318
        %v331 = vmul.f32 %v319, %v319
        %v332 = vmul.f32 %v320, %v320
        %v333 = vmul.f32 %v321, %v321
        %v334 = vmul.f32 %v322, %v322
        %v335 = vmul.f32 %v323, %v323
        %v336 = vadd.f32 %v310, %v330
        %v337 = vadd.f32 %v311, %v331
        %v338 = vadd.f32 %v312, %v332
        %v339 = vadd.f32 %v313, %v333
        %v340 = vadd.f32 %v314, %v334
        %v341 = vadd.f32 %v315, %v335
        %v342 = vmul.f32 %v324, 0.33333334
        %v343 = vmul.f32 %v325, 0.33333334
        %v344 = vmul.f32 %v326, 0.33333334
        %v345 = vmul.f32 %v327, 0.33333334
        %v346 = vmul.f32 %v328, 0.33333334
        %v347 = vmul.f32 %v329, 0.33333334
        %v348 = vmul.f32 %v336, 0.33333334
        %v349 = vmul.f32 %v337, 0.33333334
        %v350 = vmul.f32 %v338, 0.33333334
        %v351 = vmul.f32 %v339, 0.33333334
        %v352 = vmul.f32 %v340, 0.33333334
        %v353 = vmul.f32 %v341, 0.33333334
        %vm354 = vcmask 343040
        %v356 = vsel %vm354, %v255, 0
        %v359 = vsel %vm354, %v256, 0
        %v362 = vsel %vm354, %v257, 0
        %v365 = vsel %vm354, %v258, 0
        %vm367 = vcmask 1041408
        %v369 = vsel %vm367, %v347, 0
        %371 = vmatprep.subr.mxu0 0.0
        %372 = vmatpush1.msra.mxu0 %v342
        %373 = vmatprep.subr.mxu0 0.0
        %374 = vmatpush1.msra.mxu0 %v343
        %375 = vmatprep.subr.mxu0 0.0
        %376 = vmatpush1.msra.mxu0 %v344
        %377 = vmatprep.subr.mxu0 0.0
        %378 = vmatpush1.msra.mxu0 %v345
        %379 = vmatprep.subr.mxu0 0.0
        %380 = vmatpush1.msra.mxu0 %v346
        %381 = vmatprep.subr.mxu0 0.0
        %382 = vmatpush1.msra.mxu0 %v369
        %383 = vmatprep.subr.mxu0 0.0
        %384 = vmatpush1.msra.mxu0 0.0
        %385 = vmatprep.subr.mxu0 0.0
        %386 = vmatpush1.msra.mxu0 0.0
        %387 = vmatprep.subr.mxu0 0.0
        %388 = vmatpush1.msra.mxu0 0.0
        %389 = vmatprep.subr.mxu0 0.0
        %390 = vmatpush1.msra.mxu0 0.0
        %391 = vmatprep.subr.mxu0 0.0
        %392 = vmatpush1.msra.mxu0 0.0
        %393 = vmatprep.subr.mxu0 0.0
        %394 = vmatpush1.msra.mxu0 0.0
        %395 = vmatprep.subr.mxu0 0.0
        %396 = vmatpush1.msra.mxu0 0.0
        %397 = vmatprep.subr.mxu0 0.0
        %398 = vmatpush1.msra.mxu0 0.0
        %399 = vmatprep.subr.mxu0 0.0
        %400 = vmatpush1.msra.mxu0 0.0
        %401 = vmatprep.subr.mxu0 0.0
        %402 = vmatpush1.msra.mxu0 0.0
        %403 = vmatprep.subr.mxu0 0.0
        %404 = vmatpush1.msra.mxu0 0.0
        %405 = vmatprep.subr.mxu0 0.0
        %406 = vmatpush1.msra.mxu0 0.0
        %407 = vmatprep.subr.mxu0 0.0
        %408 = vmatpush1.msra.mxu0 0.0
        %409 = vmatprep.subr.mxu0 0.0
        %410 = vmatpush1.msra.mxu0 0.0
        %411 = vmatprep.subr.mxu0 0.0
        %412 = vmatpush1.msra.mxu0 0.0
        %413 = vmatprep.subr.mxu0 0.0
        %414 = vmatpush1.msra.mxu0 0.0
        %415 = vmatprep.subr.mxu0 0.0
        %416 = vmatpush1.msra.mxu0 0.0
        %417 = vmatprep.subr.mxu0 0.0
        %418 = vmatpush1.msra.mxu0 0.0
        %419 = vmatprep.subr.mxu0 0.0
        %420 = vmatpush1.msra.mxu0 0.0
        %421 = vmatprep.subr.mxu0 0.0
        %422 = vmatpush1.msra.mxu0 0.0
        %423 = vmatprep.subr.mxu0 0.0
        %424 = vmatpush1.msra.mxu0 0.0
        %425 = vmatprep.subr.mxu0 0.0
        %426 = vmatpush1.msra.mxu0 0.0
        %427 = vmatprep.subr.mxu0 0.0
        %428 = vmatpush1.msra.mxu0 0.0
        %429 = vmatprep.subr.mxu0 0.0
        %430 = vmatpush1.msra.mxu0 0.0
        %431 = vmatprep.subr.mxu0 0.0
        %432 = vmatpush1.msra.mxu0 0.0
        %433 = vmatprep.subr.mxu0 0.0
        %434 = vmatpush1.msra.mxu0 0.0
        %435 = vmatprep.mubr.f32.mxu0 0.0
        %436 = vmatmul.mubr.f32.gmra.mrb[0].mxu0 %v356
        %v437 = vpop.f32.mrb[0].mxu0
        %v438 = vadd.f32 0.0, %v437
        %v439 = vpop.f32.mrb[0].mxu0
        %440 = vmatprep.mubr.f32.mxu0 0.0
        %441 = vmatmul.mubr.f32.gmra.mrb[0].mxu0 %v359
        %v442 = vpop.f32.mrb[0].mxu0
        %v443 = vadd.f32 0.0, %v442
        %v444 = vpop.f32.mrb[0].mxu0
        %445 = vmatprep.mubr.f32.mxu0 0.0
        %446 = vmatmul.mubr.f32.gmra.mrb[0].mxu0 %v362
        %v447 = vpop.f32.mrb[0].mxu0
        %v448 = vadd.f32 0.0, %v447
        %v449 = vpop.f32.mrb[0].mxu0
        %450 = vmatprep.mubr.f32.mxu0 0.0
        %451 = vmatmul.mubr.f32.gmra.mrb[0].mxu0 %v365
        %v452 = vpop.f32.mrb[0].mxu0
        %v453 = vadd.f32 0.0, %v452
        %v454 = vpop.f32.mrb[0].mxu0
        %455 = vdwg.mxu0
        %v457 = vsel %vm367, %v353, 0
        %459 = vmatprep.subr.mxu0 0.0
        %460 = vmatpush1.msra.mxu0 %v348
        %461 = vmatprep.subr.mxu0 0.0
        %462 = vmatpush1.msra.mxu0 %v349
        %463 = vmatprep.subr.mxu0 0.0
        %464 = vmatpush1.msra.mxu0 %v350
        %465 = vmatprep.subr.mxu0 0.0
        %466 = vmatpush1.msra.mxu0 %v351
        %467 = vmatprep.subr.mxu0 0.0
        %468 = vmatpush1.msra.mxu0 %v352
        %469 = vmatprep.subr.mxu0 0.0
        %470 = vmatpush1.msra.mxu0 %v457
        %471 = vmatprep.subr.mxu0 0.0
        %472 = vmatpush1.msra.mxu0 0.0
        %473 = vmatprep.subr.mxu0 0.0
        %474 = vmatpush1.msra.mxu0 0.0
        %475 = vmatprep.subr.mxu0 0.0
        %476 = vmatpush1.msra.mxu0 0.0
        %477 = vmatprep.subr.mxu0 0.0
        %478 = vmatpush1.msra.mxu0 0.0
        %479 = vmatprep.subr.mxu0 0.0
        %480 = vmatpush1.msra.mxu0 0.0
        %481 = vmatprep.subr.mxu0 0.0
        %482 = vmatpush1.msra.mxu0 0.0
        %483 = vmatprep.subr.mxu0 0.0
        %484 = vmatpush1.msra.mxu0 0.0
        %485 = vmatprep.subr.mxu0 0.0
        %486 = vmatpush1.msra.mxu0 0.0
        %487 = vmatprep.subr.mxu0 0.0
        %488 = vmatpush1.msra.mxu0 0.0
        %489 = vmatprep.subr.mxu0 0.0
        %490 = vmatpush1.msra.mxu0 0.0
        %491 = vmatprep.subr.mxu0 0.0
        %492 = vmatpush1.msra.mxu0 0.0
        %493 = vmatprep.subr.mxu0 0.0
        %494 = vmatpush1.msra.mxu0 0.0
        %495 = vmatprep.subr.mxu0 0.0
        %496 = vmatpush1.msra.mxu0 0.0
        %497 = vmatprep.subr.mxu0 0.0
        %498 = vmatpush1.msra.mxu0 0.0
        %499 = vmatprep.subr.mxu0 0.0
        %500 = vmatpush1.msra.mxu0 0.0
        %501 = vmatprep.subr.mxu0 0.0
        %502 = vmatpush1.msra.mxu0 0.0
        %503 = vmatprep.subr.mxu0 0.0
        %504 = vmatpush1.msra.mxu0 0.0
        %505 = vmatprep.subr.mxu0 0.0
        %506 = vmatpush1.msra.mxu0 0.0
        %507 = vmatprep.subr.mxu0 0.0
        %508 = vmatpush1.msra.mxu0 0.0
        %509 = vmatprep.subr.mxu0 0.0
        %510 = vmatpush1.msra.mxu0 0.0
        %511 = vmatprep.subr.mxu0 0.0
        %512 = vmatpush1.msra.mxu0 0.0
        %513 = vmatprep.subr.mxu0 0.0
        %514 = vmatpush1.msra.mxu0 0.0
        %515 = vmatprep.subr.mxu0 0.0
        %516 = vmatpush1.msra.mxu0 0.0
        %517 = vmatprep.subr.mxu0 0.0
        %518 = vmatpush1.msra.mxu0 0.0
        %519 = vmatprep.subr.mxu0 0.0
        %520 = vmatpush1.msra.mxu0 0.0
        %521 = vmatprep.subr.mxu0 0.0
        %522 = vmatpush1.msra.mxu0 0.0
        %523 = vmatprep.mubr.f32.mxu0 0.0
        %524 = vmatmul.mubr.f32.gmra.mrb[0].mxu0 %v356
        %v525 = vpop.f32.mrb[0].mxu0
        %v526 = vadd.f32 0.0, %v525
        %v527 = vpop.f32.mrb[0].mxu0
        %528 = vmatprep.mubr.f32.mxu0 0.0
        %529 = vmatmul.mubr.f32.gmra.mrb[0].mxu0 %v359
        %v530 = vpop.f32.mrb[0].mxu0
        %v531 = vadd.f32 0.0, %v530
        %v532 = vpop.f32.mrb[0].mxu0
        %533 = vmatprep.mubr.f32.mxu0 0.0
        %534 = vmatmul.mubr.f32.gmra.mrb[0].mxu0 %v362
        %v535 = vpop.f32.mrb[0].mxu0
        %v536 = vadd.f32 0.0, %v535
        %v537 = vpop.f32.mrb[0].mxu0
        %538 = vmatprep.mubr.f32.mxu0 0.0
        %539 = vmatmul.mubr.f32.gmra.mrb[0].mxu0 %v365
        %v540 = vpop.f32.mrb[0].mxu0
        %v541 = vadd.f32 0.0, %v540
        %v542 = vpop.f32.mrb[0].mxu0
        %543 = vdwg.mxu0
        %544 = vmatprep.subr.mxu0 0.0
        %545 = vmatpush1.msra.mxu0 %v260
        %546 = vmatprep.subr.mxu0 0.0
        %547 = vmatpush1.msra.mxu0 %v261
        %548 = vmatprep.subr.mxu0 0.0
        %549 = vmatpush1.msra.mxu0 %v262
        %550 = vmatprep.subr.mxu0 0.0
        %551 = vmatpush1.msra.mxu0 %v263
        %552 = vmatprep.subr.mxu0 0.0
        %553 = vmatpush1.msra.mxu0 %v264
        %554 = vmatprep.subr.mxu0 0.0
        %555 = vmatpush1.msra.mxu0 %v265
        %556 = vmatprep.subr.mxu0 0.0
        %557 = vmatpush1.msra.mxu0 %v266
        %558 = vmatprep.subr.mxu0 0.0
        %559 = vmatpush1.msra.mxu0 %v267
        %560 = vmatprep.subr.mxu0 0.0
        %561 = vmatpush1.msra.mxu0 %v268
        %562 = vmatprep.subr.mxu0 0.0
        %563 = vmatpush1.msra.mxu0 %v269
        %564 = vmatprep.subr.mxu0 0.0
        %565 = vmatpush1.msra.mxu0 %v270
        %566 = vmatprep.subr.mxu0 0.0
        %567 = vmatpush1.msra.mxu0 %v271
        %568 = vmatprep.subr.mxu0 0.0
        %569 = vmatpush1.msra.mxu0 %v272
        %570 = vmatprep.subr.mxu0 0.0
        %571 = vmatpush1.msra.mxu0 %v273
        %572 = vmatprep.subr.mxu0 0.0
        %573 = vmatpush1.msra.mxu0 %v274
        %574 = vmatprep.subr.mxu0 0.0
        %575 = vmatpush1.msra.mxu0 %v275
        %576 = vmatprep.subr.mxu0 0.0
        %577 = vmatpush1.msra.mxu0 0.0
        %578 = vmatprep.subr.mxu0 0.0
        %579 = vmatpush1.msra.mxu0 0.0
        %580 = vmatprep.subr.mxu0 0.0
        %581 = vmatpush1.msra.mxu0 0.0
        %582 = vmatprep.subr.mxu0 0.0
        %583 = vmatpush1.msra.mxu0 0.0
        %584 = vmatprep.subr.mxu0 0.0
        %585 = vmatpush1.msra.mxu0 0.0
        %586 = vmatprep.subr.mxu0 0.0
        %587 = vmatpush1.msra.mxu0 0.0
        %588 = vmatprep.subr.mxu0 0.0
        %589 = vmatpush1.msra.mxu0 0.0
        %590 = vmatprep.subr.mxu0 0.0
        %591 = vmatpush1.msra.mxu0 0.0
        %592 = vmatprep.subr.mxu0 0.0
        %593 = vmatpush1.msra.mxu0 0.0
        %594 = vmatprep.subr.mxu0 0.0
        %595 = vmatpush1.msra.mxu0 0.0
        %596 = vmatprep.subr.mxu0 0.0
        %597 = vmatpush1.msra.mxu0 0.0
        %598 = vmatprep.subr.mxu0 0.0
        %599 = vmatpush1.msra.mxu0 0.0
        %600 = vmatprep.subr.mxu0 0.0
        %601 = vmatpush1.msra.mxu0 0.0
        %602 = vmatprep.subr.mxu0 0.0
        %603 = vmatpush1.msra.mxu0 0.0
        %604 = vmatprep.subr.mxu0 0.0
        %605 = vmatpush1.msra.mxu0 0.0
        %606 = vmatprep.subr.mxu0 0.0
        %607 = vmatpush1.msra.mxu0 0.0
        %608 = vmatprep.mubr.f32.mxu0 0.0
        %609 = vmatmul.mubr.f32.gmra.mrb[0].mxu0 %v438
        %v610 = vpop.f32.mrb[0].mxu0
        %v611 = vadd.f32 0.0, %v610
        %v612 = vpop.f32.mrb[0].mxu0
        %613 = vmatprep.mubr.f32.mxu0 0.0
        %614 = vmatmul.mubr.f32.gmra.mrb[0].mxu0 %v443
        %v615 = vpop.f32.mrb[0].mxu0
        %v616 = vadd.f32 0.0, %v615
        %v617 = vpop.f32.mrb[0].mxu0
        %618 = vmatprep.mubr.f32.mxu0 0.0
        %619 = vmatmul.mubr.f32.gmra.mrb[0].mxu0 %v448
        %v620 = vpop.f32.mrb[0].mxu0
        %v621 = vadd.f32 0.0, %v620
        %v622 = vpop.f32.mrb[0].mxu0
        %623 = vmatprep.mubr.f32.mxu0 0.0
        %624 = vmatmul.mubr.f32.gmra.mrb[0].mxu0 %v453
        %v625 = vpop.f32.mrb[0].mxu0
        %v626 = vadd.f32 0.0, %v625
        %v627 = vpop.f32.mrb[0].mxu0
        %628 = vmatprep.mubr.f32.mxu0 0.0
        %629 = vmatmul.mubr.f32.gmra.mrb[0].mxu0 %v526
        %v630 = vpop.f32.mrb[0].mxu0
        %v631 = vadd.f32 0.0, %v630
        %v632 = vpop.f32.mrb[0].mxu0
        %633 = vmatprep.mubr.f32.mxu0 0.0
        %634 = vmatmul.mubr.f32.gmra.mrb[0].mxu0 %v531
        %v635 = vpop.f32.mrb[0].mxu0
        %v636 = vadd.f32 0.0, %v635
        %v637 = vpop.f32.mrb[0].mxu0
        %638 = vmatprep.mubr.f32.mxu0 0.0
        %639 = vmatmul.mubr.f32.gmra.mrb[0].mxu0 %v536
        %v640 = vpop.f32.mrb[0].mxu0
        %v641 = vadd.f32 0.0, %v640
        %v642 = vpop.f32.mrb[0].mxu0
        %643 = vmatprep.mubr.f32.mxu0 0.0
        %644 = vmatmul.mubr.f32.gmra.mrb[0].mxu0 %v541
        %v645 = vpop.f32.mrb[0].mxu0
        %v646 = vadd.f32 0.0, %v645
        %v647 = vpop.f32.mrb[0].mxu0
        %648 = vdwg.mxu0
        %v649 = vmul.f32 %v611, %v611
        %v650 = vmul.f32 %v616, %v616
        %v651 = vmul.f32 %v621, %v621
        %v652 = vmul.f32 %v626, %v626
        %v653 = vsub.f32 %v631, %v649
        %v654 = vsub.f32 %v636, %v650
        %v655 = vsub.f32 %v641, %v651
        %v656 = vsub.f32 %v646, %v652
        %s657 = smul.u32 %s178, 432
        %s658 = scalar_lea.vmem [#allocation3], %s657
        %v659 = vld [vmem:[%s658] sm:$0xff]
        %v660 = vld [vmem:[%s658 + $0x8] sm:$0xff]
        %v661 = vld [vmem:[%s658 + $0x10] sm:$0xff]
        %v662 = vld [vmem:[%s658 + $0x18] sm:$0xff]
        %v663 = vld [vmem:[%s658 + $0x20] sm:$0xff]
        %v664 = vld [vmem:[%s658 + $0x28] sm:$0x3]
        %v665 = vmul.f32 %v659, %v659
        %v666 = vmul.f32 %v660, %v660
        %v667 = vmul.f32 %v661, %v661
        %v668 = vmul.f32 %v662, %v662
        %v669 = vmul.f32 %v663, %v663
        %v670 = vmul.f32 %v664, %v664
        %v671 = vmul.f32 %v278, %v659
        %v672 = vmul.f32 %v279, %v660
        %v673 = vmul.f32 %v280, %v661
        %v674 = vmul.f32 %v281, %v662
        %v675 = vmul.f32 %v282, %v663
        %v676 = vmul.f32 %v283, %v664
        %s677 = sadd.s32 48, %s657
        %s678 = scalar_lea.vmem [#allocation3], %s677
        %v679 = vld [vmem:[%s678] sm:$0xff]
        %v680 = vld [vmem:[%s678 + $0x8] sm:$0xff]
        %v681 = vld [vmem:[%s678 + $0x10] sm:$0xff]
        %v682 = vld [vmem:[%s678 + $0x18] sm:$0xff]
        %v683 = vld [vmem:[%s678 + $0x20] sm:$0xff]
        %v684 = vld [vmem:[%s678 + $0x28] sm:$0x3]
        %v685 = vadd.f32 %v659, %v679
        %v686 = vadd.f32 %v660, %v680
        %v687 = vadd.f32 %v661, %v681
        %v688 = vadd.f32 %v662, %v682
        %v689 = vadd.f32 %v663, %v683
        %v690 = vadd.f32 %v664, %v684
        %v691 = vmul.f32 %v679, %v679
        %v692 = vmul.f32 %v680, %v680
        %v693 = vmul.f32 %v681, %v681
        %v694 = vmul.f32 %v682, %v682
        %v695 = vmul.f32 %v683, %v683
        %v696 = vmul.f32 %v684, %v684
        %v697 = vadd.f32 %v665, %v691
        %v698 = vadd.f32 %v666, %v692
        %v699 = vadd.f32 %v667, %v693
        %v700 = vadd.f32 %v668, %v694
        %v701 = vadd.f32 %v669, %v695
        %v702 = vadd.f32 %v670, %v696
        %v703 = vmul.f32 %v292, %v679
        %v704 = vmul.f32 %v293, %v680
        %v705 = vmul.f32 %v294, %v681
        %v706 = vmul.f32 %v295, %v682
        %v707 = vmul.f32 %v296, %v683
        %v708 = vmul.f32 %v297, %v684
        %v709 = vadd.f32 %v671, %v703
        %v710 = vadd.f32 %v672, %v704
        %v711 = vadd.f32 %v673, %v705
        %v712 = vadd.f32 %v674, %v706
        %v713 = vadd.f32 %v675, %v707
        %v714 = vadd.f32 %v676, %v708
        %s715 = sadd.s32 96, %s657
        %s716 = scalar_lea.vmem [#allocation3], %s715
        %v717 = vld [vmem:[%s716] sm:$0xff]
        %v718 = vld [vmem:[%s716 + $0x8] sm:$0xff]
        %v719 = vld [vmem:[%s716 + $0x10] sm:$0xff]
        %v720 = vld [vmem:[%s716 + $0x18] sm:$0xff]
        %v721 = vld [vmem:[%s716 + $0x20] sm:$0xff]
        %v722 = vld [vmem:[%s716 + $0x28] sm:$0x3]
        %v723 = vadd.f32 %v685, %v717
        %v724 = vadd.f32 %v686, %v718
        %v725 = vadd.f32 %v687, %v719
        %v726 = vadd.f32 %v688, %v720
        %v727 = vadd.f32 %v689, %v721
        %v728 = vadd.f32 %v690, %v722
        %v729 = vmul.f32 %v717, %v717
        %v730 = vmul.f32 %v718, %v718
        %v731 = vmul.f32 %v719, %v719
        %v732 = vmul.f32 %v720, %v720
        %v733 = vmul.f32 %v721, %v721
        %v734 = vmul.f32 %v722, %v722
        %v735 = vadd.f32 %v697, %v729
        %v736 = vadd.f32 %v698, %v730
        %v737 = vadd.f32 %v699, %v731
        %v738 = vadd.f32 %v700, %v732
        %v739 = vadd.f32 %v701, %v733
        %v740 = vadd.f32 %v702, %v734
        %v741 = vmul.f32 %v318, %v717
        %v742 = vmul.f32 %v319, %v718
        %v743 = vmul.f32 %v320, %v719
        %v744 = vmul.f32 %v321, %v720
        %v745 = vmul.f32 %v322, %v721
        %v746 = vmul.f32 %v323, %v722
        %v747 = vadd.f32 %v709, %v741
        %v748 = vadd.f32 %v710, %v742
        %v749 = vadd.f32 %v711, %v743
        %v750 = vadd.f32 %v712, %v744
        %v751 = vadd.f32 %v713, %v745
        %v752 = vadd.f32 %v714, %v746
        %v753 = vmul.f32 %v723, 0.33333334
        %v754 = vmul.f32 %v724, 0.33333334
        %v755 = vmul.f32 %v725, 0.33333334
        %v756 = vmul.f32 %v726, 0.33333334
        %v757 = vmul.f32 %v727, 0.33333334
        %v758 = vmul.f32 %v728, 0.33333334
        %v759 = vmul.f32 %v735, 0.33333334
        %v760 = vmul.f32 %v736, 0.33333334
        %v761 = vmul.f32 %v737, 0.33333334
        %v762 = vmul.f32 %v738, 0.33333334
        %v763 = vmul.f32 %v739, 0.33333334
        %v764 = vmul.f32 %v740, 0.33333334
        %v765 = vmul.f32 %v747, 0.33333334
        %v766 = vmul.f32 %v748, 0.33333334
        %v767 = vmul.f32 %v749, 0.33333334
        %v768 = vmul.f32 %v750, 0.33333334
        %v769 = vmul.f32 %v751, 0.33333334
        %v770 = vmul.f32 %v752, 0.33333334
        %v772 = vsel %vm367, %v758, 0
        %774 = vmatprep.subr.mxu0 0.0
        %775 = vmatpush1.msra.mxu0 %v753
        %776 = vmatprep.subr.mxu0 0.0
        %777 = vmatpush1.msra.mxu0 %v754
        %778 = vmatprep.subr.mxu0 0.0
        %779 = vmatpush1.msra.mxu0 %v755
        %780 = vmatprep.subr.mxu0 0.0
        %781 = vmatpush1.msra.mxu0 %v756
        %782 = vmatprep.subr.mxu0 0.0
        %783 = vmatpush1.msra.mxu0 %v757
        %784 = vmatprep.subr.mxu0 0.0
        %785 = vmatpush1.msra.mxu0 %v772
        %786 = vmatprep.subr.mxu0 0.0
        %787 = vmatpush1.msra.mxu0 0.0
        %788 = vmatprep.subr.mxu0 0.0
        %789 = vmatpush1.msra.mxu0 0.0
        %790 = vmatprep.subr.mxu0 0.0
        %791 = vmatpush1.msra.mxu0 0.0
        %792 = vmatprep.subr.mxu0 0.0
        %793 = vmatpush1.msra.mxu0 0.0
        %794 = vmatprep.subr.mxu0 0.0
        %795 = vmatpush1.msra.mxu0 0.0
        %796 = vmatprep.subr.mxu0 0.0
        %797 = vmatpush1.msra.mxu0 0.0
        %798 = vmatprep.subr.mxu0 0.0
        %799 = vmatpush1.msra.mxu0 0.0
        %800 = vmatprep.subr.mxu0 0.0
        %801 = vmatpush1.msra.mxu0 0.0
        %802 = vmatprep.subr.mxu0 0.0
        %803 = vmatpush1.msra.mxu0 0.0
        %804 = vmatprep.subr.mxu0 0.0
        %805 = vmatpush1.msra.mxu0 0.0
        %806 = vmatprep.subr.mxu0 0.0
        %807 = vmatpush1.msra.mxu0 0.0
        %808 = vmatprep.subr.mxu0 0.0
        %809 = vmatpush1.msra.mxu0 0.0
        %810 = vmatprep.subr.mxu0 0.0
        %811 = vmatpush1.msra.mxu0 0.0
        %812 = vmatprep.subr.mxu0 0.0
        %813 = vmatpush1.msra.mxu0 0.0
        %814 = vmatprep.subr.mxu0 0.0
        %815 = vmatpush1.msra.mxu0 0.0
        %816 = vmatprep.subr.mxu0 0.0
        %817 = vmatpush1.msra.mxu0 0.0
        %818 = vmatprep.subr.mxu0 0.0
        %819 = vmatpush1.msra.mxu0 0.0
        %820 = vmatprep.subr.mxu0 0.0
        %821 = vmatpush1.msra.mxu0 0.0
        %822 = vmatprep.subr.mxu0 0.0
        %823 = vmatpush1.msra.mxu0 0.0
        %824 = vmatprep.subr.mxu0 0.0
        %825 = vmatpush1.msra.mxu0 0.0
        %826 = vmatprep.subr.mxu0 0.0
        %827 = vmatpush1.msra.mxu0 0.0
        %828 = vmatprep.subr.mxu0 0.0
        %829 = vmatpush1.msra.mxu0 0.0
        %830 = vmatprep.subr.mxu0 0.0
        %831 = vmatpush1.msra.mxu0 0.0
        %832 = vmatprep.subr.mxu0 0.0
        %833 = vmatpush1.msra.mxu0 0.0
        %834 = vmatprep.subr.mxu0 0.0
        %835 = vmatpush1.msra.mxu0 0.0
        %836 = vmatprep.subr.mxu0 0.0
        %837 = vmatpush1.msra.mxu0 0.0
        %838 = vmatprep.mubr.f32.mxu0 0.0
        %839 = vmatmul.mubr.f32.gmra.mrb[0].mxu0 %v356
        %v840 = vpop.f32.mrb[0].mxu0
        %v841 = vadd.f32 0.0, %v840
        %v842 = vpop.f32.mrb[0].mxu0
        %843 = vmatprep.mubr.f32.mxu0 0.0
        %844 = vmatmul.mubr.f32.gmra.mrb[0].mxu0 %v359
        %v845 = vpop.f32.mrb[0].mxu0
        %v846 = vadd.f32 0.0, %v845
        %v847 = vpop.f32.mrb[0].mxu0
        %848 = vmatprep.mubr.f32.mxu0 0.0
        %849 = vmatmul.mubr.f32.gmra.mrb[0].mxu0 %v362
        %v850 = vpop.f32.mrb[0].mxu0
        %v851 = vadd.f32 0.0, %v850
        %v852 = vpop.f32.mrb[0].mxu0
        %853 = vmatprep.mubr.f32.mxu0 0.0
        %854 = vmatmul.mubr.f32.gmra.mrb[0].mxu0 %v365
        %v855 = vpop.f32.mrb[0].mxu0
        %v856 = vadd.f32 0.0, %v855
        %v857 = vpop.f32.mrb[0].mxu0
        %858 = vdwg.mxu0
        %v860 = vsel %vm367, %v764, 0
        %862 = vmatprep.subr.mxu0 0.0
        %863 = vmatpush1.msra.mxu0 %v759
        %864 = vmatprep.subr.mxu0 0.0
        %865 = vmatpush1.msra.mxu0 %v760
        %866 = vmatprep.subr.mxu0 0.0
        %867 = vmatpush1.msra.mxu0 %v761
        %868 = vmatprep.subr.mxu0 0.0
        %869 = vmatpush1.msra.mxu0 %v762
        %870 = vmatprep.subr.mxu0 0.0
        %871 = vmatpush1.msra.mxu0 %v763
        %872 = vmatprep.subr.mxu0 0.0
        %873 = vmatpush1.msra.mxu0 %v860
        %874 = vmatprep.subr.mxu0 0.0
        %875 = vmatpush1.msra.mxu0 0.0
        %876 = vmatprep.subr.mxu0 0.0
        %877 = vmatpush1.msra.mxu0 0.0
        %878 = vmatprep.subr.mxu0 0.0
        %879 = vmatpush1.msra.mxu0 0.0
        %880 = vmatprep.subr.mxu0 0.0
        %881 = vmatpush1.msra.mxu0 0.0
        %882 = vmatprep.subr.mxu0 0.0
        %883 = vmatpush1.msra.mxu0 0.0
        %884 = vmatprep.subr.mxu0 0.0
        %885 = vmatpush1.msra.mxu0 0.0
        %886 = vmatprep.subr.mxu0 0.0
        %887 = vmatpush1.msra.mxu0 0.0
        %888 = vmatprep.subr.mxu0 0.0
        %889 = vmatpush1.msra.mxu0 0.0
        %890 = vmatprep.subr.mxu0 0.0
        %891 = vmatpush1.msra.mxu0 0.0
        %892 = vmatprep.subr.mxu0 0.0
        %893 = vmatpush1.msra.mxu0 0.0
        %894 = vmatprep.subr.mxu0 0.0
        %895 = vmatpush1.msra.mxu0 0.0
        %896 = vmatprep.subr.mxu0 0.0
        %897 = vmatpush1.msra.mxu0 0.0
        %898 = vmatprep.subr.mxu0 0.0
        %899 = vmatpush1.msra.mxu0 0.0
        %900 = vmatprep.subr.mxu0 0.0
        %901 = vmatpush1.msra.mxu0 0.0
        %902 = vmatprep.subr.mxu0 0.0
        %903 = vmatpush1.msra.mxu0 0.0
        %904 = vmatprep.subr.mxu0 0.0
        %905 = vmatpush1.msra.mxu0 0.0
        %906 = vmatprep.subr.mxu0 0.0
        %907 = vmatpush1.msra.mxu0 0.0
        %908 = vmatprep.subr.mxu0 0.0
        %909 = vmatpush1.msra.mxu0 0.0
        %910 = vmatprep.subr.mxu0 0.0
        %911 = vmatpush1.msra.mxu0 0.0
        %912 = vmatprep.subr.mxu0 0.0
        %913 = vmatpush1.msra.mxu0 0.0
        %914 = vmatprep.subr.mxu0 0.0
        %915 = vmatpush1.msra.mxu0 0.0
        %916 = vmatprep.subr.mxu0 0.0
        %917 = vmatpush1.msra.mxu0 0.0
        %918 = vmatprep.subr.mxu0 0.0
        %919 = vmatpush1.msra.mxu0 0.0
        %920 = vmatprep.subr.mxu0 0.0
        %921 = vmatpush1.msra.mxu0 0.0
        %922 = vmatprep.subr.mxu0 0.0
        %923 = vmatpush1.msra.mxu0 0.0
        %924 = vmatprep.subr.mxu0 0.0
        %925 = vmatpush1.msra.mxu0 0.0
        %926 = vmatprep.mubr.f32.mxu0 0.0
        %927 = vmatmul.mubr.f32.gmra.mrb[0].mxu0 %v356
        %v928 = vpop.f32.mrb[0].mxu0
        %v929 = vadd.f32 0.0, %v928
        %v930 = vpop.f32.mrb[0].mxu0
        %931 = vmatprep.mubr.f32.mxu0 0.0
        %932 = vmatmul.mubr.f32.gmra.mrb[0].mxu0 %v359
        %v933 = vpop.f32.mrb[0].mxu0
        %v934 = vadd.f32 0.0, %v933
        %v935 = vpop.f32.mrb[0].mxu0
        %936 = vmatprep.mubr.f32.mxu0 0.0
        %937 = vmatmul.mubr.f32.gmra.mrb[0].mxu0 %v362
        %v938 = vpop.f32.mrb[0].mxu0
        %v939 = vadd.f32 0.0, %v938
        %v940 = vpop.f32.mrb[0].mxu0
        %941 = vmatprep.mubr.f32.mxu0 0.0
        %942 = vmatmul.mubr.f32.gmra.mrb[0].mxu0 %v365
        %v943 = vpop.f32.mrb[0].mxu0
        %v944 = vadd.f32 0.0, %v943
        %v945 = vpop.f32.mrb[0].mxu0
        %946 = vdwg.mxu0
        %v948 = vsel %vm367, %v770, 0
        %950 = vmatprep.subr.mxu0 0.0
        %951 = vmatpush1.msra.mxu0 %v765
        %952 = vmatprep.subr.mxu0 0.0
        %953 = vmatpush1.msra.mxu0 %v766
        %954 = vmatprep.subr.mxu0 0.0
        %955 = vmatpush1.msra.mxu0 %v767
        %956 = vmatprep.subr.mxu0 0.0
        %957 = vmatpush1.msra.mxu0 %v768
        %958 = vmatprep.subr.mxu0 0.0
        %959 = vmatpush1.msra.mxu0 %v769
        %960 = vmatprep.subr.mxu0 0.0
        %961 = vmatpush1.msra.mxu0 %v948
        %962 = vmatprep.subr.mxu0 0.0
        %963 = vmatpush1.msra.mxu0 0.0
        %964 = vmatprep.subr.mxu0 0.0
        %965 = vmatpush1.msra.mxu0 0.0
        %966 = vmatprep.subr.mxu0 0.0
        %967 = vmatpush1.msra.mxu0 0.0
        %968 = vmatprep.subr.mxu0 0.0
        %969 = vmatpush1.msra.mxu0 0.0
        %970 = vmatprep.subr.mxu0 0.0
        %971 = vmatpush1.msra.mxu0 0.0
        %972 = vmatprep.subr.mxu0 0.0
        %973 = vmatpush1.msra.mxu0 0.0
        %974 = vmatprep.subr.mxu0 0.0
        %975 = vmatpush1.msra.mxu0 0.0
        %976 = vmatprep.subr.mxu0 0.0
        %977 = vmatpush1.msra.mxu0 0.0
        %978 = vmatprep.subr.mxu0 0.0
        %979 = vmatpush1.msra.mxu0 0.0
        %980 = vmatprep.subr.mxu0 0.0
        %981 = vmatpush1.msra.mxu0 0.0
        %982 = vmatprep.subr.mxu0 0.0
        %983 = vmatpush1.msra.mxu0 0.0
        %984 = vmatprep.subr.mxu0 0.0
        %985 = vmatpush1.msra.mxu0 0.0
        %986 = vmatprep.subr.mxu0 0.0
        %987 = vmatpush1.msra.mxu0 0.0
        %988 = vmatprep.subr.mxu0 0.0
        %989 = vmatpush1.msra.mxu0 0.0
        %990 = vmatprep.subr.mxu0 0.0
        %991 = vmatpush1.msra.mxu0 0.0
        %992 = vmatprep.subr.mxu0 0.0
        %993 = vmatpush1.msra.mxu0 0.0
        %994 = vmatprep.subr.mxu0 0.0
        %995 = vmatpush1.msra.mxu0 0.0
        %996 = vmatprep.subr.mxu0 0.0
        %997 = vmatpush1.msra.mxu0 0.0
        %998 = vmatprep.subr.mxu0 0.0
        %999 = vmatpush1.msra.mxu0 0.0
        %1000 = vmatprep.subr.mxu0 0.0
        %1001 = vmatpush1.msra.mxu0 0.0
        %1002 = vmatprep.subr.mxu0 0.0
        %1003 = vmatpush1.msra.mxu0 0.0
        %1004 = vmatprep.subr.mxu0 0.0
        %1005 = vmatpush1.msra.mxu0 0.0
        %1006 = vmatprep.subr.mxu0 0.0
        %1007 = vmatpush1.msra.mxu0 0.0
        %1008 = vmatprep.subr.mxu0 0.0
        %1009 = vmatpush1.msra.mxu0 0.0
        %1010 = vmatprep.subr.mxu0 0.0
        %1011 = vmatpush1.msra.mxu0 0.0
        %1012 = vmatprep.subr.mxu0 0.0
        %1013 = vmatpush1.msra.mxu0 0.0
        %1014 = vmatprep.mubr.f32.mxu0 0.0
        %1015 = vmatmul.mubr.f32.gmra.mrb[0].mxu0 %v356
        %v1016 = vpop.f32.mrb[0].mxu0
        %v1017 = vadd.f32 0.0, %v1016
        %v1018 = vpop.f32.mrb[0].mxu0
        %1019 = vmatprep.mubr.f32.mxu0 0.0
        %1020 = vmatmul.mubr.f32.gmra.mrb[0].mxu0 %v359
        %v1021 = vpop.f32.mrb[0].mxu0
        %v1022 = vadd.f32 0.0, %v1021
        %v1023 = vpop.f32.mrb[0].mxu0
        %1024 = vmatprep.mubr.f32.mxu0 0.0
        %1025 = vmatmul.mubr.f32.gmra.mrb[0].mxu0 %v362
        %v1026 = vpop.f32.mrb[0].mxu0
        %v1027 = vadd.f32 0.0, %v1026
        %v1028 = vpop.f32.mrb[0].mxu0
        %1029 = vmatprep.mubr.f32.mxu0 0.0
        %1030 = vmatmul.mubr.f32.gmra.mrb[0].mxu0 %v365
        %v1031 = vpop.f32.mrb[0].mxu0
        %v1032 = vadd.f32 0.0, %v1031
        %v1033 = vpop.f32.mrb[0].mxu0
        %1034 = vdwg.mxu0
        %1035 = vmatprep.subr.mxu0 0.0
        %1036 = vmatpush1.msra.mxu0 %v260
        %1037 = vmatprep.subr.mxu0 0.0
        %1038 = vmatpush1.msra.mxu0 %v261
        %1039 = vmatprep.subr.mxu0 0.0
        %1040 = vmatpush1.msra.mxu0 %v262
        %1041 = vmatprep.subr.mxu0 0.0
        %1042 = vmatpush1.msra.mxu0 %v263
        %1043 = vmatprep.subr.mxu0 0.0
        %1044 = vmatpush1.msra.mxu0 %v264
        %1045 = vmatprep.subr.mxu0 0.0
        %1046 = vmatpush1.msra.mxu0 %v265
        %1047 = vmatprep.subr.mxu0 0.0
        %1048 = vmatpush1.msra.mxu0 %v266
        %1049 = vmatprep.subr.mxu0 0.0
        %1050 = vmatpush1.msra.mxu0 %v267
        %1051 = vmatprep.subr.mxu0 0.0
        %1052 = vmatpush1.msra.mxu0 %v268
        %1053 = vmatprep.subr.mxu0 0.0
        %1054 = vmatpush1.msra.mxu0 %v269
        %1055 = vmatprep.subr.mxu0 0.0
        %1056 = vmatpush1.msra.mxu0 %v270
        %1057 = vmatprep.subr.mxu0 0.0
        %1058 = vmatpush1.msra.mxu0 %v271
        %1059 = vmatprep.subr.mxu0 0.0
        %1060 = vmatpush1.msra.mxu0 %v272
        %1061 = vmatprep.subr.mxu0 0.0
        %1062 = vmatpush1.msra.mxu0 %v273
        %1063 = vmatprep.subr.mxu0 0.0
        %1064 = vmatpush1.msra.mxu0 %v274
        %1065 = vmatprep.subr.mxu0 0.0
        %1066 = vmatpush1.msra.mxu0 %v275
        %1067 = vmatprep.subr.mxu0 0.0
        %1068 = vmatpush1.msra.mxu0 0.0
        %1069 = vmatprep.subr.mxu0 0.0
        %1070 = vmatpush1.msra.mxu0 0.0
        %1071 = vmatprep.subr.mxu0 0.0
        %1072 = vmatpush1.msra.mxu0 0.0
        %1073 = vmatprep.subr.mxu0 0.0
        %1074 = vmatpush1.msra.mxu0 0.0
        %1075 = vmatprep.subr.mxu0 0.0
        %1076 = vmatpush1.msra.mxu0 0.0
        %1077 = vmatprep.subr.mxu0 0.0
        %1078 = vmatpush1.msra.mxu0 0.0
        %1079 = vmatprep.subr.mxu0 0.0
        %1080 = vmatpush1.msra.mxu0 0.0
        %1081 = vmatprep.subr.mxu0 0.0
        %1082 = vmatpush1.msra.mxu0 0.0
        %1083 = vmatprep.subr.mxu0 0.0
        %1084 = vmatpush1.msra.mxu0 0.0
        %1085 = vmatprep.subr.mxu0 0.0
        %1086 = vmatpush1.msra.mxu0 0.0
        %1087 = vmatprep.subr.mxu0 0.0
        %1088 = vmatpush1.msra.mxu0 0.0
        %1089 = vmatprep.subr.mxu0 0.0
        %1090 = vmatpush1.msra.mxu0 0.0
        %1091 = vmatprep.subr.mxu0 0.0
        %1092 = vmatpush1.msra.mxu0 0.0
        %1093 = vmatprep.subr.mxu0 0.0
        %1094 = vmatpush1.msra.mxu0 0.0
        %1095 = vmatprep.subr.mxu0 0.0
        %1096 = vmatpush1.msra.mxu0 0.0
        %1097 = vmatprep.subr.mxu0 0.0
        %1098 = vmatpush1.msra.mxu0 0.0
        %1099 = vmatprep.mubr.f32.mxu0 0.0
        %1100 = vmatmul.mubr.f32.gmra.mrb[0].mxu0 %v841
        %v1101 = vpop.f32.mrb[0].mxu0
        %v1102 = vadd.f32 0.0, %v1101
        %v1103 = vpop.f32.mrb[0].mxu0
        %1104 = vmatprep.mubr.f32.mxu0 0.0
        %1105 = vmatmul.mubr.f32.gmra.mrb[0].mxu0 %v846
        %v1106 = vpop.f32.mrb[0].mxu0
        %v1107 = vadd.f32 0.0, %v1106
        %v1108 = vpop.f32.mrb[0].mxu0
        %1109 = vmatprep.mubr.f32.mxu0 0.0
        %1110 = vmatmul.mubr.f32.gmra.mrb[0].mxu0 %v851
        %v1111 = vpop.f32.mrb[0].mxu0
        %v1112 = vadd.f32 0.0, %v1111
        %v1113 = vpop.f32.mrb[0].mxu0
        %1114 = vmatprep.mubr.f32.mxu0 0.0
        %1115 = vmatmul.mubr.f32.gmra.mrb[0].mxu0 %v856
        %v1116 = vpop.f32.mrb[0].mxu0
        %v1117 = vadd.f32 0.0, %v1116
        %v1118 = vpop.f32.mrb[0].mxu0
        %1119 = vmatprep.mubr.f32.mxu0 0.0
        %1120 = vmatmul.mubr.f32.gmra.mrb[0].mxu0 %v929
        %v1121 = vpop.f32.mrb[0].mxu0
        %v1122 = vadd.f32 0.0, %v1121
        %v1123 = vpop.f32.mrb[0].mxu0
        %1124 = vmatprep.mubr.f32.mxu0 0.0
        %1125 = vmatmul.mubr.f32.gmra.mrb[0].mxu0 %v934
        %v1126 = vpop.f32.mrb[0].mxu0
        %v1127 = vadd.f32 0.0, %v1126
        %v1128 = vpop.f32.mrb[0].mxu0
        %1129 = vmatprep.mubr.f32.mxu0 0.0
        %1130 = vmatmul.mubr.f32.gmra.mrb[0].mxu0 %v939
        %v1131 = vpop.f32.mrb[0].mxu0
        %v1132 = vadd.f32 0.0, %v1131
        %v1133 = vpop.f32.mrb[0].mxu0
        %1134 = vmatprep.mubr.f32.mxu0 0.0
        %1135 = vmatmul.mubr.f32.gmra.mrb[0].mxu0 %v944
        %v1136 = vpop.f32.mrb[0].mxu0
        %v1137 = vadd.f32 0.0, %v1136
        %v1138 = vpop.f32.mrb[0].mxu0
        %1139 = vmatprep.mubr.f32.mxu0 0.0
        %1140 = vmatmul.mubr.f32.gmra.mrb[0].mxu0 %v1017
        %v1141 = vpop.f32.mrb[0].mxu0
        %v1142 = vadd.f32 0.0, %v1141
        %v1143 = vpop.f32.mrb[0].mxu0
        %1144 = vmatprep.mubr.f32.mxu0 0.0
        %1145 = vmatmul.mubr.f32.gmra.mrb[0].mxu0 %v1022
        %v1146 = vpop.f32.mrb[0].mxu0
        %v1147 = vadd.f32 0.0, %v1146
        %v1148 = vpop.f32.mrb[0].mxu0
        %1149 = vmatprep.mubr.f32.mxu0 0.0
        %1150 = vmatmul.mubr.f32.gmra.mrb[0].mxu0 %v1027
        %v1151 = vpop.f32.mrb[0].mxu0
        %v1152 = vadd.f32 0.0, %v1151
        %v1153 = vpop.f32.mrb[0].mxu0
        %1154 = vmatprep.mubr.f32.mxu0 0.0
        %1155 = vmatmul.mubr.f32.gmra.mrb[0].mxu0 %v1032
        %v1156 = vpop.f32.mrb[0].mxu0
        %v1157 = vadd.f32 0.0, %v1156
        %v1158 = vpop.f32.mrb[0].mxu0
        %1159 = vdwg.mxu0
        %v1160 = vmul.f32 %v1102, %v1102
        %v1161 = vmul.f32 %v1107, %v1107
        %v1162 = vmul.f32 %v1112, %v1112
        %v1163 = vmul.f32 %v1117, %v1117
        %v1164 = vsub.f32 %v1122, %v1160
        %v1165 = vsub.f32 %v1127, %v1161
        %v1166 = vsub.f32 %v1132, %v1162
        %v1167 = vsub.f32 %v1137, %v1163
        %v1168 = vmul.f32 %v611, %v1102
        %v1169 = vmul.f32 %v616, %v1107
        %v1170 = vmul.f32 %v621, %v1112
        %v1171 = vmul.f32 %v626, %v1117
        %v1172 = vsub.f32 %v1142, %v1168
        %v1173 = vsub.f32 %v1147, %v1169
        %v1174 = vsub.f32 %v1152, %v1170
        %v1175 = vsub.f32 %v1157, %v1171
        %v1176 = vmul.f32 %v1172, 2.0
        %v1177 = vmul.f32 %v1173, 2.0
        %v1178 = vmul.f32 %v1174, 2.0
        %v1179 = vmul.f32 %v1175, 2.0
        %v1180 = vadd.f32 %v1176, 0.0009
        %v1181 = vadd.f32 %v1177, 0.0009
        %v1182 = vadd.f32 %v1178, 0.0009
        %v1183 = vadd.f32 %v1179, 0.0009
        %v1184 = vadd.f32 %v653, %v1164
        %v1185 = vadd.f32 %v654, %v1165
        %v1186 = vadd.f32 %v655, %v1166
        %v1187 = vadd.f32 %v656, %v1167
        %v1188 = vadd.f32 %v1184, 0.0009
        %v1189 = vadd.f32 %v1185, 0.0009
        %v1190 = vadd.f32 %v1186, 0.0009
        %v1191 = vadd.f32 %v1187, 0.0009
        %v1192 = vrcp.pop %v1188
        %v1193 = vmul.f32 %v1180, %v1192
        %v1194 = vrcp.pop %v1189
        %v1195 = vmul.f32 %v1181, %v1194
        %v1196 = vrcp.pop %v1190
        %v1197 = vmul.f32 %v1182, %v1196
        %v1198 = vrcp.pop %v1191
        %v1199 = vmul.f32 %v1183, %v1198
        %s1200 = sadd.s32 144, %s657
        %s1201 = scalar_lea.vmem [#allocation3], %s1200
        %v1202 = vld [vmem:[%s1201] sm:$0xff]
        %v1203 = vld [vmem:[%s1201 + $0x8] sm:$0xff]
        %v1204 = vld [vmem:[%s1201 + $0x10] sm:$0xff]
        %v1205 = vld [vmem:[%s1201 + $0x18] sm:$0xff]
        %v1206 = vld [vmem:[%s1201 + $0x20] sm:$0xff]
        %v1207 = vld [vmem:[%s1201 + $0x28] sm:$0x3]
        %v1208 = vmul.f32 %v1202, %v1202
        %v1209 = vmul.f32 %v1203, %v1203
        %v1210 = vmul.f32 %v1204, %v1204
        %v1211 = vmul.f32 %v1205, %v1205
        %v1212 = vmul.f32 %v1206, %v1206
        %v1213 = vmul.f32 %v1207, %v1207
        %v1214 = vmul.f32 %v278, %v1202
        %v1215 = vmul.f32 %v279, %v1203
        %v1216 = vmul.f32 %v280, %v1204
        %v1217 = vmul.f32 %v281, %v1205
        %v1218 = vmul.f32 %v282, %v1206
        %v1219 = vmul.f32 %v283, %v1207
        %s1220 = sadd.s32 192, %s657
        %s1221 = scalar_lea.vmem [#allocation3], %s1220
        %v1222 = vld [vmem:[%s1221] sm:$0xff]
        %v1223 = vld [vmem:[%s1221 + $0x8] sm:$0xff]
        %v1224 = vld [vmem:[%s1221 + $0x10] sm:$0xff]
        %v1225 = vld [vmem:[%s1221 + $0x18] sm:$0xff]
        %v1226 = vld [vmem:[%s1221 + $0x20] sm:$0xff]
        %v1227 = vld [vmem:[%s1221 + $0x28] sm:$0x3]
        %v1228 = vadd.f32 %v1202, %v1222
        %v1229 = vadd.f32 %v1203, %v1223
        %v1230 = vadd.f32 %v1204, %v1224
        %v1231 = vadd.f32 %v1205, %v1225
        %v1232 = vadd.f32 %v1206, %v1226
        %v1233 = vadd.f32 %v1207, %v1227
        %v1234 = vmul.f32 %v1222, %v1222
        %v1235 = vmul.f32 %v1223, %v1223
        %v1236 = vmul.f32 %v1224, %v1224
        %v1237 = vmul.f32 %v1225, %v1225
        %v1238 = vmul.f32 %v1226, %v1226
        %v1239 = vmul.f32 %v1227, %v1227
        %v1240 = vadd.f32 %v1208, %v1234
        %v1241 = vadd.f32 %v1209, %v1235
        %v1242 = vadd.f32 %v1210, %v1236
        %v1243 = vadd.f32 %v1211, %v1237
        %v1244 = vadd.f32 %v1212, %v1238
        %v1245 = vadd.f32 %v1213, %v1239
        %v1246 = vmul.f32 %v292, %v1222
        %v1247 = vmul.f32 %v293, %v1223
        %v1248 = vmul.f32 %v294, %v1224
        %v1249 = vmul.f32 %v295, %v1225
        %v1250 = vmul.f32 %v296, %v1226
        %v1251 = vmul.f32 %v297, %v1227
        %v1252 = vadd.f32 %v1214, %v1246
        %v1253 = vadd.f32 %v1215, %v1247
        %v1254 = vadd.f32 %v1216, %v1248
        %v1255 = vadd.f32 %v1217, %v1249
        %v1256 = vadd.f32 %v1218, %v1250
        %v1257 = vadd.f32 %v1219, %v1251
        %s1258 = sadd.s32 240, %s657
        %s1259 = scalar_lea.vmem [#allocation3], %s1258
        %v1260 = vld [vmem:[%s1259] sm:$0xff]
        %v1261 = vld [vmem:[%s1259 + $0x8] sm:$0xff]
        %v1262 = vld [vmem:[%s1259 + $0x10] sm:$0xff]
        %v1263 = vld [vmem:[%s1259 + $0x18] sm:$0xff]
        %v1264 = vld [vmem:[%s1259 + $0x20] sm:$0xff]
        %v1265 = vld [vmem:[%s1259 + $0x28] sm:$0x3]
        %v1266 = vadd.f32 %v1228, %v1260
        %v1267 = vadd.f32 %v1229, %v1261
        %v1268 = vadd.f32 %v1230, %v1262
        %v1269 = vadd.f32 %v1231, %v1263
        %v1270 = vadd.f32 %v1232, %v1264
        %v1271 = vadd.f32 %v1233, %v1265
        %v1272 = vmul.f32 %v1260, %v1260
        %v1273 = vmul.f32 %v1261, %v1261
        %v1274 = vmul.f32 %v1262, %v1262
        %v1275 = vmul.f32 %v1263, %v1263
        %v1276 = vmul.f32 %v1264, %v1264
        %v1277 = vmul.f32 %v1265, %v1265
        %v1278 = vadd.f32 %v1240, %v1272
        %v1279 = vadd.f32 %v1241, %v1273
        %v1280 = vadd.f32 %v1242, %v1274
        %v1281 = vadd.f32 %v1243, %v1275
        %v1282 = vadd.f32 %v1244, %v1276
        %v1283 = vadd.f32 %v1245, %v1277
        %v1284 = vmul.f32 %v318, %v1260
        %v1285 = vmul.f32 %v319, %v1261
        %v1286 = vmul.f32 %v320, %v1262
        %v1287 = vmul.f32 %v321, %v1263
        %v1288 = vmul.f32 %v322, %v1264
        %v1289 = vmul.f32 %v323, %v1265
        %v1290 = vadd.f32 %v1252, %v1284
        %v1291 = vadd.f32 %v1253, %v1285
        %v1292 = vadd.f32 %v1254, %v1286
        %v1293 = vadd.f32 %v1255, %v1287
        %v1294 = vadd.f32 %v1256, %v1288
        %v1295 = vadd.f32 %v1257, %v1289
        %v1296 = vmul.f32 %v1266, 0.33333334
        %v1297 = vmul.f32 %v1267, 0.33333334
        %v1298 = vmul.f32 %v1268, 0.33333334
        %v1299 = vmul.f32 %v1269, 0.33333334
        %v1300 = vmul.f32 %v1270, 0.33333334
        %v1301 = vmul.f32 %v1271, 0.33333334
        %v1302 = vmul.f32 %v1278, 0.33333334
        %v1303 = vmul.f32 %v1279, 0.33333334
        %v1304 = vmul.f32 %v1280, 0.33333334
        %v1305 = vmul.f32 %v1281, 0.33333334
        %v1306 = vmul.f32 %v1282, 0.33333334
        %v1307 = vmul.f32 %v1283, 0.33333334
        %v1308 = vmul.f32 %v1290, 0.33333334
        %v1309 = vmul.f32 %v1291, 0.33333334
        %v1310 = vmul.f32 %v1292, 0.33333334
        %v1311 = vmul.f32 %v1293, 0.33333334
        %v1312 = vmul.f32 %v1294, 0.33333334
        %v1313 = vmul.f32 %v1295, 0.33333334
        %v1315 = vsel %vm367, %v1301, 0
        %1317 = vmatprep.subr.mxu0 0.0
        %1318 = vmatpush1.msra.mxu0 %v1296
        %1319 = vmatprep.subr.mxu0 0.0
        %1320 = vmatpush1.msra.mxu0 %v1297
        %1321 = vmatprep.subr.mxu0 0.0
        %1322 = vmatpush1.msra.mxu0 %v1298
        %1323 = vmatprep.subr.mxu0 0.0
        %1324 = vmatpush1.msra.mxu0 %v1299
        %1325 = vmatprep.subr.mxu0 0.0
        %1326 = vmatpush1.msra.mxu0 %v1300
        %1327 = vmatprep.subr.mxu0 0.0
        %1328 = vmatpush1.msra.mxu0 %v1315
        %1329 = vmatprep.subr.mxu0 0.0
        %1330 = vmatpush1.msra.mxu0 0.0
        %1331 = vmatprep.subr.mxu0 0.0
        %1332 = vmatpush1.msra.mxu0 0.0
        %1333 = vmatprep.subr.mxu0 0.0
        %1334 = vmatpush1.msra.mxu0 0.0
        %1335 = vmatprep.subr.mxu0 0.0
        %1336 = vmatpush1.msra.mxu0 0.0
        %1337 = vmatprep.subr.mxu0 0.0
        %1338 = vmatpush1.msra.mxu0 0.0
        %1339 = vmatprep.subr.mxu0 0.0
        %1340 = vmatpush1.msra.mxu0 0.0
        %1341 = vmatprep.subr.mxu0 0.0
        %1342 = vmatpush1.msra.mxu0 0.0
        %1343 = vmatprep.subr.mxu0 0.0
        %1344 = vmatpush1.msra.mxu0 0.0
        %1345 = vmatprep.subr.mxu0 0.0
        %1346 = vmatpush1.msra.mxu0 0.0
        %1347 = vmatprep.subr.mxu0 0.0
        %1348 = vmatpush1.msra.mxu0 0.0
        %1349 = vmatprep.subr.mxu0 0.0
        %1350 = vmatpush1.msra.mxu0 0.0
        %1351 = vmatprep.subr.mxu0 0.0
        %1352 = vmatpush1.msra.mxu0 0.0
        %1353 = vmatprep.subr.mxu0 0.0
        %1354 = vmatpush1.msra.mxu0 0.0
        %1355 = vmatprep.subr.mxu0 0.0
        %1356 = vmatpush1.msra.mxu0 0.0
        %1357 = vmatprep.subr.mxu0 0.0
        %1358 = vmatpush1.msra.mxu0 0.0
        %1359 = vmatprep.subr.mxu0 0.0
        %1360 = vmatpush1.msra.mxu0 0.0
        %1361 = vmatprep.subr.mxu0 0.0
        %1362 = vmatpush1.msra.mxu0 0.0
        %1363 = vmatprep.subr.mxu0 0.0
        %1364 = vmatpush1.msra.mxu0 0.0
        %1365 = vmatprep.subr.mxu0 0.0
        %1366 = vmatpush1.msra.mxu0 0.0
        %1367 = vmatprep.subr.mxu0 0.0
        %1368 = vmatpush1.msra.mxu0 0.0
        %1369 = vmatprep.subr.mxu0 0.0
        %1370 = vmatpush1.msra.mxu0 0.0
        %1371 = vmatprep.subr.mxu0 0.0
        %1372 = vmatpush1.msra.mxu0 0.0
        %1373 = vmatprep.subr.mxu0 0.0
        %1374 = vmatpush1.msra.mxu0 0.0
        %1375 = vmatprep.subr.mxu0 0.0
        %1376 = vmatpush1.msra.mxu0 0.0
        %1377 = vmatprep.subr.mxu0 0.0
        %1378 = vmatpush1.msra.mxu0 0.0
        %1379 = vmatprep.subr.mxu0 0.0
        %1380 = vmatpush1.msra.mxu0 0.0
        %1381 = vmatprep.mubr.f32.mxu0 0.0
        %1382 = vmatmul.mubr.f32.gmra.mrb[0].mxu0 %v356
        %v1383 = vpop.f32.mrb[0].mxu0
        %v1384 = vadd.f32 0.0, %v1383
        %v1385 = vpop.f32.mrb[0].mxu0
        %1386 = vmatprep.mubr.f32.mxu0 0.0
        %1387 = vmatmul.mubr.f32.gmra.mrb[0].mxu0 %v359
        %v1388 = vpop.f32.mrb[0].mxu0
        %v1389 = vadd.f32 0.0, %v1388
        %v1390 = vpop.f32.mrb[0].mxu0
        %1391 = vmatprep.mubr.f32.mxu0 0.0
        %1392 = vmatmul.mubr.f32.gmra.mrb[0].mxu0 %v362
        %v1393 = vpop.f32.mrb[0].mxu0
        %v1394 = vadd.f32 0.0, %v1393
        %v1395 = vpop.f32.mrb[0].mxu0
        %1396 = vmatprep.mubr.f32.mxu0 0.0
        %1397 = vmatmul.mubr.f32.gmra.mrb[0].mxu0 %v365
        %v1398 = vpop.f32.mrb[0].mxu0
        %v1399 = vadd.f32 0.0, %v1398
        %v1400 = vpop.f32.mrb[0].mxu0
        %1401 = vdwg.mxu0
        %v1403 = vsel %vm367, %v1307, 0
        %1405 = vmatprep.subr.mxu0 0.0
        %1406 = vmatpush1.msra.mxu0 %v1302
        %1407 = vmatprep.subr.mxu0 0.0
        %1408 = vmatpush1.msra.mxu0 %v1303
        %1409 = vmatprep.subr.mxu0 0.0
        %1410 = vmatpush1.msra.mxu0 %v1304
        %1411 = vmatprep.subr.mxu0 0.0
        %1412 = vmatpush1.msra.mxu0 %v1305
        %1413 = vmatprep.subr.mxu0 0.0
        %1414 = vmatpush1.msra.mxu0 %v1306
        %1415 = vmatprep.subr.mxu0 0.0
        %1416 = vmatpush1.msra.mxu0 %v1403
        %1417 = vmatprep.subr.mxu0 0.0
        %1418 = vmatpush1.msra.mxu0 0.0
        %1419 = vmatprep.subr.mxu0 0.0
        %1420 = vmatpush1.msra.mxu0 0.0
        %1421 = vmatprep.subr.mxu0 0.0
        %1422 = vmatpush1.msra.mxu0 0.0
        %1423 = vmatprep.subr.mxu0 0.0
        %1424 = vmatpush1.msra.mxu0 0.0
        %1425 = vmatprep.subr.mxu0 0.0
        %1426 = vmatpush1.msra.mxu0 0.0
        %1427 = vmatprep.subr.mxu0 0.0
        %1428 = vmatpush1.msra.mxu0 0.0
        %1429 = vmatprep.subr.mxu0 0.0
        %1430 = vmatpush1.msra.mxu0 0.0
        %1431 = vmatprep.subr.mxu0 0.0
        %1432 = vmatpush1.msra.mxu0 0.0
        %1433 = vmatprep.subr.mxu0 0.0
        %1434 = vmatpush1.msra.mxu0 0.0
        %1435 = vmatprep.subr.mxu0 0.0
        %1436 = vmatpush1.msra.mxu0 0.0
        %1437 = vmatprep.subr.mxu0 0.0
        %1438 = vmatpush1.msra.mxu0 0.0
        %1439 = vmatprep.subr.mxu0 0.0
        %1440 = vmatpush1.msra.mxu0 0.0
        %1441 = vmatprep.subr.mxu0 0.0
        %1442 = vmatpush1.msra.mxu0 0.0
        %1443 = vmatprep.subr.mxu0 0.0
        %1444 = vmatpush1.msra.mxu0 0.0
        %1445 = vmatprep.subr.mxu0 0.0
        %1446 = vmatpush1.msra.mxu0 0.0
        %1447 = vmatprep.subr.mxu0 0.0
        %1448 = vmatpush1.msra.mxu0 0.0
        %1449 = vmatprep.subr.mxu0 0.0
        %1450 = vmatpush1.msra.mxu0 0.0
        %1451 = vmatprep.subr.mxu0 0.0
        %1452 = vmatpush1.msra.mxu0 0.0
        %1453 = vmatprep.subr.mxu0 0.0
        %1454 = vmatpush1.msra.mxu0 0.0
        %1455 = vmatprep.subr.mxu0 0.0
        %1456 = vmatpush1.msra.mxu0 0.0
        %1457 = vmatprep.subr.mxu0 0.0
        %1458 = vmatpush1.msra.mxu0 0.0
        %1459 = vmatprep.subr.mxu0 0.0
        %1460 = vmatpush1.msra.mxu0 0.0
        %1461 = vmatprep.subr.mxu0 0.0
        %1462 = vmatpush1.msra.mxu0 0.0
        %1463 = vmatprep.subr.mxu0 0.0
        %1464 = vmatpush1.msra.mxu0 0.0
        %1465 = vmatprep.subr.mxu0 0.0
        %1466 = vmatpush1.msra.mxu0 0.0
        %1467 = vmatprep.subr.mxu0 0.0
        %1468 = vmatpush1.msra.mxu0 0.0
        %1469 = vmatprep.mubr.f32.mxu0 0.0
        %1470 = vmatmul.mubr.f32.gmra.mrb[0].mxu0 %v356
        %v1471 = vpop.f32.mrb[0].mxu0
        %v1472 = vadd.f32 0.0, %v1471
        %v1473 = vpop.f32.mrb[0].mxu0
        %1474 = vmatprep.mubr.f32.mxu0 0.0
        %1475 = vmatmul.mubr.f32.gmra.mrb[0].mxu0 %v359
        %v1476 = vpop.f32.mrb[0].mxu0
        %v1477 = vadd.f32 0.0, %v1476
        %v1478 = vpop.f32.mrb[0].mxu0
        %1479 = vmatprep.mubr.f32.mxu0 0.0
        %1480 = vmatmul.mubr.f32.gmra.mrb[0].mxu0 %v362
        %v1481 = vpop.f32.mrb[0].mxu0
        %v1482 = vadd.f32 0.0, %v1481
        %v1483 = vpop.f32.mrb[0].mxu0
        %1484 = vmatprep.mubr.f32.mxu0 0.0
        %1485 = vmatmul.mubr.f32.gmra.mrb[0].mxu0 %v365
        %v1486 = vpop.f32.mrb[0].mxu0
        %v1487 = vadd.f32 0.0, %v1486
        %v1488 = vpop.f32.mrb[0].mxu0
        %1489 = vdwg.mxu0
        %v1491 = vsel %vm367, %v1313, 0
        %1493 = vmatprep.subr.mxu0 0.0
        %1494 = vmatpush1.msra.mxu0 %v1308
        %1495 = vmatprep.subr.mxu0 0.0
        %1496 = vmatpush1.msra.mxu0 %v1309
        %1497 = vmatprep.subr.mxu0 0.0
        %1498 = vmatpush1.msra.mxu0 %v1310
        %1499 = vmatprep.subr.mxu0 0.0
        %1500 = vmatpush1.msra.mxu0 %v1311
        %1501 = vmatprep.subr.mxu0 0.0
        %1502 = vmatpush1.msra.mxu0 %v1312
        %1503 = vmatprep.subr.mxu0 0.0
        %1504 = vmatpush1.msra.mxu0 %v1491
        %1505 = vmatprep.subr.mxu0 0.0
        %1506 = vmatpush1.msra.mxu0 0.0
        %1507 = vmatprep.subr.mxu0 0.0
        %1508 = vmatpush1.msra.mxu0 0.0
        %1509 = vmatprep.subr.mxu0 0.0
        %1510 = vmatpush1.msra.mxu0 0.0
        %1511 = vmatprep.subr.mxu0 0.0
        %1512 = vmatpush1.msra.mxu0 0.0
        %1513 = vmatprep.subr.mxu0 0.0
        %1514 = vmatpush1.msra.mxu0 0.0
        %1515 = vmatprep.subr.mxu0 0.0
        %1516 = vmatpush1.msra.mxu0 0.0
        %1517 = vmatprep.subr.mxu0 0.0
        %1518 = vmatpush1.msra.mxu0 0.0
        %1519 = vmatprep.subr.mxu0 0.0
        %1520 = vmatpush1.msra.mxu0 0.0
        %1521 = vmatprep.subr.mxu0 0.0
        %1522 = vmatpush1.msra.mxu0 0.0
        %1523 = vmatprep.subr.mxu0 0.0
        %1524 = vmatpush1.msra.mxu0 0.0
        %1525 = vmatprep.subr.mxu0 0.0
        %1526 = vmatpush1.msra.mxu0 0.0
        %1527 = vmatprep.subr.mxu0 0.0
        %1528 = vmatpush1.msra.mxu0 0.0
        %1529 = vmatprep.subr.mxu0 0.0
        %1530 = vmatpush1.msra.mxu0 0.0
        %1531 = vmatprep.subr.mxu0 0.0
        %1532 = vmatpush1.msra.mxu0 0.0
        %1533 = vmatprep.subr.mxu0 0.0
        %1534 = vmatpush1.msra.mxu0 0.0
        %1535 = vmatprep.subr.mxu0 0.0
        %1536 = vmatpush1.msra.mxu0 0.0
        %1537 = vmatprep.subr.mxu0 0.0
        %1538 = vmatpush1.msra.mxu0 0.0
        %1539 = vmatprep.subr.mxu0 0.0
        %1540 = vmatpush1.msra.mxu0 0.0
        %1541 = vmatprep.subr.mxu0 0.0
        %1542 = vmatpush1.msra.mxu0 0.0
        %1543 = vmatprep.subr.mxu0 0.0
        %1544 = vmatpush1.msra.mxu0 0.0
        %1545 = vmatprep.subr.mxu0 0.0
        %1546 = vmatpush1.msra.mxu0 0.0
        %1547 = vmatprep.subr.mxu0 0.0
        %1548 = vmatpush1.msra.mxu0 0.0
        %1549 = vmatprep.subr.mxu0 0.0
        %1550 = vmatpush1.msra.mxu0 0.0
        %1551 = vmatprep.subr.mxu0 0.0
        %1552 = vmatpush1.msra.mxu0 0.0
        %1553 = vmatprep.subr.mxu0 0.0
        %1554 = vmatpush1.msra.mxu0 0.0
        %1555 = vmatprep.subr.mxu0 0.0
        %1556 = vmatpush1.msra.mxu0 0.0
        %1557 = vmatprep.mubr.f32.mxu0 0.0
        %1558 = vmatmul.mubr.f32.gmra.mrb[0].mxu0 %v356
        %v1559 = vpop.f32.mrb[0].mxu0
        %v1560 = vadd.f32 0.0, %v1559
        %v1561 = vpop.f32.mrb[0].mxu0
        %1562 = vmatprep.mubr.f32.mxu0 0.0
        %1563 = vmatmul.mubr.f32.gmra.mrb[0].mxu0 %v359
        %v1564 = vpop.f32.mrb[0].mxu0
        %v1565 = vadd.f32 0.0, %v1564
        %v1566 = vpop.f32.mrb[0].mxu0
        %1567 = vmatprep.mubr.f32.mxu0 0.0
        %1568 = vmatmul.mubr.f32.gmra.mrb[0].mxu0 %v362
        %v1569 = vpop.f32.mrb[0].mxu0
        %v1570 = vadd.f32 0.0, %v1569
        %v1571 = vpop.f32.mrb[0].mxu0
        %1572 = vmatprep.mubr.f32.mxu0 0.0
        %1573 = vmatmul.mubr.f32.gmra.mrb[0].mxu0 %v365
        %v1574 = vpop.f32.mrb[0].mxu0
        %v1575 = vadd.f32 0.0, %v1574
        %v1576 = vpop.f32.mrb[0].mxu0
        %1577 = vdwg.mxu0
        %1578 = vmatprep.subr.mxu0 0.0
        %1579 = vmatpush1.msra.mxu0 %v260
        %1580 = vmatprep.subr.mxu0 0.0
        %1581 = vmatpush1.msra.mxu0 %v261
        %1582 = vmatprep.subr.mxu0 0.0
        %1583 = vmatpush1.msra.mxu0 %v262
        %1584 = vmatprep.subr.mxu0 0.0
        %1585 = vmatpush1.msra.mxu0 %v263
        %1586 = vmatprep.subr.mxu0 0.0
        %1587 = vmatpush1.msra.mxu0 %v264
        %1588 = vmatprep.subr.mxu0 0.0
        %1589 = vmatpush1.msra.mxu0 %v265
        %1590 = vmatprep.subr.mxu0 0.0
        %1591 = vmatpush1.msra.mxu0 %v266
        %1592 = vmatprep.subr.mxu0 0.0
        %1593 = vmatpush1.msra.mxu0 %v267
        %1594 = vmatprep.subr.mxu0 0.0
        %1595 = vmatpush1.msra.mxu0 %v268
        %1596 = vmatprep.subr.mxu0 0.0
        %1597 = vmatpush1.msra.mxu0 %v269
        %1598 = vmatprep.subr.mxu0 0.0
        %1599 = vmatpush1.msra.mxu0 %v270
        %1600 = vmatprep.subr.mxu0 0.0
        %1601 = vmatpush1.msra.mxu0 %v271
        %1602 = vmatprep.subr.mxu0 0.0
        %1603 = vmatpush1.msra.mxu0 %v272
        %1604 = vmatprep.subr.mxu0 0.0
        %1605 = vmatpush1.msra.mxu0 %v273
        %1606 = vmatprep.subr.mxu0 0.0
        %1607 = vmatpush1.msra.mxu0 %v274
        %1608 = vmatprep.subr.mxu0 0.0
        %1609 = vmatpush1.msra.mxu0 %v275
        %1610 = vmatprep.subr.mxu0 0.0
        %1611 = vmatpush1.msra.mxu0 0.0
        %1612 = vmatprep.subr.mxu0 0.0
        %1613 = vmatpush1.msra.mxu0 0.0
        %1614 = vmatprep.subr.mxu0 0.0
        %1615 = vmatpush1.msra.mxu0 0.0
        %1616 = vmatprep.subr.mxu0 0.0
        %1617 = vmatpush1.msra.mxu0 0.0
        %1618 = vmatprep.subr.mxu0 0.0
        %1619 = vmatpush1.msra.mxu0 0.0
        %1620 = vmatprep.subr.mxu0 0.0
        %1621 = vmatpush1.msra.mxu0 0.0
        %1622 = vmatprep.subr.mxu0 0.0
        %1623 = vmatpush1.msra.mxu0 0.0
        %1624 = vmatprep.subr.mxu0 0.0
        %1625 = vmatpush1.msra.mxu0 0.0
        %1626 = vmatprep.subr.mxu0 0.0
        %1627 = vmatpush1.msra.mxu0 0.0
        %1628 = vmatprep.subr.mxu0 0.0
        %1629 = vmatpush1.msra.mxu0 0.0
        %1630 = vmatprep.subr.mxu0 0.0
        %1631 = vmatpush1.msra.mxu0 0.0
        %1632 = vmatprep.subr.mxu0 0.0
        %1633 = vmatpush1.msra.mxu0 0.0
        %1634 = vmatprep.subr.mxu0 0.0
        %1635 = vmatpush1.msra.mxu0 0.0
        %1636 = vmatprep.subr.mxu0 0.0
        %1637 = vmatpush1.msra.mxu0 0.0
        %1638 = vmatprep.subr.mxu0 0.0
        %1639 = vmatpush1.msra.mxu0 0.0
        %1640 = vmatprep.subr.mxu0 0.0
        %1641 = vmatpush1.msra.mxu0 0.0
        %1642 = vmatprep.mubr.f32.mxu0 0.0
        %1643 = vmatmul.mubr.f32.gmra.mrb[0].mxu0 %v1384
        %v1644 = vpop.f32.mrb[0].mxu0
        %v1645 = vadd.f32 0.0, %v1644
        %v1646 = vpop.f32.mrb[0].mxu0
        %1647 = vmatprep.mubr.f32.mxu0 0.0
        %1648 = vmatmul.mubr.f32.gmra.mrb[0].mxu0 %v1389
        %v1649 = vpop.f32.mrb[0].mxu0
        %v1650 = vadd.f32 0.0, %v1649
        %v1651 = vpop.f32.mrb[0].mxu0
        %1652 = vmatprep.mubr.f32.mxu0 0.0
        %1653 = vmatmul.mubr.f32.gmra.mrb[0].mxu0 %v1394
        %v1654 = vpop.f32.mrb[0].mxu0
        %v1655 = vadd.f32 0.0, %v1654
        %v1656 = vpop.f32.mrb[0].mxu0
        %1657 = vmatprep.mubr.f32.mxu0 0.0
        %1658 = vmatmul.mubr.f32.gmra.mrb[0].mxu0 %v1399
        %v1659 = vpop.f32.mrb[0].mxu0
        %v1660 = vadd.f32 0.0, %v1659
        %v1661 = vpop.f32.mrb[0].mxu0
        %1662 = vmatprep.mubr.f32.mxu0 0.0
        %1663 = vmatmul.mubr.f32.gmra.mrb[0].mxu0 %v1472
        %v1664 = vpop.f32.mrb[0].mxu0
        %v1665 = vadd.f32 0.0, %v1664
        %v1666 = vpop.f32.mrb[0].mxu0
        %1667 = vmatprep.mubr.f32.mxu0 0.0
        %1668 = vmatmul.mubr.f32.gmra.mrb[0].mxu0 %v1477
        %v1669 = vpop.f32.mrb[0].mxu0
        %v1670 = vadd.f32 0.0, %v1669
        %v1671 = vpop.f32.mrb[0].mxu0
        %1672 = vmatprep.mubr.f32.mxu0 0.0
        %1673 = vmatmul.mubr.f32.gmra.mrb[0].mxu0 %v1482
        %v1674 = vpop.f32.mrb[0].mxu0
        %v1675 = vadd.f32 0.0, %v1674
        %v1676 = vpop.f32.mrb[0].mxu0
        %1677 = vmatprep.mubr.f32.mxu0 0.0
        %1678 = vmatmul.mubr.f32.gmra.mrb[0].mxu0 %v1487
        %v1679 = vpop.f32.mrb[0].mxu0
        %v1680 = vadd.f32 0.0, %v1679
        %v1681 = vpop.f32.mrb[0].mxu0
        %1682 = vmatprep.mubr.f32.mxu0 0.0
        %1683 = vmatmul.mubr.f32.gmra.mrb[0].mxu0 %v1560
        %v1684 = vpop.f32.mrb[0].mxu0
        %v1685 = vadd.f32 0.0, %v1684
        %v1686 = vpop.f32.mrb[0].mxu0
        %1687 = vmatprep.mubr.f32.mxu0 0.0
        %1688 = vmatmul.mubr.f32.gmra.mrb[0].mxu0 %v1565
        %v1689 = vpop.f32.mrb[0].mxu0
        %v1690 = vadd.f32 0.0, %v1689
        %v1691 = vpop.f32.mrb[0].mxu0
        %1692 = vmatprep.mubr.f32.mxu0 0.0
        %1693 = vmatmul.mubr.f32.gmra.mrb[0].mxu0 %v1570
        %v1694 = vpop.f32.mrb[0].mxu0
        %v1695 = vadd.f32 0.0, %v1694
        %v1696 = vpop.f32.mrb[0].mxu0
        %1697 = vmatprep.mubr.f32.mxu0 0.0
        %1698 = vmatmul.mubr.f32.gmra.mrb[0].mxu0 %v1575
        %v1699 = vpop.f32.mrb[0].mxu0
        %v1700 = vadd.f32 0.0, %v1699
        %v1701 = vpop.f32.mrb[0].mxu0
        %1702 = vdwg.mxu0
        %v1703 = vmul.f32 %v1645, %v1645
        %v1704 = vmul.f32 %v1650, %v1650
        %v1705 = vmul.f32 %v1655, %v1655
        %v1706 = vmul.f32 %v1660, %v1660
        %v1707 = vsub.f32 %v1665, %v1703
        %v1708 = vsub.f32 %v1670, %v1704
        %v1709 = vsub.f32 %v1675, %v1705
        %v1710 = vsub.f32 %v1680, %v1706
        %v1711 = vmul.f32 %v611, %v1645
        %v1712 = vmul.f32 %v616, %v1650
        %v1713 = vmul.f32 %v621, %v1655
        %v1714 = vmul.f32 %v626, %v1660
        %v1715 = vsub.f32 %v1685, %v1711
        %v1716 = vsub.f32 %v1690, %v1712
        %v1717 = vsub.f32 %v1695, %v1713
        %v1718 = vsub.f32 %v1700, %v1714
        %v1719 = vmul.f32 %v1715, 2.0
        %v1720 = vmul.f32 %v1716, 2.0
        %v1721 = vmul.f32 %v1717, 2.0
        %v1722 = vmul.f32 %v1718, 2.0
        %v1723 = vadd.f32 %v1719, 0.0009
        %v1724 = vadd.f32 %v1720, 0.0009
        %v1725 = vadd.f32 %v1721, 0.0009
        %v1726 = vadd.f32 %v1722, 0.0009
        %v1727 = vadd.f32 %v653, %v1707
        %v1728 = vadd.f32 %v654, %v1708
        %v1729 = vadd.f32 %v655, %v1709
        %v1730 = vadd.f32 %v656, %v1710
        %v1731 = vadd.f32 %v1727, 0.0009
        %v1732 = vadd.f32 %v1728, 0.0009
        %v1733 = vadd.f32 %v1729, 0.0009
        %v1734 = vadd.f32 %v1730, 0.0009
        %v1735 = vrcp.pop %v1731
        %v1736 = vmul.f32 %v1723, %v1735
        %v1737 = vrcp.pop %v1732
        %v1738 = vmul.f32 %v1724, %v1737
        %v1739 = vrcp.pop %v1733
        %v1740 = vmul.f32 %v1725, %v1739
        %v1741 = vrcp.pop %v1734
        %v1742 = vmul.f32 %v1726, %v1741
        %vm1743 = vcmp.gt.f32.partialorder %v1707, %v1164
        %vm1744 = vcmp.gt.f32.partialorder %v1708, %v1165
        %vm1745 = vcmp.gt.f32.partialorder %v1709, %v1166
        %vm1746 = vcmp.gt.f32.partialorder %v1710, %v1167
        %v1747 = vsel %vm1743, %v1736, %v1193
        %v1748 = vsel %vm1744, %v1738, %v1195
        %v1749 = vsel %vm1745, %v1740, %v1197
        %v1750 = vsel %vm1746, %v1742, %v1199
        %v1751 = vsel %vm1743, %v1707, %v1164
        %v1752 = vsel %vm1744, %v1708, %v1165
        %v1753 = vsel %vm1745, %v1709, %v1166
        %v1754 = vsel %vm1746, %v1710, %v1167
        %s1755 = sadd.s32 288, %s657
        %s1756 = scalar_lea.vmem [#allocation3], %s1755
        %v1757 = vld [vmem:[%s1756] sm:$0xff]
        %v1758 = vld [vmem:[%s1756 + $0x8] sm:$0xff]
        %v1759 = vld [vmem:[%s1756 + $0x10] sm:$0xff]
        %v1760 = vld [vmem:[%s1756 + $0x18] sm:$0xff]
        %v1761 = vld [vmem:[%s1756 + $0x20] sm:$0xff]
        %v1762 = vld [vmem:[%s1756 + $0x28] sm:$0x3]
        %v1763 = vmul.f32 %v1757, %v1757
        %v1764 = vmul.f32 %v1758, %v1758
        %v1765 = vmul.f32 %v1759, %v1759
        %v1766 = vmul.f32 %v1760, %v1760
        %v1767 = vmul.f32 %v1761, %v1761
        %v1768 = vmul.f32 %v1762, %v1762
        %v1769 = vmul.f32 %v278, %v1757
        %v1770 = vmul.f32 %v279, %v1758
        %v1771 = vmul.f32 %v280, %v1759
        %v1772 = vmul.f32 %v281, %v1760
        %v1773 = vmul.f32 %v282, %v1761
        %v1774 = vmul.f32 %v283, %v1762
        %s1775 = sadd.s32 336, %s657
        %s1776 = scalar_lea.vmem [#allocation3], %s1775
        %v1777 = vld [vmem:[%s1776] sm:$0xff]
        %v1778 = vld [vmem:[%s1776 + $0x8] sm:$0xff]
        %v1779 = vld [vmem:[%s1776 + $0x10] sm:$0xff]
        %v1780 = vld [vmem:[%s1776 + $0x18] sm:$0xff]
        %v1781 = vld [vmem:[%s1776 + $0x20] sm:$0xff]
        %v1782 = vld [vmem:[%s1776 + $0x28] sm:$0x3]
        %v1783 = vadd.f32 %v1757, %v1777
        %v1784 = vadd.f32 %v1758, %v1778
        %v1785 = vadd.f32 %v1759, %v1779
        %v1786 = vadd.f32 %v1760, %v1780
        %v1787 = vadd.f32 %v1761, %v1781
        %v1788 = vadd.f32 %v1762, %v1782
        %v1789 = vmul.f32 %v1777, %v1777
        %v1790 = vmul.f32 %v1778, %v1778
        %v1791 = vmul.f32 %v1779, %v1779
        %v1792 = vmul.f32 %v1780, %v1780
        %v1793 = vmul.f32 %v1781, %v1781
        %v1794 = vmul.f32 %v1782, %v1782
        %v1795 = vadd.f32 %v1763, %v1789
        %v1796 = vadd.f32 %v1764, %v1790
        %v1797 = vadd.f32 %v1765, %v1791
        %v1798 = vadd.f32 %v1766, %v1792
        %v1799 = vadd.f32 %v1767, %v1793
        %v1800 = vadd.f32 %v1768, %v1794
        %v1801 = vmul.f32 %v292, %v1777
        %v1802 = vmul.f32 %v293, %v1778
        %v1803 = vmul.f32 %v294, %v1779
        %v1804 = vmul.f32 %v295, %v1780
        %v1805 = vmul.f32 %v296, %v1781
        %v1806 = vmul.f32 %v297, %v1782
        %v1807 = vadd.f32 %v1769, %v1801
        %v1808 = vadd.f32 %v1770, %v1802
        %v1809 = vadd.f32 %v1771, %v1803
        %v1810 = vadd.f32 %v1772, %v1804
        %v1811 = vadd.f32 %v1773, %v1805
        %v1812 = vadd.f32 %v1774, %v1806
        %s1813 = sadd.s32 384, %s657
        %s1814 = scalar_lea.vmem [#allocation3], %s1813
        %v1815 = vld [vmem:[%s1814] sm:$0xff]
        %v1816 = vld [vmem:[%s1814 + $0x8] sm:$0xff]
        %v1817 = vld [vmem:[%s1814 + $0x10] sm:$0xff]
        %v1818 = vld [vmem:[%s1814 + $0x18] sm:$0xff]
        %v1819 = vld [vmem:[%s1814 + $0x20] sm:$0xff]
        %v1820 = vld [vmem:[%s1814 + $0x28] sm:$0x3]
        %v1821 = vadd.f32 %v1783, %v1815
        %v1822 = vadd.f32 %v1784, %v1816
        %v1823 = vadd.f32 %v1785, %v1817
        %v1824 = vadd.f32 %v1786, %v1818
        %v1825 = vadd.f32 %v1787, %v1819
        %v1826 = vadd.f32 %v1788, %v1820
        %v1827 = vmul.f32 %v1815, %v1815
        %v1828 = vmul.f32 %v1816, %v1816
        %v1829 = vmul.f32 %v1817, %v1817
        %v1830 = vmul.f32 %v1818, %v1818
        %v1831 = vmul.f32 %v1819, %v1819
        %v1832 = vmul.f32 %v1820, %v1820
        %v1833 = vadd.f32 %v1795, %v1827
        %v1834 = vadd.f32 %v1796, %v1828
        %v1835 = vadd.f32 %v1797, %v1829
        %v1836 = vadd.f32 %v1798, %v1830
        %v1837 = vadd.f32 %v1799, %v1831
        %v1838 = vadd.f32 %v1800, %v1832
        %v1839 = vmul.f32 %v318, %v1815
        %v1840 = vmul.f32 %v319, %v1816
        %v1841 = vmul.f32 %v320, %v1817
        %v1842 = vmul.f32 %v321, %v1818
        %v1843 = vmul.f32 %v322, %v1819
        %v1844 = vmul.f32 %v323, %v1820
        %v1845 = vadd.f32 %v1807, %v1839
        %v1846 = vadd.f32 %v1808, %v1840
        %v1847 = vadd.f32 %v1809, %v1841
        %v1848 = vadd.f32 %v1810, %v1842
        %v1849 = vadd.f32 %v1811, %v1843
        %v1850 = vadd.f32 %v1812, %v1844
        %v1851 = vmul.f32 %v1821, 0.33333334
        %v1852 = vmul.f32 %v1822, 0.33333334
        %v1853 = vmul.f32 %v1823, 0.33333334
        %v1854 = vmul.f32 %v1824, 0.33333334
        %v1855 = vmul.f32 %v1825, 0.33333334
        %v1856 = vmul.f32 %v1826, 0.33333334
        %v1857 = vmul.f32 %v1833, 0.33333334
        %v1858 = vmul.f32 %v1834, 0.33333334
        %v1859 = vmul.f32 %v1835, 0.33333334
        %v1860 = vmul.f32 %v1836, 0.33333334
        %v1861 = vmul.f32 %v1837, 0.33333334
        %v1862 = vmul.f32 %v1838, 0.33333334
        %v1863 = vmul.f32 %v1845, 0.33333334
        %v1864 = vmul.f32 %v1846, 0.33333334
        %v1865 = vmul.f32 %v1847, 0.33333334
        %v1866 = vmul.f32 %v1848, 0.33333334
        %v1867 = vmul.f32 %v1849, 0.33333334
        %v1868 = vmul.f32 %v1850, 0.33333334
        %v1870 = vsel %vm367, %v1856, 0
        %1872 = vmatprep.subr.mxu0 0.0
        %1873 = vmatpush1.msra.mxu0 %v1851
        %1874 = vmatprep.subr.mxu0 0.0
        %1875 = vmatpush1.msra.mxu0 %v1852
        %1876 = vmatprep.subr.mxu0 0.0
        %1877 = vmatpush1.msra.mxu0 %v1853
        %1878 = vmatprep.subr.mxu0 0.0
        %1879 = vmatpush1.msra.mxu0 %v1854
        %1880 = vmatprep.subr.mxu0 0.0
        %1881 = vmatpush1.msra.mxu0 %v1855
        %1882 = vmatprep.subr.mxu0 0.0
        %1883 = vmatpush1.msra.mxu0 %v1870
        %1884 = vmatprep.subr.mxu0 0.0
        %1885 = vmatpush1.msra.mxu0 0.0
        %1886 = vmatprep.subr.mxu0 0.0
        %1887 = vmatpush1.msra.mxu0 0.0
        %1888 = vmatprep.subr.mxu0 0.0
        %1889 = vmatpush1.msra.mxu0 0.0
        %1890 = vmatprep.subr.mxu0 0.0
        %1891 = vmatpush1.msra.mxu0 0.0
        %1892 = vmatprep.subr.mxu0 0.0
        %1893 = vmatpush1.msra.mxu0 0.0
        %1894 = vmatprep.subr.mxu0 0.0
        %1895 = vmatpush1.msra.mxu0 0.0
        %1896 = vmatprep.subr.mxu0 0.0
        %1897 = vmatpush1.msra.mxu0 0.0
        %1898 = vmatprep.subr.mxu0 0.0
        %1899 = vmatpush1.msra.mxu0 0.0
        %1900 = vmatprep.subr.mxu0 0.0
        %1901 = vmatpush1.msra.mxu0 0.0
        %1902 = vmatprep.subr.mxu0 0.0
        %1903 = vmatpush1.msra.mxu0 0.0
        %1904 = vmatprep.subr.mxu0 0.0
        %1905 = vmatpush1.msra.mxu0 0.0
        %1906 = vmatprep.subr.mxu0 0.0
        %1907 = vmatpush1.msra.mxu0 0.0
        %1908 = vmatprep.subr.mxu0 0.0
        %1909 = vmatpush1.msra.mxu0 0.0
        %1910 = vmatprep.subr.mxu0 0.0
        %1911 = vmatpush1.msra.mxu0 0.0
        %1912 = vmatprep.subr.mxu0 0.0
        %1913 = vmatpush1.msra.mxu0 0.0
        %1914 = vmatprep.subr.mxu0 0.0
        %1915 = vmatpush1.msra.mxu0 0.0
        %1916 = vmatprep.subr.mxu0 0.0
        %1917 = vmatpush1.msra.mxu0 0.0
        %1918 = vmatprep.subr.mxu0 0.0
        %1919 = vmatpush1.msra.mxu0 0.0
        %1920 = vmatprep.subr.mxu0 0.0
        %1921 = vmatpush1.msra.mxu0 0.0
        %1922 = vmatprep.subr.mxu0 0.0
        %1923 = vmatpush1.msra.mxu0 0.0
        %1924 = vmatprep.subr.mxu0 0.0
        %1925 = vmatpush1.msra.mxu0 0.0
        %1926 = vmatprep.subr.mxu0 0.0
        %1927 = vmatpush1.msra.mxu0 0.0
        %1928 = vmatprep.subr.mxu0 0.0
        %1929 = vmatpush1.msra.mxu0 0.0
        %1930 = vmatprep.subr.mxu0 0.0
        %1931 = vmatpush1.msra.mxu0 0.0
        %1932 = vmatprep.subr.mxu0 0.0
        %1933 = vmatpush1.msra.mxu0 0.0
        %1934 = vmatprep.subr.mxu0 0.0
        %1935 = vmatpush1.msra.mxu0 0.0
        %1936 = vmatprep.mubr.f32.mxu0 0.0
        %1937 = vmatmul.mubr.f32.gmra.mrb[0].mxu0 %v356
        %v1938 = vpop.f32.mrb[0].mxu0
        %v1939 = vadd.f32 0.0, %v1938
        %v1940 = vpop.f32.mrb[0].mxu0
        %1941 = vmatprep.mubr.f32.mxu0 0.0
        %1942 = vmatmul.mubr.f32.gmra.mrb[0].mxu0 %v359
        %v1943 = vpop.f32.mrb[0].mxu0
        %v1944 = vadd.f32 0.0, %v1943
        %v1945 = vpop.f32.mrb[0].mxu0
        %1946 = vmatprep.mubr.f32.mxu0 0.0
        %1947 = vmatmul.mubr.f32.gmra.mrb[0].mxu0 %v362
        %v1948 = vpop.f32.mrb[0].mxu0
        %v1949 = vadd.f32 0.0, %v1948
        %v1950 = vpop.f32.mrb[0].mxu0
        %1951 = vmatprep.mubr.f32.mxu0 0.0
        %1952 = vmatmul.mubr.f32.gmra.mrb[0].mxu0 %v365
        %v1953 = vpop.f32.mrb[0].mxu0
        %v1954 = vadd.f32 0.0, %v1953
        %v1955 = vpop.f32.mrb[0].mxu0
        %1956 = vdwg.mxu0
        %v1958 = vsel %vm367, %v1862, 0
        %1960 = vmatprep.subr.mxu0 0.0
        %1961 = vmatpush1.msra.mxu0 %v1857
        %1962 = vmatprep.subr.mxu0 0.0
        %1963 = vmatpush1.msra.mxu0 %v1858
        %1964 = vmatprep.subr.mxu0 0.0
        %1965 = vmatpush1.msra.mxu0 %v1859
        %1966 = vmatprep.subr.mxu0 0.0
        %1967 = vmatpush1.msra.mxu0 %v1860
        %1968 = vmatprep.subr.mxu0 0.0
        %1969 = vmatpush1.msra.mxu0 %v1861
        %1970 = vmatprep.subr.mxu0 0.0
        %1971 = vmatpush1.msra.mxu0 %v1958
        %1972 = vmatprep.subr.mxu0 0.0
        %1973 = vmatpush1.msra.mxu0 0.0
        %1974 = vmatprep.subr.mxu0 0.0
        %1975 = vmatpush1.msra.mxu0 0.0
        %1976 = vmatprep.subr.mxu0 0.0
        %1977 = vmatpush1.msra.mxu0 0.0
        %1978 = vmatprep.subr.mxu0 0.0
        %1979 = vmatpush1.msra.mxu0 0.0
        %1980 = vmatprep.subr.mxu0 0.0
        %1981 = vmatpush1.msra.mxu0 0.0
        %1982 = vmatprep.subr.mxu0 0.0
        %1983 = vmatpush1.msra.mxu0 0.0
        %1984 = vmatprep.subr.mxu0 0.0
        %1985 = vmatpush1.msra.mxu0 0.0
        %1986 = vmatprep.subr.mxu0 0.0
        %1987 = vmatpush1.msra.mxu0 0.0
        %1988 = vmatprep.subr.mxu0 0.0
        %1989 = vmatpush1.msra.mxu0 0.0
        %1990 = vmatprep.subr.mxu0 0.0
        %1991 = vmatpush1.msra.mxu0 0.0
        %1992 = vmatprep.subr.mxu0 0.0
        %1993 = vmatpush1.msra.mxu0 0.0
        %1994 = vmatprep.subr.mxu0 0.0
        %1995 = vmatpush1.msra.mxu0 0.0
        %1996 = vmatprep.subr.mxu0 0.0
        %1997 = vmatpush1.msra.mxu0 0.0
        %1998 = vmatprep.subr.mxu0 0.0
        %1999 = vmatpush1.msra.mxu0 0.0
        %2000 = vmatprep.subr.mxu0 0.0
        %2001 = vmatpush1.msra.mxu0 0.0
        %2002 = vmatprep.subr.mxu0 0.0
        %2003 = vmatpush1.msra.mxu0 0.0
        %2004 = vmatprep.subr.mxu0 0.0
        %2005 = vmatpush1.msra.mxu0 0.0
        %2006 = vmatprep.subr.mxu0 0.0
        %2007 = vmatpush1.msra.mxu0 0.0
        %2008 = vmatprep.subr.mxu0 0.0
        %2009 = vmatpush1.msra.mxu0 0.0
        %2010 = vmatprep.subr.mxu0 0.0
        %2011 = vmatpush1.msra.mxu0 0.0
        %2012 = vmatprep.subr.mxu0 0.0
        %2013 = vmatpush1.msra.mxu0 0.0
        %2014 = vmatprep.subr.mxu0 0.0
        %2015 = vmatpush1.msra.mxu0 0.0
        %2016 = vmatprep.subr.mxu0 0.0
        %2017 = vmatpush1.msra.mxu0 0.0
        %2018 = vmatprep.subr.mxu0 0.0
        %2019 = vmatpush1.msra.mxu0 0.0
        %2020 = vmatprep.subr.mxu0 0.0
        %2021 = vmatpush1.msra.mxu0 0.0
        %2022 = vmatprep.subr.mxu0 0.0
        %2023 = vmatpush1.msra.mxu0 0.0
        %2024 = vmatprep.mubr.f32.mxu0 0.0
        %2025 = vmatmul.mubr.f32.gmra.mrb[0].mxu0 %v356
        %v2026 = vpop.f32.mrb[0].mxu0
        %v2027 = vadd.f32 0.0, %v2026
        %v2028 = vpop.f32.mrb[0].mxu0
        %2029 = vmatprep.mubr.f32.mxu0 0.0
        %2030 = vmatmul.mubr.f32.gmra.mrb[0].mxu0 %v359
        %v2031 = vpop.f32.mrb[0].mxu0
        %v2032 = vadd.f32 0.0, %v2031
        %v2033 = vpop.f32.mrb[0].mxu0
        %2034 = vmatprep.mubr.f32.mxu0 0.0
        %2035 = vmatmul.mubr.f32.gmra.mrb[0].mxu0 %v362
        %v2036 = vpop.f32.mrb[0].mxu0
        %v2037 = vadd.f32 0.0, %v2036
        %v2038 = vpop.f32.mrb[0].mxu0
        %2039 = vmatprep.mubr.f32.mxu0 0.0
        %2040 = vmatmul.mubr.f32.gmra.mrb[0].mxu0 %v365
        %v2041 = vpop.f32.mrb[0].mxu0
        %v2042 = vadd.f32 0.0, %v2041
        %v2043 = vpop.f32.mrb[0].mxu0
        %2044 = vdwg.mxu0
        %v2046 = vsel %vm367, %v1868, 0
        %2048 = vmatprep.subr.mxu0 0.0
        %2049 = vmatpush1.msra.mxu0 %v1863
        %2050 = vmatprep.subr.mxu0 0.0
        %2051 = vmatpush1.msra.mxu0 %v1864
        %2052 = vmatprep.subr.mxu0 0.0
        %2053 = vmatpush1.msra.mxu0 %v1865
        %2054 = vmatprep.subr.mxu0 0.0
        %2055 = vmatpush1.msra.mxu0 %v1866
        %2056 = vmatprep.subr.mxu0 0.0
        %2057 = vmatpush1.msra.mxu0 %v1867
        %2058 = vmatprep.subr.mxu0 0.0
        %2059 = vmatpush1.msra.mxu0 %v2046
        %2060 = vmatprep.subr.mxu0 0.0
        %2061 = vmatpush1.msra.mxu0 0.0
        %2062 = vmatprep.subr.mxu0 0.0
        %2063 = vmatpush1.msra.mxu0 0.0
        %2064 = vmatprep.subr.mxu0 0.0
        %2065 = vmatpush1.msra.mxu0 0.0
        %2066 = vmatprep.subr.mxu0 0.0
        %2067 = vmatpush1.msra.mxu0 0.0
        %2068 = vmatprep.subr.mxu0 0.0
        %2069 = vmatpush1.msra.mxu0 0.0
        %2070 = vmatprep.subr.mxu0 0.0
        %2071 = vmatpush1.msra.mxu0 0.0
        %2072 = vmatprep.subr.mxu0 0.0
        %2073 = vmatpush1.msra.mxu0 0.0
        %2074 = vmatprep.subr.mxu0 0.0
        %2075 = vmatpush1.msra.mxu0 0.0
        %2076 = vmatprep.subr.mxu0 0.0
        %2077 = vmatpush1.msra.mxu0 0.0
        %2078 = vmatprep.subr.mxu0 0.0
        %2079 = vmatpush1.msra.mxu0 0.0
        %2080 = vmatprep.subr.mxu0 0.0
        %2081 = vmatpush1.msra.mxu0 0.0
        %2082 = vmatprep.subr.mxu0 0.0
        %2083 = vmatpush1.msra.mxu0 0.0
        %2084 = vmatprep.subr.mxu0 0.0
        %2085 = vmatpush1.msra.mxu0 0.0
        %2086 = vmatprep.subr.mxu0 0.0
        %2087 = vmatpush1.msra.mxu0 0.0
        %2088 = vmatprep.subr.mxu0 0.0
        %2089 = vmatpush1.msra.mxu0 0.0
        %2090 = vmatprep.subr.mxu0 0.0
        %2091 = vmatpush1.msra.mxu0 0.0
        %2092 = vmatprep.subr.mxu0 0.0
        %2093 = vmatpush1.msra.mxu0 0.0
        %2094 = vmatprep.subr.mxu0 0.0
        %2095 = vmatpush1.msra.mxu0 0.0
        %2096 = vmatprep.subr.mxu0 0.0
        %2097 = vmatpush1.msra.mxu0 0.0
        %2098 = vmatprep.subr.mxu0 0.0
        %2099 = vmatpush1.msra.mxu0 0.0
        %2100 = vmatprep.subr.mxu0 0.0
        %2101 = vmatpush1.msra.mxu0 0.0
        %2102 = vmatprep.subr.mxu0 0.0
        %2103 = vmatpush1.msra.mxu0 0.0
        %2104 = vmatprep.subr.mxu0 0.0
        %2105 = vmatpush1.msra.mxu0 0.0
        %2106 = vmatprep.subr.mxu0 0.0
        %2107 = vmatpush1.msra.mxu0 0.0
        %2108 = vmatprep.subr.mxu0 0.0
        %2109 = vmatpush1.msra.mxu0 0.0
        %2110 = vmatprep.subr.mxu0 0.0
        %2111 = vmatpush1.msra.mxu0 0.0
        %2112 = vmatprep.mubr.f32.mxu0 0.0
        %2113 = vmatmul.mubr.f32.gmra.mrb[0].mxu0 %v356
        %v2114 = vpop.f32.mrb[0].mxu0
        %v2115 = vadd.f32 0.0, %v2114
        %v2116 = vpop.f32.mrb[0].mxu0
        %2117 = vmatprep.mubr.f32.mxu0 0.0
        %2118 = vmatmul.mubr.f32.gmra.mrb[0].mxu0 %v359
        %v2119 = vpop.f32.mrb[0].mxu0
        %v2120 = vadd.f32 0.0, %v2119
        %v2121 = vpop.f32.mrb[0].mxu0
        %2122 = vmatprep.mubr.f32.mxu0 0.0
        %2123 = vmatmul.mubr.f32.gmra.mrb[0].mxu0 %v362
        %v2124 = vpop.f32.mrb[0].mxu0
        %v2125 = vadd.f32 0.0, %v2124
        %v2126 = vpop.f32.mrb[0].mxu0
        %2127 = vmatprep.mubr.f32.mxu0 0.0
        %2128 = vmatmul.mubr.f32.gmra.mrb[0].mxu0 %v365
        %v2129 = vpop.f32.mrb[0].mxu0
        %v2130 = vadd.f32 0.0, %v2129
        %v2131 = vpop.f32.mrb[0].mxu0
        %2132 = vdwg.mxu0
        %2133 = vmatprep.subr.mxu0 0.0
        %2134 = vmatpush1.msra.mxu0 %v260
        %2135 = vmatprep.subr.mxu0 0.0
        %2136 = vmatpush1.msra.mxu0 %v261
        %2137 = vmatprep.subr.mxu0 0.0
        %2138 = vmatpush1.msra.mxu0 %v262
        %2139 = vmatprep.subr.mxu0 0.0
        %2140 = vmatpush1.msra.mxu0 %v263
        %2141 = vmatprep.subr.mxu0 0.0
        %2142 = vmatpush1.msra.mxu0 %v264
        %2143 = vmatprep.subr.mxu0 0.0
        %2144 = vmatpush1.msra.mxu0 %v265
        %2145 = vmatprep.subr.mxu0 0.0
        %2146 = vmatpush1.msra.mxu0 %v266
        %2147 = vmatprep.subr.mxu0 0.0
        %2148 = vmatpush1.msra.mxu0 %v267
        %2149 = vmatprep.subr.mxu0 0.0
        %2150 = vmatpush1.msra.mxu0 %v268
        %2151 = vmatprep.subr.mxu0 0.0
        %2152 = vmatpush1.msra.mxu0 %v269
        %2153 = vmatprep.subr.mxu0 0.0
        %2154 = vmatpush1.msra.mxu0 %v270
        %2155 = vmatprep.subr.mxu0 0.0
        %2156 = vmatpush1.msra.mxu0 %v271
        %2157 = vmatprep.subr.mxu0 0.0
        %2158 = vmatpush1.msra.mxu0 %v272
        %2159 = vmatprep.subr.mxu0 0.0
        %2160 = vmatpush1.msra.mxu0 %v273
        %2161 = vmatprep.subr.mxu0 0.0
        %2162 = vmatpush1.msra.mxu0 %v274
        %2163 = vmatprep.subr.mxu0 0.0
        %2164 = vmatpush1.msra.mxu0 %v275
        %2165 = vmatprep.subr.mxu0 0.0
        %2166 = vmatpush1.msra.mxu0 0.0
        %2167 = vmatprep.subr.mxu0 0.0
        %2168 = vmatpush1.msra.mxu0 0.0
        %2169 = vmatprep.subr.mxu0 0.0
        %2170 = vmatpush1.msra.mxu0 0.0
        %2171 = vmatprep.subr.mxu0 0.0
        %2172 = vmatpush1.msra.mxu0 0.0
        %2173 = vmatprep.subr.mxu0 0.0
        %2174 = vmatpush1.msra.mxu0 0.0
        %2175 = vmatprep.subr.mxu0 0.0
        %2176 = vmatpush1.msra.mxu0 0.0
        %2177 = vmatprep.subr.mxu0 0.0
        %2178 = vmatpush1.msra.mxu0 0.0
        %2179 = vmatprep.subr.mxu0 0.0
        %2180 = vmatpush1.msra.mxu0 0.0
        %2181 = vmatprep.subr.mxu0 0.0
        %2182 = vmatpush1.msra.mxu0 0.0
        %2183 = vmatprep.subr.mxu0 0.0
        %2184 = vmatpush1.msra.mxu0 0.0
        %2185 = vmatprep.subr.mxu0 0.0
        %2186 = vmatpush1.msra.mxu0 0.0
        %2187 = vmatprep.subr.mxu0 0.0
        %2188 = vmatpush1.msra.mxu0 0.0
        %2189 = vmatprep.subr.mxu0 0.0
        %2190 = vmatpush1.msra.mxu0 0.0
        %2191 = vmatprep.subr.mxu0 0.0
        %2192 = vmatpush1.msra.mxu0 0.0
        %2193 = vmatprep.subr.mxu0 0.0
        %2194 = vmatpush1.msra.mxu0 0.0
        %2195 = vmatprep.subr.mxu0 0.0
        %2196 = vmatpush1.msra.mxu0 0.0
        %2197 = vmatprep.mubr.f32.mxu0 0.0
        %2198 = vmatmul.mubr.f32.gmra.mrb[0].mxu0 %v1939
        %v2199 = vpop.f32.mrb[0].mxu0
        %v2200 = vadd.f32 0.0, %v2199
        %v2201 = vpop.f32.mrb[0].mxu0
        %2202 = vmatprep.mubr.f32.mxu0 0.0
        %2203 = vmatmul.mubr.f32.gmra.mrb[0].mxu0 %v1944
        %v2204 = vpop.f32.mrb[0].mxu0
        %v2205 = vadd.f32 0.0, %v2204
        %v2206 = vpop.f32.mrb[0].mxu0
        %2207 = vmatprep.mubr.f32.mxu0 0.0
        %2208 = vmatmul.mubr.f32.gmra.mrb[0].mxu0 %v1949
        %v2209 = vpop.f32.mrb[0].mxu0
        %v2210 = vadd.f32 0.0, %v2209
        %v2211 = vpop.f32.mrb[0].mxu0
        %2212 = vmatprep.mubr.f32.mxu0 0.0
        %2213 = vmatmul.mubr.f32.gmra.mrb[0].mxu0 %v1954
        %v2214 = vpop.f32.mrb[0].mxu0
        %v2215 = vadd.f32 0.0, %v2214
        %v2216 = vpop.f32.mrb[0].mxu0
        %2217 = vmatprep.mubr.f32.mxu0 0.0
        %2218 = vmatmul.mubr.f32.gmra.mrb[0].mxu0 %v2027
        %v2219 = vpop.f32.mrb[0].mxu0
        %v2220 = vadd.f32 0.0, %v2219
        %v2221 = vpop.f32.mrb[0].mxu0
        %2222 = vmatprep.mubr.f32.mxu0 0.0
        %2223 = vmatmul.mubr.f32.gmra.mrb[0].mxu0 %v2032
        %v2224 = vpop.f32.mrb[0].mxu0
        %v2225 = vadd.f32 0.0, %v2224
        %v2226 = vpop.f32.mrb[0].mxu0
        %2227 = vmatprep.mubr.f32.mxu0 0.0
        %2228 = vmatmul.mubr.f32.gmra.mrb[0].mxu0 %v2037
        %v2229 = vpop.f32.mrb[0].mxu0
        %v2230 = vadd.f32 0.0, %v2229
        %v2231 = vpop.f32.mrb[0].mxu0
        %2232 = vmatprep.mubr.f32.mxu0 0.0
        %2233 = vmatmul.mubr.f32.gmra.mrb[0].mxu0 %v2042
        %v2234 = vpop.f32.mrb[0].mxu0
        %v2235 = vadd.f32 0.0, %v2234
        %v2236 = vpop.f32.mrb[0].mxu0
        %2237 = vmatprep.mubr.f32.mxu0 0.0
        %2238 = vmatmul.mubr.f32.gmra.mrb[0].mxu0 %v2115
        %v2239 = vpop.f32.mrb[0].mxu0
        %v2240 = vadd.f32 0.0, %v2239
        %v2241 = vpop.f32.mrb[0].mxu0
        %2242 = vmatprep.mubr.f32.mxu0 0.0
        %2243 = vmatmul.mubr.f32.gmra.mrb[0].mxu0 %v2120
        %v2244 = vpop.f32.mrb[0].mxu0
        %v2245 = vadd.f32 0.0, %v2244
        %v2246 = vpop.f32.mrb[0].mxu0
        %2247 = vmatprep.mubr.f32.mxu0 0.0
        %2248 = vmatmul.mubr.f32.gmra.mrb[0].mxu0 %v2125
        %v2249 = vpop.f32.mrb[0].mxu0
        %v2250 = vadd.f32 0.0, %v2249
        %v2251 = vpop.f32.mrb[0].mxu0
        %2252 = vmatprep.mubr.f32.mxu0 0.0
        %2253 = vmatmul.mubr.f32.gmra.mrb[0].mxu0 %v2130
        %v2254 = vpop.f32.mrb[0].mxu0
        %v2255 = vadd.f32 0.0, %v2254
        %v2256 = vpop.f32.mrb[0].mxu0
        %2257 = vdwg.mxu0
        %v2258 = vmul.f32 %v2200, %v2200
        %v2259 = vmul.f32 %v2205, %v2205
        %v2260 = vmul.f32 %v2210, %v2210
        %v2261 = vmul.f32 %v2215, %v2215
        %v2262 = vsub.f32 %v2220, %v2258
        %v2263 = vsub.f32 %v2225, %v2259
        %v2264 = vsub.f32 %v2230, %v2260
        %v2265 = vsub.f32 %v2235, %v2261
        %v2266 = vmul.f32 %v611, %v2200
        %v2267 = vmul.f32 %v616, %v2205
        %v2268 = vmul.f32 %v621, %v2210
        %v2269 = vmul.f32 %v626, %v2215
        %v2270 = vsub.f32 %v2240, %v2266
        %v2271 = vsub.f32 %v2245, %v2267
        %v2272 = vsub.f32 %v2250, %v2268
        %v2273 = vsub.f32 %v2255, %v2269
        %v2274 = vmul.f32 %v2270, 2.0
        %v2275 = vmul.f32 %v2271, 2.0
        %v2276 = vmul.f32 %v2272, 2.0
        %v2277 = vmul.f32 %v2273, 2.0
        %v2278 = vadd.f32 %v2274, 0.0009
        %v2279 = vadd.f32 %v2275, 0.0009
        %v2280 = vadd.f32 %v2276, 0.0009
        %v2281 = vadd.f32 %v2277, 0.0009
        %v2282 = vadd.f32 %v653, %v2262
        %v2283 = vadd.f32 %v654, %v2263
        %v2284 = vadd.f32 %v655, %v2264
        %v2285 = vadd.f32 %v656, %v2265
        %v2286 = vadd.f32 %v2282, 0.0009
        %v2287 = vadd.f32 %v2283, 0.0009
        %v2288 = vadd.f32 %v2284, 0.0009
        %v2289 = vadd.f32 %v2285, 0.0009
        %v2290 = vrcp.pop %v2286
        %v2291 = vmul.f32 %v2278, %v2290
        %v2292 = vrcp.pop %v2287
        %v2293 = vmul.f32 %v2279, %v2292
        %v2294 = vrcp.pop %v2288
        %v2295 = vmul.f32 %v2280, %v2294
        %v2296 = vrcp.pop %v2289
        %v2297 = vmul.f32 %v2281, %v2296
        %vm2298 = vcmp.gt.f32.partialorder %v2262, %v1751
        %vm2299 = vcmp.gt.f32.partialorder %v2263, %v1752
        %vm2300 = vcmp.gt.f32.partialorder %v2264, %v1753
        %vm2301 = vcmp.gt.f32.partialorder %v2265, %v1754
        %v2302 = vsel %vm2298, %v2291, %v1747
        %v2303 = vsel %vm2299, %v2293, %v1748
        %v2304 = vsel %vm2300, %v2295, %v1749
        %v2305 = vsel %vm2301, %v2297, %v1750
        %v2306 = vlaneseq
        %v2307 = vshrl.u32 %v2306, 7
        %v2308 = vadd.s32 %v2307, 8
        %v2309 = vadd.s32 %v2307, 16
        %v2310 = vadd.s32 %v2307, 24
        %v2311 = vstv %s210
        %v2312 = vadd.s32 %v2307, %v2311
        %v2313 = vadd.s32 %v2308, %v2311
        %v2314 = vadd.s32 %v2309, %v2311
        %v2315 = vadd.s32 %v2310, %v2311
        %vm2316 = vcmp.lt.s32.totalorder %v2312, 80
        %vm2317 = vcmp.lt.s32.totalorder %v2313, 80
        %vm2318 = vcmp.lt.s32.totalorder %v2314, 80
        %vm2319 = vcmp.lt.s32.totalorder %v2315, 80
        %v2320 = vsel %vm2316, 1, 0
        %v2321 = vsel %vm2317, 1, 0
        %v2322 = vsel %vm2318, 1, 0
        %v2323 = vsel %vm2319, 1, 0
        %v2324 = vcvt.s32.f32 %v2320
        %v2325 = vcvt.s32.f32 %v2321
        %v2326 = vcvt.s32.f32 %v2322
        %v2327 = vcvt.s32.f32 %v2323
        %v2328 = vmul.f32 %v2324, %v2302
        %v2329 = vmul.f32 %v2325, %v2303
        %v2330 = vmul.f32 %v2326, %v2304
        %v2331 = vmul.f32 %v2327, %v2305
        %v2332 = vadd.f32 %v2328, %v2329
        %v2333 = vadd.f32 %v2332, %v2330
        %v2334 = vadd.f32 %v2333, %v2331
        %2335 = vadd.xlane.f32.xlu0 %v2334
        %v2336 = vpop.xlane.xlu0 %2335
        %v2337 = vrot.slane %v2336, 4
        %v2338 = vadd.f32 %v2336, %v2337
        %v2339 = vrot.slane %v2338, 2
        %v2340 = vadd.f32 %v2338, %v2339
        %v2341 = vrot.slane %v2340, 1
        %v2342 = vadd.f32 %v2340, %v2341
        %s2343 = vtos %v2342
        %s2344 = scalar_lea.smem [#allocation10], %s20
        %2345 = sst [smem:[%s2344]] %s2343
        // Predicated region
        $region45: #{tpu_custom_call.1} parent=27 // pred_check
          %p2346 = pneg %p80
        $region46: #{tpu_custom_call.1} parent=27 // pred_check_branch
          %2348 = sbr.rel (%p2346) target = $region48
        $region47: #{tpu_custom_call.1} parent=27 // pred_region
          %s2350 = ssub.s32 16, 16
          %2351 = vsyncadd [#allocation7], %s2350
          %2354 = dma.smem_to_hbm [#allocation10], 16, %s4, [#allocation7]
        $region48: #{tpu_custom_call.1} parent=27 // pred_fallthru
          _
        // Predicated region
        $region49: #{tpu_custom_call.1} parent=27 // pred_check
          %p2355 = pneg %p80
        $region50: #{tpu_custom_call.1} parent=27 // pred_check_branch
          %2357 = sbr.rel (%p2355) target = $region52
        $region51: #{tpu_custom_call.1} parent=27 // pred_region
          %2358 = dma.done [#allocation7], 16
        $region52: #{tpu_custom_call.1} parent=27 // pred_fallthru
          _
        %2359 = sfence
      $region28: #{tpu_custom_call.1} parent=5 // pred_fallthru
        _
      %p2360 = scmp.le.s32.totalorder 2, %s15
      // Predicated region
      $region53: #{tpu_custom_call.1} parent=5 // pred_check
        %p2361 = pneg %p2360
      $region54: #{tpu_custom_call.1} parent=5 // pred_check_branch
        %2363 = sbr.rel (%p2361) target = $region56
      $region55: #{tpu_custom_call.1} parent=5 // pred_region
        %s2364 = ssub.s32 %s15, 2
      $region56: #{tpu_custom_call.1} parent=5 // pred_fallthru
        _
    $region6: #{tpu_custom_call.1} parent=1 // loop_footer
      %s19 = sadd.s32 1, %s15
    $region7: #{tpu_custom_call.1} parent=1 // loop_footer_branch
      %14 = sbr.rel target = $region3
    $region8: #{tpu_custom_call.1} parent=1 // loop_exit
      _
    %2365 = vsyncpa [#allocation6], 1
    %s2366 = scalar_lea.sflag [#allocation6], 1
    %2367 = vsyncpa %s2366, 1
    %2368 = vsyncpa [#allocation9], 1
    %2369 = vsyncpa [#allocation7], 1
    %s2370 = scalar_lea.sflag [#allocation7], 1
    %2371 = vsyncpa %s2370, 1
  %2372 = vsyncmov [#allocation4]
  %s2373 = vpop.sfrf %2372
  %p2374 = scmp.eq.s32.totalorder %s2373, 0
  %p2375 = pneg %p2374
  %2377 = shalt.err (%p2375)
  %s2378 = scalar_lea.sflag [#allocation4], 1
  %2379 = vsyncmov %s2378
  %s2380 = vpop.sfrf %2379
  %p2381 = scmp.eq.s32.totalorder %s2380, 0
  %p2382 = pneg %p2381
  %2384 = shalt.err (%p2382)
  %s2385 = scalar_lea.sflag [#allocation4], 2
  %2386 = vsyncmov %s2385
  %s2387 = vpop.sfrf %2386
  %p2388 = scmp.eq.s32.totalorder %s2387, 0
  %p2389 = pneg %p2388
  %2391 = shalt.err (%p2389)
  %s2392 = scalar_lea.sflag [#allocation4], 3
  %2393 = vsyncmov %s2392
  %s2394 = vpop.sfrf %2393
  %p2395 = scmp.eq.s32.totalorder %s2394, 0
  %p2396 = pneg %p2395
  %2398 = shalt.err (%p2396)

</llo_original>
